<compile_context>
chip_gen: v5e
topology: v5e:2x2
jax: 0.10.0
libtpu: 0.0.40
codegen_flags: <defaults>
</compile_context>

<pallas_src>
import jax
import jax.numpy as jnp
from jax import lax
from jax.experimental import pallas as pl
from jax.experimental.pallas import tpu as pltpu

BN_EPS = 1e-5


def _vmem_capacity_bytes():
    """Physical VMEM per core; conservative 64 MiB (v7x) fallback if the query fails."""
    try:
        cap = getattr(pltpu.get_tpu_info(), "vmem_capacity_bytes", None)
        if cap:
            return int(cap)
    except Exception:
        pass
    return 64 * 1024 * 1024


def _make_kernel(KH, KW, stride, dilation, TH, OW, C, OCp):
    taps = [(i, j) for i in range(KH) for j in range(KW)]

    def kernel(x_ref, w_ref, ss_ref, o_ref, acc_ref):
        # x_ref  : (Himg, Wp, C)   bf16  -- whole padded image of this batch element
        # w_ref  : (KH*KW, C, OCp) bf16  -- per-tap weight matrices
        # ss_ref : (2, OCp)        f32   -- folded BN scale / shift
        # o_ref  : (TH, OW, OCp)   out dtype
        # acc_ref: (TH*OW, OCp)    f32   -- VMEM accumulator scratch
        row0 = pl.program_id(1) * (TH * stride)
        acc_ref[...] = jnp.zeros_like(acc_ref)
        for idx, (i, j) in enumerate(taps):
            r0 = row0 + i * dilation          # dynamic (output-row tile offset)
            c0 = j * dilation                 # static
            if stride == 1:
                patch = x_ref[pl.ds(r0, TH), pl.ds(c0, OW), :]
            else:
                patch = x_ref[pl.ds(r0, TH, stride=stride),
                              pl.ds(c0, OW, stride=stride), :]
            acc_ref[...] += jnp.dot(patch.reshape(TH * OW, C), w_ref[idx],
                                    preferred_element_type=jnp.float32)
        y = acc_ref[...] * ss_ref[0:1, :] + ss_ref[1:2, :]     # folded BN (eval)
        y = jnp.maximum(y, 0.0)                                # ReLU
        o_ref[...] = y.reshape(TH, OW, OCp).astype(o_ref.dtype)

    return kernel


def conv_bn_relu(x_nchw, weight, gamma, beta, run_mean, run_var,
                 stride=1, padding=0, dilation=1, out_dtype=jnp.bfloat16):
    """Forward of Conv(in,out,k,stride,padding,dilation,groups=1,'bn','relu'), eval-mode BN."""
    N, C, H, W = x_nchw.shape
    OC, Cw, KH, KW = weight.shape
    assert Cw == C, "TODO(synk): groups > 1 not supported"

    OH = (H + 2 * padding - dilation * (KH - 1) - 1) // stride + 1
    OW = (W + 2 * padding - dilation * (KW - 1) - 1) // stride + 1
    assert OH > 0 and OW > 0, "empty output"

    OCp = pl.cdiv(OC, 128) * 128                # lane-dense output channels
    Wp = W + 2 * padding
    out_bytes = jnp.dtype(out_dtype).itemsize

    # --- per-generation VMEM budget ------------------------------------------------
    cap = _vmem_capacity_bytes()
    budget = (cap * 5) // 8                     # ~40 MiB on v7x (64), ~80 MiB on v5e/v6e (128)
    limit_cap = (cap * 3) // 4                  # ~48 MiB / ~96 MiB
    two_tc = cap <= 64 * 1024 * 1024            # v7x-like chip: 2 TensorCores

    def himg_for(th):
        ohp = pl.cdiv(OH, th) * th
        return max(H + 2 * padding, (ohp - 1) * stride + dilation * (KH - 1) + 1)

    def need(th):                               # VMEM bytes for one grid step (incl. temporaries)
        return (2 * himg_for(th) * Wp * C * 2   # image, double-buffered bf16
                + 2 * KH * KW * C * OCp * 2     # weights, double-buffered bf16 (grid-invariant)
                + 2 * 2 * OCp * 4               # scale/shift
                + 2 * th * OW * OCp * out_bytes # output tile, double-buffered
                + th * OW * OCp * 8             # f32 acc scratch + f32 dot temporary
                + th * OW * C * 2)              # per-tap bf16 patch temporary

    # --- choose the output-row tile height -----------------------------------------
    th = max(1, min(OH, 2048 // max(OW, 1)))    # cap rows-per-step at ~2048
    while th > 1 and need(th) > budget:
        th -= 1
    if need(th) > budget:
        # TODO(synk): H-band manual-DMA tiling for images that don't fit VMEM.
        raise NotImplementedError("input image too large for whole-image-resident implicit GEMM")
    for cand in range(th, 0, -1):               # prefer no ragged OH tail if it costs < 2x
        if OH % cand == 0:
            if 2 * cand >= th:
                th = cand
            break
    if two_tc:                                  # keep both v7x TensorCores busy on small grids
        steps = N * pl.cdiv(OH, th)
        if steps < 8 and steps % 2 == 1:
            for cand in range(th, max(th // 2, 1) - 1, -1):
                if (N * pl.cdiv(OH, cand)) % 2 == 0:
                    th = cand
                    break

    n_t = pl.cdiv(OH, th)
    OHp = n_t * th
    Himg = himg_for(th)

    # --- operands (single cheap layout pass; no im2col materialization) ------------
    x_nhwc = jnp.transpose(x_nchw, (0, 2, 3, 1)).astype(jnp.bfloat16)
    x_pad = jnp.pad(x_nhwc, ((0, 0),
                             (padding, Himg - H - padding),   # extra bottom rows keep all
                             (padding, padding),              # in-kernel reads in bounds
                             (0, 0)))

    # weight [OC, C, KH, KW] -> per-tap [KH*KW, C, OC], padded to OCp, bf16.
    w_taps = jnp.transpose(weight, (2, 3, 1, 0)).reshape(KH * KW, C, OC).astype(jnp.bfloat16)
    # Fold BN (eval) into a single scale/shift pair per channel (params only).
    scale = gamma.astype(jnp.float32) * lax.rsqrt(run_var.astype(jnp.float32) + BN_EPS)
    shift = beta.astype(jnp.float32) - run_mean.astype(jnp.float32) * scale
    ss = jnp.stack([scale, shift], axis=0)                    # (2, OC)
    if OCp != OC:
        w_taps = jnp.pad(w_taps, ((0, 0), (0, 0), (0, OCp - OC)))
        ss = jnp.pad(ss, ((0, 0), (0, OCp - OC)))

    vmem_limit = int(min(max(need(th) + (8 << 20), 16 << 20), limit_cap))

    kernel = _make_kernel(KH, KW, stride, dilation, th, OW, C, OCp)

    out = pl.pallas_call(
        kernel,
        out_shape=jax.ShapeDtypeStruct((N, OHp, OW, OCp), out_dtype),
        grid_spec=pltpu.PrefetchScalarGridSpec(
            num_scalar_prefetch=0,
            grid=(N, n_t),
            in_specs=[
                # Whole padded image of batch element n; block index is constant across the
                # inner t axis, so it is DMA'd from HBM only once per image.
                pl.BlockSpec((None, Himg, Wp, C), lambda n, t: (n, 0, 0, 0)),
                # Grid-invariant per-tap weights and folded-BN params (stay resident).
                pl.BlockSpec((KH * KW, C, OCp), lambda n, t: (0, 0, 0)),
                pl.BlockSpec((2, OCp), lambda n, t: (0, 0)),
            ],
            out_specs=pl.BlockSpec((None, th, OW, OCp), lambda n, t: (n, t, 0, 0)),
            scratch_shapes=[pltpu.VMEM((th * OW, OCp), jnp.float32)],
        ),
        compiler_params=pltpu.CompilerParams(
            dimension_semantics=("parallel", "parallel"),
            vmem_limit_bytes=vmem_limit,
        ),
    )(x_pad, w_taps, ss)

    out = out[:, :OH, :, :OC]                                 # drop OH / OC padding
    return jnp.transpose(out, (0, 3, 1, 2))                   # NHWC -> NCHW


def _reference(x_nchw, weight, gamma, beta, run_mean, run_var, stride, padding, dilation):
    y = lax.conv_general_dilated(
        x_nchw.astype(jnp.float32), weight.astype(jnp.float32),
        window_strides=(stride, stride),
        padding=[(padding, padding), (padding, padding)],
        rhs_dilation=(dilation, dilation),
        dimension_numbers=("NCHW", "OIHW", "NCHW"))
    scale = (gamma * lax.rsqrt(run_var + BN_EPS)).reshape(1, -1, 1, 1)
    shift = (beta - run_mean * gamma * lax.rsqrt(run_var + BN_EPS)).reshape(1, -1, 1, 1)
    return jnp.maximum(y * scale + shift, 0.0)


if __name__ == "__main__":
    # Conv(in_channels=4, out_channels=32, kernel_size=3, stride=1, padding=1)
    N, C, H, W = 2, 4, 16, 16
    OC, KH, KW = 32, 3, 3
    stride, padding, dilation = 1, 1, 1

    key = jax.random.PRNGKey(0)
    kx, kw, kg, kb, km, kv = jax.random.split(key, 6)
    x = jax.random.normal(kx, (N, C, H, W), dtype=jnp.float32)
    weight = jax.random.normal(kw, (OC, C, KH, KW), dtype=jnp.float32) * 0.1
    gamma = jax.random.uniform(kg, (OC,), minval=0.5, maxval=1.5, dtype=jnp.float32)
    beta = jax.random.normal(kb, (OC,), dtype=jnp.float32) * 0.1
    run_mean = jax.random.normal(km, (OC,), dtype=jnp.float32) * 0.1
    run_var = jax.random.uniform(kv, (OC,), minval=0.5, maxval=1.5, dtype=jnp.float32)

    out = conv_bn_relu(x, weight, gamma, beta, run_mean, run_var,
                       stride=stride, padding=padding, dilation=dilation)
    out = jax.block_until_ready(out)
    assert out.shape == (N, OC, H, W), out.shape
    out_f32 = out.astype(jnp.float32)

    # Check vs. a reference fed the same bf16-rounded operands (isolates accumulation + bf16 out).
    ref_bf16 = _reference(x.astype(jnp.bfloat16).astype(jnp.float32),
                          weight.astype(jnp.bfloat16).astype(jnp.float32),
                          gamma, beta, run_mean, run_var, stride, padding, dilation)
    assert jnp.allclose(out_f32, ref_bf16, atol=2e-2, rtol=2e-2), \
        float(jnp.max(jnp.abs(out_f32 - ref_bf16)))

    # Looser check vs. the full-f32 reference (bf16 operand + bf16 output rounding tolerance).
    ref_f32 = _reference(x, weight, gamma, beta, run_mean, run_var, stride, padding, dilation)
    assert jnp.allclose(out_f32, ref_f32, atol=5e-2, rtol=5e-2), \
        float(jnp.max(jnp.abs(out_f32 - ref_f32)))

    print("KERNEL_OK")
</pallas_src>

<mosaic_0001>
module attributes {stable_mosaic.version = 11 : i64} {
  func.func @kernel(%arg0: i32, %arg1: i32, %arg2: memref<1x18x18x4xbf16, #tpu.memory_space<vmem>>, %arg3: memref<9x4x128xbf16, #tpu.memory_space<vmem>>, %arg4: memref<2x128xf32, #tpu.memory_space<vmem>>, %arg5: memref<1x16x16x128xbf16, #tpu.memory_space<vmem>>, %arg6: memref<256x128xf32, #tpu.memory_space<vmem>>) attributes {dimension_semantics = [#tpu.dimension_semantics<parallel>, #tpu.dimension_semantics<parallel>], iteration_bounds = array<i64: 2, 1>, scalar_prefetch = 0 : i64, scratch_operands = 1 : i64, tpu.core_type = #tpu.core_type<tc>, window_params = [{transform_indices = @transform_0, window_bounds = array<i64: 1, 18, 18, 4>}, {pipeline_mode = #tpu.pipeline_mode<synchronous>, transform_indices = @transform_1, window_bounds = array<i64: 9, 4, 128>}, {pipeline_mode = #tpu.pipeline_mode<synchronous>, transform_indices = @transform_2, window_bounds = array<i64: 2, 128>}, {transform_indices = @transform_3, window_bounds = array<i64: 1, 16, 16, 128>}]} {
    %c16_i32 = arith.constant 16 : i32
    %0 = arith.muli %arg1, %c16_i32 : i32
    %cst = arith.constant 0.000000e+00 : f32
    %1 = vector.broadcast %cst : f32 to vector<256x128xf32>
    %c0 = arith.constant 0 : index
    %c0_0 = arith.constant 0 : index
    %2 = vector.load %arg6[%c0, %c0_0] : memref<256x128xf32, #tpu.memory_space<vmem>>, vector<256x128xf32>
    tpu.vector_store %arg6[%c0, %c0_0], %1 {strides = array<i32>} : memref<256x128xf32, #tpu.memory_space<vmem>>, vector<256x128xf32>,
    %c0_i32 = arith.constant 0 : i32
    %3 = arith.addi %0, %c0_i32 : i32
    %c0_1 = arith.constant 0 : index
    %4 = arith.index_cast %3 : i32 to index
    %c0_2 = arith.constant 0 : index
    %c0_3 = arith.constant 0 : index
    %5 = vector.load %arg2[%c0_1, %4, %c0_2, %c0_3] : memref<1x18x18x4xbf16, #tpu.memory_space<vmem>>, vector<1x16x16x4xbf16>
    %6 = vector.shape_cast %5 : vector<1x16x16x4xbf16> to vector<16x16x4xbf16>
    %c0_4 = arith.constant 0 : index
    %c0_5 = arith.constant 0 : index
    %7 = vector.load %arg6[%c0_4, %c0_5] : memref<256x128xf32, #tpu.memory_space<vmem>>, vector<256x128xf32>
    %8 = vector.shape_cast %6 : vector<16x16x4xbf16> to vector<256x4xbf16>
    %c0_6 = arith.constant 0 : index
    %c0_7 = arith.constant 0 : index
    %c0_8 = arith.constant 0 : index
    %9 = vector.load %arg3[%c0_6, %c0_7, %c0_8] : memref<9x4x128xbf16, #tpu.memory_space<vmem>>, vector<1x4x128xbf16>
    %10 = vector.shape_cast %9 : vector<1x4x128xbf16> to vector<4x128xbf16>
    %cst_9 = arith.constant dense<0.000000e+00> : vector<256x128xf32>
    %11 = tpu.matmul %8, %10, %cst_9 {dimension_numbers = #tpu.dot_dimension_numbers<[1], [0], [0], [1], [0, 0, 1, 1], [], []>} : vector<256x4xbf16>, vector<4x128xbf16>, vector<256x128xf32> -> vector<256x128xf32>
    %12 = arith.addf %7, %11 : vector<256x128xf32>
    %c0_10 = arith.constant 0 : index
    %c0_11 = arith.constant 0 : index
    %13 = vector.load %arg6[%c0_10, %c0_11] : memref<256x128xf32, #tpu.memory_space<vmem>>, vector<256x128xf32>
    tpu.vector_store %arg6[%c0_10, %c0_11], %12 {strides = array<i32>} : memref<256x128xf32, #tpu.memory_space<vmem>>, vector<256x128xf32>,
    %c0_i32_12 = arith.constant 0 : i32
    %14 = arith.addi %0, %c0_i32_12 : i32
    %c0_13 = arith.constant 0 : index
    %15 = arith.index_cast %14 : i32 to index
    %c1 = arith.constant 1 : index
    %c0_14 = arith.constant 0 : index
    %16 = vector.load %arg2[%c0_13, %15, %c1, %c0_14] : memref<1x18x18x4xbf16, #tpu.memory_space<vmem>>, vector<1x16x16x4xbf16>
    %17 = vector.shape_cast %16 : vector<1x16x16x4xbf16> to vector<16x16x4xbf16>
    %c0_15 = arith.constant 0 : index
    %c0_16 = arith.constant 0 : index
    %18 = vector.load %arg6[%c0_15, %c0_16] : memref<256x128xf32, #tpu.memory_space<vmem>>, vector<256x128xf32>
    %19 = vector.shape_cast %17 : vector<16x16x4xbf16> to vector<256x4xbf16>
    %c1_17 = arith.constant 1 : index
    %c0_18 = arith.constant 0 : index
    %c0_19 = arith.constant 0 : index
    %20 = vector.load %arg3[%c1_17, %c0_18, %c0_19] : memref<9x4x128xbf16, #tpu.memory_space<vmem>>, vector<1x4x128xbf16>
    %21 = vector.shape_cast %20 : vector<1x4x128xbf16> to vector<4x128xbf16>
    %cst_20 = arith.constant dense<0.000000e+00> : vector<256x128xf32>
    %22 = tpu.matmul %19, %21, %cst_20 {dimension_numbers = #tpu.dot_dimension_numbers<[1], [0], [0], [1], [0, 0, 1, 1], [], []>} : vector<256x4xbf16>, vector<4x128xbf16>, vector<256x128xf32> -> vector<256x128xf32>
    %23 = arith.addf %18, %22 : vector<256x128xf32>
    %c0_21 = arith.constant 0 : index
    %c0_22 = arith.constant 0 : index
    %24 = vector.load %arg6[%c0_21, %c0_22] : memref<256x128xf32, #tpu.memory_space<vmem>>, vector<256x128xf32>
    tpu.vector_store %arg6[%c0_21, %c0_22], %23 {strides = array<i32>} : memref<256x128xf32, #tpu.memory_space<vmem>>, vector<256x128xf32>,
    %c0_i32_23 = arith.constant 0 : i32
    %25 = arith.addi %0, %c0_i32_23 : i32
    %c0_24 = arith.constant 0 : index
    %26 = arith.index_cast %25 : i32 to index
    %c2 = arith.constant 2 : index
    %c0_25 = arith.constant 0 : index
    %27 = vector.load %arg2[%c0_24, %26, %c2, %c0_25] : memref<1x18x18x4xbf16, #tpu.memory_space<vmem>>, vector<1x16x16x4xbf16>
    %28 = vector.shape_cast %27 : vector<1x16x16x4xbf16> to vector<16x16x4xbf16>
    %c0_26 = arith.constant 0 : index
    %c0_27 = arith.constant 0 : index
    %29 = vector.load %arg6[%c0_26, %c0_27] : memref<256x128xf32, #tpu.memory_space<vmem>>, vector<256x128xf32>
    %30 = vector.shape_cast %28 : vector<16x16x4xbf16> to vector<256x4xbf16>
    %c2_28 = arith.constant 2 : index
    %c0_29 = arith.constant 0 : index
    %c0_30 = arith.constant 0 : index
    %31 = vector.load %arg3[%c2_28, %c0_29, %c0_30] : memref<9x4x128xbf16, #tpu.memory_space<vmem>>, vector<1x4x128xbf16>
    %32 = vector.shape_cast %31 : vector<1x4x128xbf16> to vector<4x128xbf16>
    %cst_31 = arith.constant dense<0.000000e+00> : vector<256x128xf32>
    %33 = tpu.matmul %30, %32, %cst_31 {dimension_numbers = #tpu.dot_dimension_numbers<[1], [0], [0], [1], [0, 0, 1, 1], [], []>} : vector<256x4xbf16>, vector<4x128xbf16>, vector<256x128xf32> -> vector<256x128xf32>
    %34 = arith.addf %29, %33 : vector<256x128xf32>
    %c0_32 = arith.constant 0 : index
    %c0_33 = arith.constant 0 : index
    %35 = vector.load %arg6[%c0_32, %c0_33] : memref<256x128xf32, #tpu.memory_space<vmem>>, vector<256x128xf32>
    tpu.vector_store %arg6[%c0_32, %c0_33], %34 {strides = array<i32>} : memref<256x128xf32, #tpu.memory_space<vmem>>, vector<256x128xf32>,
    %c1_i32 = arith.constant 1 : i32
    %36 = arith.addi %0, %c1_i32 : i32
    %c0_34 = arith.constant 0 : index
    %37 = arith.index_cast %36 : i32 to index
    %c0_35 = arith.constant 0 : index
    %c0_36 = arith.constant 0 : index
    %38 = vector.load %arg2[%c0_34, %37, %c0_35, %c0_36] : memref<1x18x18x4xbf16, #tpu.memory_space<vmem>>, vector<1x16x16x4xbf16>
    %39 = vector.shape_cast %38 : vector<1x16x16x4xbf16> to vector<16x16x4xbf16>
    %c0_37 = arith.constant 0 : index
    %c0_38 = arith.constant 0 : index
    %40 = vector.load %arg6[%c0_37, %c0_38] : memref<256x128xf32, #tpu.memory_space<vmem>>, vector<256x128xf32>
    %41 = vector.shape_cast %39 : vector<16x16x4xbf16> to vector<256x4xbf16>
    %c3 = arith.constant 3 : index
    %c0_39 = arith.constant 0 : index
    %c0_40 = arith.constant 0 : index
    %42 = vector.load %arg3[%c3, %c0_39, %c0_40] : memref<9x4x128xbf16, #tpu.memory_space<vmem>>, vector<1x4x128xbf16>
    %43 = vector.shape_cast %42 : vector<1x4x128xbf16> to vector<4x128xbf16>
    %cst_41 = arith.constant dense<0.000000e+00> : vector<256x128xf32>
    %44 = tpu.matmul %41, %43, %cst_41 {dimension_numbers = #tpu.dot_dimension_numbers<[1], [0], [0], [1], [0, 0, 1, 1], [], []>} : vector<256x4xbf16>, vector<4x128xbf16>, vector<256x128xf32> -> vector<256x128xf32>
    %45 = arith.addf %40, %44 : vector<256x128xf32>
    %c0_42 = arith.constant 0 : index
    %c0_43 = arith.constant 0 : index
    %46 = vector.load %arg6[%c0_42, %c0_43] : memref<256x128xf32, #tpu.memory_space<vmem>>, vector<256x128xf32>
    tpu.vector_store %arg6[%c0_42, %c0_43], %45 {strides = array<i32>} : memref<256x128xf32, #tpu.memory_space<vmem>>, vector<256x128xf32>,
    %c1_i32_44 = arith.constant 1 : i32
    %47 = arith.addi %0, %c1_i32_44 : i32
    %c0_45 = arith.constant 0 : index
    %48 = arith.index_cast %47 : i32 to index
    %c1_46 = arith.constant 1 : index
    %c0_47 = arith.constant 0 : index
    %49 = vector.load %arg2[%c0_45, %48, %c1_46, %c0_47] : memref<1x18x18x4xbf16, #tpu.memory_space<vmem>>, vector<1x16x16x4xbf16>
    %50 = vector.shape_cast %49 : vector<1x16x16x4xbf16> to vector<16x16x4xbf16>
    %c0_48 = arith.constant 0 : index
    %c0_49 = arith.constant 0 : index
    %51 = vector.load %arg6[%c0_48, %c0_49] : memref<256x128xf32, #tpu.memory_space<vmem>>, vector<256x128xf32>
    %52 = vector.shape_cast %50 : vector<16x16x4xbf16> to vector<256x4xbf16>
    %c4 = arith.constant 4 : index
    %c0_50 = arith.constant 0 : index
    %c0_51 = arith.constant 0 : index
    %53 = vector.load %arg3[%c4, %c0_50, %c0_51] : memref<9x4x128xbf16, #tpu.memory_space<vmem>>, vector<1x4x128xbf16>
    %54 = vector.shape_cast %53 : vector<1x4x128xbf16> to vector<4x128xbf16>
    %cst_52 = arith.constant dense<0.000000e+00> : vector<256x128xf32>
    %55 = tpu.matmul %52, %54, %cst_52 {dimension_numbers = #tpu.dot_dimension_numbers<[1], [0], [0], [1], [0, 0, 1, 1], [], []>} : vector<256x4xbf16>, vector<4x128xbf16>, vector<256x128xf32> -> vector<256x128xf32>
    %56 = arith.addf %51, %55 : vector<256x128xf32>
    %c0_53 = arith.constant 0 : index
    %c0_54 = arith.constant 0 : index
    %57 = vector.load %arg6[%c0_53, %c0_54] : memref<256x128xf32, #tpu.memory_space<vmem>>, vector<256x128xf32>
    tpu.vector_store %arg6[%c0_53, %c0_54], %56 {strides = array<i32>} : memref<256x128xf32, #tpu.memory_space<vmem>>, vector<256x128xf32>,
    %c1_i32_55 = arith.constant 1 : i32
    %58 = arith.addi %0, %c1_i32_55 : i32
    %c0_56 = arith.constant 0 : index
    %59 = arith.index_cast %58 : i32 to index
    %c2_57 = arith.constant 2 : index
    %c0_58 = arith.constant 0 : index
    %60 = vector.load %arg2[%c0_56, %59, %c2_57, %c0_58] : memref<1x18x18x4xbf16, #tpu.memory_space<vmem>>, vector<1x16x16x4xbf16>
    %61 = vector.shape_cast %60 : vector<1x16x16x4xbf16> to vector<16x16x4xbf16>
    %c0_59 = arith.constant 0 : index
    %c0_60 = arith.constant 0 : index
    %62 = vector.load %arg6[%c0_59, %c0_60] : memref<256x128xf32, #tpu.memory_space<vmem>>, vector<256x128xf32>
    %63 = vector.shape_cast %61 : vector<16x16x4xbf16> to vector<256x4xbf16>
    %c5 = arith.constant 5 : index
    %c0_61 = arith.constant 0 : index
    %c0_62 = arith.constant 0 : index
    %64 = vector.load %arg3[%c5, %c0_61, %c0_62] : memref<9x4x128xbf16, #tpu.memory_space<vmem>>, vector<1x4x128xbf16>
    %65 = vector.shape_cast %64 : vector<1x4x128xbf16> to vector<4x128xbf16>
    %cst_63 = arith.constant dense<0.000000e+00> : vector<256x128xf32>
    %66 = tpu.matmul %63, %65, %cst_63 {dimension_numbers = #tpu.dot_dimension_numbers<[1], [0], [0], [1], [0, 0, 1, 1], [], []>} : vector<256x4xbf16>, vector<4x128xbf16>, vector<256x128xf32> -> vector<256x128xf32>
    %67 = arith.addf %62, %66 : vector<256x128xf32>
    %c0_64 = arith.constant 0 : index
    %c0_65 = arith.constant 0 : index
    %68 = vector.load %arg6[%c0_64, %c0_65] : memref<256x128xf32, #tpu.memory_space<vmem>>, vector<256x128xf32>
    tpu.vector_store %arg6[%c0_64, %c0_65], %67 {strides = array<i32>} : memref<256x128xf32, #tpu.memory_space<vmem>>, vector<256x128xf32>,
    %c2_i32 = arith.constant 2 : i32
    %69 = arith.addi %0, %c2_i32 : i32
    %c0_66 = arith.constant 0 : index
    %70 = arith.index_cast %69 : i32 to index
    %c0_67 = arith.constant 0 : index
    %c0_68 = arith.constant 0 : index
    %71 = vector.load %arg2[%c0_66, %70, %c0_67, %c0_68] : memref<1x18x18x4xbf16, #tpu.memory_space<vmem>>, vector<1x16x16x4xbf16>
    %72 = vector.shape_cast %71 : vector<1x16x16x4xbf16> to vector<16x16x4xbf16>
    %c0_69 = arith.constant 0 : index
    %c0_70 = arith.constant 0 : index
    %73 = vector.load %arg6[%c0_69, %c0_70] : memref<256x128xf32, #tpu.memory_space<vmem>>, vector<256x128xf32>
    %74 = vector.shape_cast %72 : vector<16x16x4xbf16> to vector<256x4xbf16>
    %c6 = arith.constant 6 : index
    %c0_71 = arith.constant 0 : index
    %c0_72 = arith.constant 0 : index
    %75 = vector.load %arg3[%c6, %c0_71, %c0_72] : memref<9x4x128xbf16, #tpu.memory_space<vmem>>, vector<1x4x128xbf16>
    %76 = vector.shape_cast %75 : vector<1x4x128xbf16> to vector<4x128xbf16>
    %cst_73 = arith.constant dense<0.000000e+00> : vector<256x128xf32>
    %77 = tpu.matmul %74, %76, %cst_73 {dimension_numbers = #tpu.dot_dimension_numbers<[1], [0], [0], [1], [0, 0, 1, 1], [], []>} : vector<256x4xbf16>, vector<4x128xbf16>, vector<256x128xf32> -> vector<256x128xf32>
    %78 = arith.addf %73, %77 : vector<256x128xf32>
    %c0_74 = arith.constant 0 : index
    %c0_75 = arith.constant 0 : index
    %79 = vector.load %arg6[%c0_74, %c0_75] : memref<256x128xf32, #tpu.memory_space<vmem>>, vector<256x128xf32>
    tpu.vector_store %arg6[%c0_74, %c0_75], %78 {strides = array<i32>} : memref<256x128xf32, #tpu.memory_space<vmem>>, vector<256x128xf32>,
    %c2_i32_76 = arith.constant 2 : i32
    %80 = arith.addi %0, %c2_i32_76 : i32
    %c0_77 = arith.constant 0 : index
    %81 = arith.index_cast %80 : i32 to index
    %c1_78 = arith.constant 1 : index
    %c0_79 = arith.constant 0 : index
    %82 = vector.load %arg2[%c0_77, %81, %c1_78, %c0_79] : memref<1x18x18x4xbf16, #tpu.memory_space<vmem>>, vector<1x16x16x4xbf16>
    %83 = vector.shape_cast %82 : vector<1x16x16x4xbf16> to vector<16x16x4xbf16>
    %c0_80 = arith.constant 0 : index
    %c0_81 = arith.constant 0 : index
    %84 = vector.load %arg6[%c0_80, %c0_81] : memref<256x128xf32, #tpu.memory_space<vmem>>, vector<256x128xf32>
    %85 = vector.shape_cast %83 : vector<16x16x4xbf16> to vector<256x4xbf16>
    %c7 = arith.constant 7 : index
    %c0_82 = arith.constant 0 : index
    %c0_83 = arith.constant 0 : index
    %86 = vector.load %arg3[%c7, %c0_82, %c0_83] : memref<9x4x128xbf16, #tpu.memory_space<vmem>>, vector<1x4x128xbf16>
    %87 = vector.shape_cast %86 : vector<1x4x128xbf16> to vector<4x128xbf16>
    %cst_84 = arith.constant dense<0.000000e+00> : vector<256x128xf32>
    %88 = tpu.matmul %85, %87, %cst_84 {dimension_numbers = #tpu.dot_dimension_numbers<[1], [0], [0], [1], [0, 0, 1, 1], [], []>} : vector<256x4xbf16>, vector<4x128xbf16>, vector<256x128xf32> -> vector<256x128xf32>
    %89 = arith.addf %84, %88 : vector<256x128xf32>
    %c0_85 = arith.constant 0 : index
    %c0_86 = arith.constant 0 : index
    %90 = vector.load %arg6[%c0_85, %c0_86] : memref<256x128xf32, #tpu.memory_space<vmem>>, vector<256x128xf32>
    tpu.vector_store %arg6[%c0_85, %c0_86], %89 {strides = array<i32>} : memref<256x128xf32, #tpu.memory_space<vmem>>, vector<256x128xf32>,
    %c2_i32_87 = arith.constant 2 : i32
    %91 = arith.addi %0, %c2_i32_87 : i32
    %c0_88 = arith.constant 0 : index
    %92 = arith.index_cast %91 : i32 to index
    %c2_89 = arith.constant 2 : index
    %c0_90 = arith.constant 0 : index
    %93 = vector.load %arg2[%c0_88, %92, %c2_89, %c0_90] : memref<1x18x18x4xbf16, #tpu.memory_space<vmem>>, vector<1x16x16x4xbf16>
    %94 = vector.shape_cast %93 : vector<1x16x16x4xbf16> to vector<16x16x4xbf16>
    %c0_91 = arith.constant 0 : index
    %c0_92 = arith.constant 0 : index
    %95 = vector.load %arg6[%c0_91, %c0_92] : memref<256x128xf32, #tpu.memory_space<vmem>>, vector<256x128xf32>
    %96 = vector.shape_cast %94 : vector<16x16x4xbf16> to vector<256x4xbf16>
    %c8 = arith.constant 8 : index
    %c0_93 = arith.constant 0 : index
    %c0_94 = arith.constant 0 : index
    %97 = vector.load %arg3[%c8, %c0_93, %c0_94] : memref<9x4x128xbf16, #tpu.memory_space<vmem>>, vector<1x4x128xbf16>
    %98 = vector.shape_cast %97 : vector<1x4x128xbf16> to vector<4x128xbf16>
    %cst_95 = arith.constant dense<0.000000e+00> : vector<256x128xf32>
    %99 = tpu.matmul %96, %98, %cst_95 {dimension_numbers = #tpu.dot_dimension_numbers<[1], [0], [0], [1], [0, 0, 1, 1], [], []>} : vector<256x4xbf16>, vector<4x128xbf16>, vector<256x128xf32> -> vector<256x128xf32>
    %100 = arith.addf %95, %99 : vector<256x128xf32>
    %c0_96 = arith.constant 0 : index
    %c0_97 = arith.constant 0 : index
    %101 = vector.load %arg6[%c0_96, %c0_97] : memref<256x128xf32, #tpu.memory_space<vmem>>, vector<256x128xf32>
    tpu.vector_store %arg6[%c0_96, %c0_97], %100 {strides = array<i32>} : memref<256x128xf32, #tpu.memory_space<vmem>>, vector<256x128xf32>,
    %c0_98 = arith.constant 0 : index
    %c0_99 = arith.constant 0 : index
    %102 = vector.load %arg6[%c0_98, %c0_99] : memref<256x128xf32, #tpu.memory_space<vmem>>, vector<256x128xf32>
    %c0_100 = arith.constant 0 : index
    %c0_101 = arith.constant 0 : index
    %103 = vector.load %arg4[%c0_100, %c0_101] : memref<2x128xf32, #tpu.memory_space<vmem>>, vector<1x128xf32>
    %104 = vector.broadcast %103 : vector<1x128xf32> to vector<256x128xf32>
    %105 = arith.mulf %102, %104 : vector<256x128xf32>
    %c1_102 = arith.constant 1 : index
    %c0_103 = arith.constant 0 : index
    %106 = vector.load %arg4[%c1_102, %c0_103] : memref<2x128xf32, #tpu.memory_space<vmem>>, vector<1x128xf32>
    %107 = vector.broadcast %106 : vector<1x128xf32> to vector<256x128xf32>
    %108 = arith.addf %105, %107 : vector<256x128xf32>
    %cst_104 = arith.constant 0.000000e+00 : f32
    %109 = vector.broadcast %cst_104 : f32 to vector<256x128xf32>
    %110 = arith.maximumf %108, %109 : vector<256x128xf32>
    %111 = vector.shape_cast %110 : vector<256x128xf32> to vector<16x16x128xf32>
    %112 = arith.truncf %111 : vector<16x16x128xf32> to vector<16x16x128xbf16>
    %c0_105 = arith.constant 0 : index
    %c0_106 = arith.constant 0 : index
    %c0_107 = arith.constant 0 : index
    %c0_108 = arith.constant 0 : index
    %113 = vector.load %arg5[%c0_105, %c0_106, %c0_107, %c0_108] : memref<1x16x16x128xbf16, #tpu.memory_space<vmem>>, vector<1x16x16x128xbf16>
    %114 = vector.shape_cast %113 : vector<1x16x16x128xbf16> to vector<16x16x128xbf16>
    %115 = vector.shape_cast %112 : vector<16x16x128xbf16> to vector<1x16x16x128xbf16>
    tpu.vector_store %arg5[%c0_105, %c0_106, %c0_107, %c0_108], %115 {strides = array<i32>} : memref<1x16x16x128xbf16, #tpu.memory_space<vmem>>, vector<1x16x16x128xbf16>,
    return
  }
  func.func @transform_0(%arg0: i32, %arg1: i32) -> (i32, i32, i32, i32) {
    %c0_i32 = arith.constant 0 : i32
    %c0_i32_0 = arith.constant 0 : i32
    %c0_i32_1 = arith.constant 0 : i32
    %c0_i32_2 = arith.constant 0 : i32
    return %arg0, %c0_i32, %c0_i32_0, %c0_i32_1 : i32, i32, i32, i32
  }
  func.func @transform_1(%arg0: i32, %arg1: i32) -> (i32, i32, i32) {
    %c0_i32 = arith.constant 0 : i32
    %c0_i32_0 = arith.constant 0 : i32
    %c0_i32_1 = arith.constant 0 : i32
    %c0_i32_2 = arith.constant 0 : i32
    return %c0_i32, %c0_i32_0, %c0_i32_1 : i32, i32, i32
  }
  func.func @transform_2(%arg0: i32, %arg1: i32) -> (i32, i32) {
    %c0_i32 = arith.constant 0 : i32
    %c0_i32_0 = arith.constant 0 : i32
    %c0_i32_1 = arith.constant 0 : i32
    return %c0_i32, %c0_i32_0 : i32, i32
  }
  func.func @transform_3(%arg0: i32, %arg1: i32) -> (i32, i32, i32, i32) {
    %c0_i32 = arith.constant 0 : i32
    %c0_i32_0 = arith.constant 0 : i32
    %c0_i32_1 = arith.constant 0 : i32
    return %arg0, %arg1, %c0_i32, %c0_i32_0 : i32, i32, i32, i32
  }
}

</mosaic_0001>

<llo_original>
// kernel: tpu_custom_call.1
$region0: #{tpu_custom_call.1}
  #allocation0 [shape = 'u32[]', space=smem, size = 0x4, offset = 0x4, fixed_abs, tag = 'smem constant byte address 0x4 - core index']
  #allocation1 [shape = 'u32[72,128]{1,0:T(1,128)}', space=vmem, size = 0x9000, scoped, tag = 'internal scratch']
  #allocation2 [shape = 'f32[256,128]{1,0:T(8,128)}', space=vmem, size = 0x20000, scoped, tag = 'scratch operand']
  %s0 = inlined_call_operand.vmem [shape: bf16[2,18,18,4], index: 0, kind: input, shape index: {}]
  %s1 = inlined_call_operand.vmem [shape: bf16[9,4,128], index: 1, kind: input, shape index: {}]
  %s2 = inlined_call_operand.vmem [shape: f32[2,128], index: 2, kind: input, shape index: {}]
  %s3 = inlined_call_operand.hbm [shape: bf16[2,16,16,128], index: 3, kind: output, shape index: {}]
  %s4 = sld [smem:[#allocation0]]
  $region45: #{tpu_custom_call.1} parent=0
    _
  %s6 = ssub.s32 1, %s4
  %s7 = scalar_select 0, %s6, %s4
  $region1: #{tpu_custom_call.1} parent=0
    #allocation3 [shape = 'u8[131072]{0}', space=vmem, size = 0x20000, scoped, tag = 'output window, operand 0']
    #allocation4 [shape = 's32[2]{0}', space=sflag, size = 0x8, scoped, tag = 'scoped memory for tpu_custom_call.1']
    %8 = vsyncpa [#allocation4], 0
    %s9 = scalar_lea.sflag [#allocation4], 1
    %10 = vsyncpa %s9, 0
    loop: start=0, step=1, limit=4
    $region2: #{tpu_custom_call.1} parent=1 // loop_pre_header
      _
    $region3: #{tpu_custom_call.1} parent=1 // loop_header
      %s12 = sphi 0, %s16
      %p13 = scmp.ge.s32.totalorder %s12, 4
      %s19 = sphi 0, %s31
      %s20 = sphi 0, %s27
      %s21 = sphi 0, %s19
      %s22 = sphi 0, %s20
      %s23 = sphi 0, %s21
      %s24 = sphi 0, %s22
      %s34 = sphi 0, %s36
      %s37 = sphi 0, %s34
      %s38 = sphi 0, %s37
      %s54 = sphi 0, %s38
      %s58 = sphi 0, %s58
      %s60 = sphi 0, %s58
      %s61 = sphi 0, %s60
      %s75 = sphi 0, %s61
      %s79 = sphi 0, %s79
      %s81 = sphi 0, %s79
      %s82 = sphi 0, %s81
      %s96 = sphi 0, %s82
      %s104 = sphi 0, %s106
      %s107 = sphi 0, %s104
      %s108 = sphi 0, %s107
      %s124 = sphi 0, %s108
    $region4: #{tpu_custom_call.1} parent=1 // loop_header_branch
      %15 = sbr.rel (%p13) target = $region8
    $region5: #{tpu_custom_call.1} parent=1 // loop_body
      %s17 = ssub.s32 %s12, 1
      %s18 = ssub.s32 %s12, 2
      %s25 = sadd.s32 1, %s20
      %p26 = scmp.ge.s32.totalorder %s25, 1
      %s27 = scalar_select %p26, 0, %s25
      %s28 = sadd.s32 1, %s19
      %s29 = scalar_select %p26, %s28, %s19
      %p30 = scmp.ge.s32.totalorder %s29, 2
      %s31 = scalar_select %p30, 0, %s29
      %s32 = ssub.s32 %s19, %s31
      %p33 = scmp.eq.s32.totalorder %s32, 0
      %s35 = sadd.s32 %s34, 1
      %s36 = scalar_select %p33, %s34, %s35
      %p39 = pneg %p33
      %p40 = scmp.eq.s32.totalorder %s12, 1
      %p41 = por %p39, %p40
      %p42 = scmp.ne.s32.totalorder %s34, %s37
      %p43 = scmp.eq.s32.totalorder %s12, 0
      %p44 = por %p42, %p43
      %p45 = scmp.ne.s32.totalorder %s34, %s37
      %p46 = scmp.eq.s32.totalorder %s17, 1
      %p47 = por %p45, %p46
      %p48 = scmp.ne.s32.totalorder %s37, %s38
      %p49 = scmp.eq.s32.totalorder %s17, 0
      %p50 = por %p48, %p49
      %p51 = scmp.ne.s32.totalorder %s37, %s38
      %p52 = scmp.eq.s32.totalorder %s18, 1
      %p53 = por %p51, %p52
      %p55 = scmp.ne.s32.totalorder %s38, %s54
      %p56 = scmp.eq.s32.totalorder %s18, 0
      %p57 = por %p55, %p56
      %s59 = sadd.s32 %s58, 1
      %p62 = scmp.eq.s32.totalorder %s12, 1
      %p63 = scmp.ne.s32.totalorder %s58, %s60
      %p64 = scmp.eq.s32.totalorder %s12, 0
      %p65 = por %p63, %p64
      %p66 = scmp.ne.s32.totalorder %s58, %s60
      %p67 = scmp.eq.s32.totalorder %s17, 1
      %p68 = por %p66, %p67
      %p69 = scmp.ne.s32.totalorder %s60, %s61
      %p70 = scmp.eq.s32.totalorder %s17, 0
      %p71 = por %p69, %p70
      %p72 = scmp.ne.s32.totalorder %s60, %s61
      %p73 = scmp.eq.s32.totalorder %s18, 1
      %p74 = por %p72, %p73
      %p76 = scmp.ne.s32.totalorder %s61, %s75
      %p77 = scmp.eq.s32.totalorder %s18, 0
      %p78 = por %p76, %p77
      %s80 = sadd.s32 %s79, 1
      %p83 = scmp.eq.s32.totalorder %s12, 1
      %p84 = scmp.ne.s32.totalorder %s79, %s81
      %p85 = scmp.eq.s32.totalorder %s12, 0
      %p86 = por %p84, %p85
      %p87 = scmp.ne.s32.totalorder %s79, %s81
      %p88 = scmp.eq.s32.totalorder %s17, 1
      %p89 = por %p87, %p88
      %p90 = scmp.ne.s32.totalorder %s81, %s82
      %p91 = scmp.eq.s32.totalorder %s17, 0
      %p92 = por %p90, %p91
      %p93 = scmp.ne.s32.totalorder %s81, %s82
      %p94 = scmp.eq.s32.totalorder %s18, 1
      %p95 = por %p93, %p94
      %p97 = scmp.ne.s32.totalorder %s82, %s96
      %p98 = scmp.eq.s32.totalorder %s18, 0
      %p99 = por %p97, %p98
      %s100 = ssub.s32 %s19, %s31
      %s101 = ssub.s32 %s20, %s27
      %s102 = sor.u32 %s100, %s101
      %p103 = scmp.eq.s32.totalorder %s102, 0
      %s105 = sadd.s32 %s104, 1
      %s106 = scalar_select %p103, %s104, %s105
      %p109 = pneg %p103
      %p110 = scmp.eq.s32.totalorder %s12, 1
      %p111 = por %p109, %p110
      %p112 = scmp.ne.s32.totalorder %s104, %s107
      %p113 = scmp.eq.s32.totalorder %s12, 0
      %p114 = por %p112, %p113
      %p115 = scmp.ne.s32.totalorder %s104, %s107
      %p116 = scmp.eq.s32.totalorder %s17, 1
      %p117 = por %p115, %p116
      %p118 = scmp.ne.s32.totalorder %s107, %s108
      %p119 = scmp.eq.s32.totalorder %s17, 0
      %p120 = por %p118, %p119
      %p121 = scmp.ne.s32.totalorder %s107, %s108
      %p122 = scmp.eq.s32.totalorder %s18, 1
      %p123 = por %p121, %p122
      %p125 = scmp.ne.s32.totalorder %s108, %s124
      %p126 = scmp.eq.s32.totalorder %s18, 0
      %p127 = por %p125, %p126
      %p128 = scmp.le.s32.totalorder 1, %s12
      %p129 = scmp.lt.s32.totalorder %s12, 3
      %p130 = pnand %p128, %p129
      %p131 = pneg %p130
      // Predicated region
      $region9: #{tpu_custom_call.1} parent=5 // pred_check
        _
      $region10: #{tpu_custom_call.1} parent=5 // pred_check_branch
        %133 = sbr.rel (%p130) target = $region12
      $region11: #{tpu_custom_call.1} parent=5 // pred_region
        %s134 = ssub.s32 %s12, 1
        // Predicated region
        $region13: #{tpu_custom_call.1} parent=11 // pred_check
          %p135 = pneg %p71
        $region14: #{tpu_custom_call.1} parent=11 // pred_check_branch
          %137 = sbr.rel (%p135) target = $region16
        $region15: #{tpu_custom_call.1} parent=11 // pred_region
          _
        $region16: #{tpu_custom_call.1} parent=11 // pred_fallthru
          _
        // Predicated region
        $region17: #{tpu_custom_call.1} parent=11 // pred_check
          %p138 = pneg %p92
        $region18: #{tpu_custom_call.1} parent=11 // pred_check_branch
          %140 = sbr.rel (%p138) target = $region20
        $region19: #{tpu_custom_call.1} parent=11 // pred_region
          _
        $region20: #{tpu_custom_call.1} parent=11 // pred_fallthru
          _
      $region12: #{tpu_custom_call.1} parent=5 // pred_fallthru
        _
      %p141 = scmp.lt.s32.totalorder %s12, 2
      // Predicated region
      $region21: #{tpu_custom_call.1} parent=5 // pred_check
        %p142 = pneg %p141
      $region22: #{tpu_custom_call.1} parent=5 // pred_check_branch
        %144 = sbr.rel (%p142) target = $region24
      $region23: #{tpu_custom_call.1} parent=5 // pred_region
        // Predicated region
        $region25: #{tpu_custom_call.1} parent=23 // pred_check
          %p145 = pneg %p44
        $region26: #{tpu_custom_call.1} parent=23 // pred_check_branch
          %147 = sbr.rel (%p145) target = $region28
        $region27: #{tpu_custom_call.1} parent=23 // pred_region
          %p148 = scmp.lt.s32.totalorder %s19, 1
          %s149 = scalar_select %p148, %s19, 1
          %s150 = smul.addr %s149, 54
          %s151 = smul.addr %s150, 4
          %s152 = scalar_lea.vmem %s0, %s151
        $region28: #{tpu_custom_call.1} parent=23 // pred_fallthru
          _
      $region24: #{tpu_custom_call.1} parent=5 // pred_fallthru
        _
      %p153 = scmp.le.s32.totalorder 1, %s12
      %p154 = scmp.lt.s32.totalorder %s12, 3
      %p155 = pnand %p153, %p154
      %p156 = pneg %p155
      // Predicated region
      $region29: #{tpu_custom_call.1} parent=5 // pred_check
        _
      $region30: #{tpu_custom_call.1} parent=5 // pred_check_branch
        %158 = sbr.rel (%p155) target = $region32
      $region31: #{tpu_custom_call.1} parent=5 // pred_region
        %s159 = ssub.s32 %s12, 1
        %p160 = scmp.lt.s32.totalorder %s21, 1
        %s161 = scalar_select %p160, %s21, 1
        %s162 = smul.addr %s161, 54
        %s163 = smul.addr %s162, 4
        %s164 = scalar_lea.vmem %s0, %s163
        %p165 = pneg %p50
        %p166 = pneg %p47
        %p167 = pneg %p71
        %p168 = pneg %p68
        %p169 = pneg %p92
        %p170 = pneg %p89
        %p171 = pneg %p120
        %p172 = pneg %p117
        %s173 = sand.u32 %s107, 1
        %s174 = scalar_lea.sflag [#allocation4], %s173
        %s175 = sand.u32 %s107, 1
        %s176 = smul.addr %s175, 128
        %s177 = scalar_lea.vmem [#allocation3], %s176
        %p178 = scmp.lt.s32.totalorder %s21, 1
        %s179 = scalar_select %p178, %s21, 1
        %s180 = smul.addr %s179, 54
        %s181 = smul.addr %s180, 4
        %s182 = scalar_lea.vmem %s0, %s181
        %s183 = smul.u32 16, %s22
        %s185 = smul.u32 %s22, 16
        %186 = vst [vmem:[#allocation2] sm:$0xff] 0.0
        %187 = vst [vmem:[#allocation2 + $0x8] sm:$0xff] 0.0
        %188 = vst [vmem:[#allocation2 + $0x10] sm:$0xff] 0.0
        %189 = vst [vmem:[#allocation2 + $0x18] sm:$0xff] 0.0
        %190 = vst [vmem:[#allocation2 + $0x20] sm:$0xff] 0.0
        %191 = vst [vmem:[#allocation2 + $0x28] sm:$0xff] 0.0
        %192 = vst [vmem:[#allocation2 + $0x30] sm:$0xff] 0.0
        %193 = vst [vmem:[#allocation2 + $0x38] sm:$0xff] 0.0
        %194 = vst [vmem:[#allocation2 + $0x40] sm:$0xff] 0.0
        %195 = vst [vmem:[#allocation2 + $0x48] sm:$0xff] 0.0
        %196 = vst [vmem:[#allocation2 + $0x50] sm:$0xff] 0.0
        %197 = vst [vmem:[#allocation2 + $0x58] sm:$0xff] 0.0
        %198 = vst [vmem:[#allocation2 + $0x60] sm:$0xff] 0.0
        %199 = vst [vmem:[#allocation2 + $0x68] sm:$0xff] 0.0
        %200 = vst [vmem:[#allocation2 + $0x70] sm:$0xff] 0.0
        %201 = vst [vmem:[#allocation2 + $0x78] sm:$0xff] 0.0
        %202 = vst [vmem:[#allocation2 + $0x80] sm:$0xff] 0.0
        %203 = vst [vmem:[#allocation2 + $0x88] sm:$0xff] 0.0
        %204 = vst [vmem:[#allocation2 + $0x90] sm:$0xff] 0.0
        %205 = vst [vmem:[#allocation2 + $0x98] sm:$0xff] 0.0
        %206 = vst [vmem:[#allocation2 + $0xa0] sm:$0xff] 0.0
        %207 = vst [vmem:[#allocation2 + $0xa8] sm:$0xff] 0.0
        %208 = vst [vmem:[#allocation2 + $0xb0] sm:$0xff] 0.0
        %209 = vst [vmem:[#allocation2 + $0xb8] sm:$0xff] 0.0
        %210 = vst [vmem:[#allocation2 + $0xc0] sm:$0xff] 0.0
        %211 = vst [vmem:[#allocation2 + $0xc8] sm:$0xff] 0.0
        %212 = vst [vmem:[#allocation2 + $0xd0] sm:$0xff] 0.0
        %213 = vst [vmem:[#allocation2 + $0xd8] sm:$0xff] 0.0
        %214 = vst [vmem:[#allocation2 + $0xe0] sm:$0xff] 0.0
        %215 = vst [vmem:[#allocation2 + $0xe8] sm:$0xff] 0.0
        %216 = vst [vmem:[#allocation2 + $0xf0] sm:$0xff] 0.0
        %217 = vst [vmem:[#allocation2 + $0xf8] sm:$0xff] 0.0
        %s218 = smul.u32 %s185, 3
        %s219 = smul.addr %s218, 4
        %s220 = scalar_lea.vmem %s182, %s219
        %v221 = vld [vmem:[%s220] sm:$0xf]
        %v222 = vld [vmem:[%s220 + $0x4] sm:$0xf]
        %v223 = vld [vmem:[%s220 + $0xc] sm:$0xf]
        %v224 = vld [vmem:[%s220 + $0x10] sm:$0xf]
        %v225 = vld [vmem:[%s220 + $0x18] sm:$0xf]
        %v226 = vld [vmem:[%s220 + $0x1c] sm:$0xf]
        %v227 = vld [vmem:[%s220 + $0x24] sm:$0xf]
        %v228 = vld [vmem:[%s220 + $0x28] sm:$0xf]
        %v229 = vld [vmem:[%s220 + $0x30] sm:$0xf]
        %v230 = vld [vmem:[%s220 + $0x34] sm:$0xf]
        %v231 = vld [vmem:[%s220 + $0x3c] sm:$0xf]
        %v232 = vld [vmem:[%s220 + $0x40] sm:$0xf]
        %v233 = vld [vmem:[%s220 + $0x48] sm:$0xf]
        %v234 = vld [vmem:[%s220 + $0x4c] sm:$0xf]
        %v235 = vld [vmem:[%s220 + $0x54] sm:$0xf]
        %v236 = vld [vmem:[%s220 + $0x58] sm:$0xf]
        %v237 = vld [vmem:[%s220 + $0x60] sm:$0xf]
        %v238 = vld [vmem:[%s220 + $0x64] sm:$0xf]
        %v239 = vld [vmem:[%s220 + $0x6c] sm:$0xf]
        %v240 = vld [vmem:[%s220 + $0x70] sm:$0xf]
        %v241 = vld [vmem:[%s220 + $0x78] sm:$0xf]
        %v242 = vld [vmem:[%s220 + $0x7c] sm:$0xf]
        %v243 = vld [vmem:[%s220 + $0x84] sm:$0xf]
        %v244 = vld [vmem:[%s220 + $0x88] sm:$0xf]
        %v245 = vld [vmem:[%s220 + $0x90] sm:$0xf]
        %v246 = vld [vmem:[%s220 + $0x94] sm:$0xf]
        %v247 = vld [vmem:[%s220 + $0x9c] sm:$0xf]
        %v248 = vld [vmem:[%s220 + $0xa0] sm:$0xf]
        %v249 = vld [vmem:[%s220 + $0xa8] sm:$0xf]
        %v250 = vld [vmem:[%s220 + $0xac] sm:$0xf]
        %v251 = vld [vmem:[%s220 + $0xb4] sm:$0xf]
        %v252 = vld [vmem:[%s220 + $0xb8] sm:$0xf]
        %v253 = vld [vmem:[#allocation2] sm:$0xff]
        %v254 = vld [vmem:[#allocation2 + $0x8] sm:$0xff]
        %v255 = vld [vmem:[#allocation2 + $0x10] sm:$0xff]
        %v256 = vld [vmem:[#allocation2 + $0x18] sm:$0xff]
        %v257 = vld [vmem:[#allocation2 + $0x20] sm:$0xff]
        %v258 = vld [vmem:[#allocation2 + $0x28] sm:$0xff]
        %v259 = vld [vmem:[#allocation2 + $0x30] sm:$0xff]
        %v260 = vld [vmem:[#allocation2 + $0x38] sm:$0xff]
        %v261 = vld [vmem:[#allocation2 + $0x40] sm:$0xff]
        %v262 = vld [vmem:[#allocation2 + $0x48] sm:$0xff]
        %v263 = vld [vmem:[#allocation2 + $0x50] sm:$0xff]
        %v264 = vld [vmem:[#allocation2 + $0x58] sm:$0xff]
        %v265 = vld [vmem:[#allocation2 + $0x60] sm:$0xff]
        %v266 = vld [vmem:[#allocation2 + $0x68] sm:$0xff]
        %v267 = vld [vmem:[#allocation2 + $0x70] sm:$0xff]
        %v268 = vld [vmem:[#allocation2 + $0x78] sm:$0xff]
        %v269 = vld [vmem:[#allocation2 + $0x80] sm:$0xff]
        %v270 = vld [vmem:[#allocation2 + $0x88] sm:$0xff]
        %v271 = vld [vmem:[#allocation2 + $0x90] sm:$0xff]
        %v272 = vld [vmem:[#allocation2 + $0x98] sm:$0xff]
        %v273 = vld [vmem:[#allocation2 + $0xa0] sm:$0xff]
        %v274 = vld [vmem:[#allocation2 + $0xa8] sm:$0xff]
        %v275 = vld [vmem:[#allocation2 + $0xb0] sm:$0xff]
        %v276 = vld [vmem:[#allocation2 + $0xb8] sm:$0xff]
        %v277 = vld [vmem:[#allocation2 + $0xc0] sm:$0xff]
        %v278 = vld [vmem:[#allocation2 + $0xc8] sm:$0xff]
        %v279 = vld [vmem:[#allocation2 + $0xd0] sm:$0xff]
        %v280 = vld [vmem:[#allocation2 + $0xd8] sm:$0xff]
        %v281 = vld [vmem:[#allocation2 + $0xe0] sm:$0xff]
        %v282 = vld [vmem:[#allocation2 + $0xe8] sm:$0xff]
        %v283 = vld [vmem:[#allocation2 + $0xf0] sm:$0xff]
        %v284 = vld [vmem:[#allocation2 + $0xf8] sm:$0xff]
        %v285 = vld [vmem:[%s1] sm:$0x3]
        %v318 = vunpack.c.l.b16 %v221
        %v319 = vunpack.c.l.b16 %v222
        %v320 = vunpack.c.l.b16 %v223
        %v321 = vunpack.c.l.b16 %v224
        %v322 = vunpack.c.l.b16 %v225
        %v323 = vunpack.c.l.b16 %v226
        %v324 = vunpack.c.l.b16 %v227
        %v325 = vunpack.c.l.b16 %v228
        %v326 = vunpack.c.l.b16 %v229
        %v327 = vunpack.c.l.b16 %v230
        %v328 = vunpack.c.l.b16 %v231
        %v329 = vunpack.c.l.b16 %v232
        %v330 = vunpack.c.l.b16 %v233
        %v331 = vunpack.c.l.b16 %v234
        %v332 = vunpack.c.l.b16 %v235
        %v333 = vunpack.c.l.b16 %v236
        %v334 = vunpack.c.l.b16 %v237
        %v335 = vunpack.c.l.b16 %v238
        %v336 = vunpack.c.l.b16 %v239
        %v337 = vunpack.c.l.b16 %v240
        %v338 = vunpack.c.l.b16 %v241
        %v339 = vunpack.c.l.b16 %v242
        %v340 = vunpack.c.l.b16 %v243
        %v341 = vunpack.c.l.b16 %v244
        %v342 = vunpack.c.l.b16 %v245
        %v343 = vunpack.c.l.b16 %v246
        %v344 = vunpack.c.l.b16 %v247
        %v345 = vunpack.c.l.b16 %v248
        %v346 = vunpack.c.l.b16 %v249
        %v347 = vunpack.c.l.b16 %v250
        %v348 = vunpack.c.l.b16 %v251
        %v349 = vunpack.c.l.b16 %v252
        %v350 = vpack.c.b16 %v319, %v318
        %v351 = vpack.c.b16 %v321, %v320
        %v352 = vpack.c.b16 %v323, %v322
        %v353 = vpack.c.b16 %v325, %v324
        %v354 = vpack.c.b16 %v327, %v326
        %v355 = vpack.c.b16 %v329, %v328
        %v356 = vpack.c.b16 %v331, %v330
        %v357 = vpack.c.b16 %v333, %v332
        %v358 = vpack.c.b16 %v335, %v334
        %v359 = vpack.c.b16 %v337, %v336
        %v360 = vpack.c.b16 %v339, %v338
        %v361 = vpack.c.b16 %v341, %v340
        %v362 = vpack.c.b16 %v343, %v342
        %v363 = vpack.c.b16 %v345, %v344
        %v364 = vpack.c.b16 %v347, %v346
        %v365 = vpack.c.b16 %v349, %v348
        %vm366 = vcmask 31744
        %v368 = vsel %vm366, %v350, 0
        %v371 = vsel %vm366, %v351, 0
        %v374 = vsel %vm366, %v352, 0
        %v377 = vsel %vm366, %v353, 0
        %v380 = vsel %vm366, %v354, 0
        %v383 = vsel %vm366, %v355, 0
        %v386 = vsel %vm366, %v356, 0
        %v389 = vsel %vm366, %v357, 0
        %v392 = vsel %vm366, %v358, 0
        %v395 = vsel %vm366, %v359, 0
        %v398 = vsel %vm366, %v360, 0
        %v401 = vsel %vm366, %v361, 0
        %v404 = vsel %vm366, %v362, 0
        %v407 = vsel %vm366, %v363, 0
        %v410 = vsel %vm366, %v364, 0
        %v413 = vsel %vm366, %v365, 0
        %vm415 = vcmask 1041408
        %v417 = vsel %vm415, %v285, 0
        %419 = vmatpush.bf16.msra.mxu0 0
        %420 = vmatpush.bf16.msra.mxu0 0
        %421 = vmatpush.bf16.msra.mxu0 0
        %422 = vmatpush.bf16.msra.mxu0 0
        %423 = vmatpush.bf16.msra.mxu0 0
        %424 = vmatpush.bf16.msra.mxu0 0
        %425 = vmatpush.bf16.msra.mxu0 0
        %426 = vmatpush.bf16.msra.mxu0 %v417
        %427 = vmatmul.bf16.gmra.mxu0 %v368
        %v428 = vpop.f32.mrf.mxu0
        %v429 = vadd.f32 0.0, %v428
        %v430 = vpop.f32.mrf.mxu0
        %v431 = vadd.f32 0.0, %v430
        %432 = vmatmul.bf16.gmra.mxu0 %v371
        %v433 = vpop.f32.mrf.mxu0
        %v434 = vadd.f32 0.0, %v433
        %v435 = vpop.f32.mrf.mxu0
        %v436 = vadd.f32 0.0, %v435
        %437 = vmatmul.bf16.gmra.mxu0 %v374
        %v438 = vpop.f32.mrf.mxu0
        %v439 = vadd.f32 0.0, %v438
        %v440 = vpop.f32.mrf.mxu0
        %v441 = vadd.f32 0.0, %v440
        %442 = vmatmul.bf16.gmra.mxu0 %v377
        %v443 = vpop.f32.mrf.mxu0
        %v444 = vadd.f32 0.0, %v443
        %v445 = vpop.f32.mrf.mxu0
        %v446 = vadd.f32 0.0, %v445
        %447 = vmatmul.bf16.gmra.mxu0 %v380
        %v448 = vpop.f32.mrf.mxu0
        %v449 = vadd.f32 0.0, %v448
        %v450 = vpop.f32.mrf.mxu0
        %v451 = vadd.f32 0.0, %v450
        %452 = vmatmul.bf16.gmra.mxu0 %v383
        %v453 = vpop.f32.mrf.mxu0
        %v454 = vadd.f32 0.0, %v453
        %v455 = vpop.f32.mrf.mxu0
        %v456 = vadd.f32 0.0, %v455
        %457 = vmatmul.bf16.gmra.mxu0 %v386
        %v458 = vpop.f32.mrf.mxu0
        %v459 = vadd.f32 0.0, %v458
        %v460 = vpop.f32.mrf.mxu0
        %v461 = vadd.f32 0.0, %v460
        %462 = vmatmul.bf16.gmra.mxu0 %v389
        %v463 = vpop.f32.mrf.mxu0
        %v464 = vadd.f32 0.0, %v463
        %v465 = vpop.f32.mrf.mxu0
        %v466 = vadd.f32 0.0, %v465
        %467 = vmatmul.bf16.gmra.mxu0 %v392
        %v468 = vpop.f32.mrf.mxu0
        %v469 = vadd.f32 0.0, %v468
        %v470 = vpop.f32.mrf.mxu0
        %v471 = vadd.f32 0.0, %v470
        %472 = vmatmul.bf16.gmra.mxu0 %v395
        %v473 = vpop.f32.mrf.mxu0
        %v474 = vadd.f32 0.0, %v473
        %v475 = vpop.f32.mrf.mxu0
        %v476 = vadd.f32 0.0, %v475
        %477 = vmatmul.bf16.gmra.mxu0 %v398
        %v478 = vpop.f32.mrf.mxu0
        %v479 = vadd.f32 0.0, %v478
        %v480 = vpop.f32.mrf.mxu0
        %v481 = vadd.f32 0.0, %v480
        %482 = vmatmul.bf16.gmra.mxu0 %v401
        %v483 = vpop.f32.mrf.mxu0
        %v484 = vadd.f32 0.0, %v483
        %v485 = vpop.f32.mrf.mxu0
        %v486 = vadd.f32 0.0, %v485
        %487 = vmatmul.bf16.gmra.mxu0 %v404
        %v488 = vpop.f32.mrf.mxu0
        %v489 = vadd.f32 0.0, %v488
        %v490 = vpop.f32.mrf.mxu0
        %v491 = vadd.f32 0.0, %v490
        %492 = vmatmul.bf16.gmra.mxu0 %v407
        %v493 = vpop.f32.mrf.mxu0
        %v494 = vadd.f32 0.0, %v493
        %v495 = vpop.f32.mrf.mxu0
        %v496 = vadd.f32 0.0, %v495
        %497 = vmatmul.bf16.gmra.mxu0 %v410
        %v498 = vpop.f32.mrf.mxu0
        %v499 = vadd.f32 0.0, %v498
        %v500 = vpop.f32.mrf.mxu0
        %v501 = vadd.f32 0.0, %v500
        %502 = vmatmul.bf16.gmra.mxu0 %v413
        %v503 = vpop.f32.mrf.mxu0
        %v504 = vadd.f32 0.0, %v503
        %v505 = vpop.f32.mrf.mxu0
        %v506 = vadd.f32 0.0, %v505
        %507 = vdwg.mxu0
        %v508 = vadd.f32 %v253, %v429
        %v509 = vadd.f32 %v254, %v431
        %v510 = vadd.f32 %v255, %v434
        %v511 = vadd.f32 %v256, %v436
        %v512 = vadd.f32 %v257, %v439
        %v513 = vadd.f32 %v258, %v441
        %v514 = vadd.f32 %v259, %v444
        %v515 = vadd.f32 %v260, %v446
        %v516 = vadd.f32 %v261, %v449
        %v517 = vadd.f32 %v262, %v451
        %v518 = vadd.f32 %v263, %v454
        %v519 = vadd.f32 %v264, %v456
        %v520 = vadd.f32 %v265, %v459
        %v521 = vadd.f32 %v266, %v461
        %v522 = vadd.f32 %v267, %v464
        %v523 = vadd.f32 %v268, %v466
        %v524 = vadd.f32 %v269, %v469
        %v525 = vadd.f32 %v270, %v471
        %v526 = vadd.f32 %v271, %v474
        %v527 = vadd.f32 %v272, %v476
        %v528 = vadd.f32 %v273, %v479
        %v529 = vadd.f32 %v274, %v481
        %v530 = vadd.f32 %v275, %v484
        %v531 = vadd.f32 %v276, %v486
        %v532 = vadd.f32 %v277, %v489
        %v533 = vadd.f32 %v278, %v491
        %v534 = vadd.f32 %v279, %v494
        %v535 = vadd.f32 %v280, %v496
        %v536 = vadd.f32 %v281, %v499
        %v537 = vadd.f32 %v282, %v501
        %v538 = vadd.f32 %v283, %v504
        %v539 = vadd.f32 %v284, %v506
        %540 = vst [vmem:[#allocation2] sm:$0xff] %v508
        %541 = vst [vmem:[#allocation2 + $0x8] sm:$0xff] %v509
        %542 = vst [vmem:[#allocation2 + $0x10] sm:$0xff] %v510
        %543 = vst [vmem:[#allocation2 + $0x18] sm:$0xff] %v511
        %544 = vst [vmem:[#allocation2 + $0x20] sm:$0xff] %v512
        %545 = vst [vmem:[#allocation2 + $0x28] sm:$0xff] %v513
        %546 = vst [vmem:[#allocation2 + $0x30] sm:$0xff] %v514
        %547 = vst [vmem:[#allocation2 + $0x38] sm:$0xff] %v515
        %548 = vst [vmem:[#allocation2 + $0x40] sm:$0xff] %v516
        %549 = vst [vmem:[#allocation2 + $0x48] sm:$0xff] %v517
        %550 = vst [vmem:[#allocation2 + $0x50] sm:$0xff] %v518
        %551 = vst [vmem:[#allocation2 + $0x58] sm:$0xff] %v519
        %552 = vst [vmem:[#allocation2 + $0x60] sm:$0xff] %v520
        %553 = vst [vmem:[#allocation2 + $0x68] sm:$0xff] %v521
        %554 = vst [vmem:[#allocation2 + $0x70] sm:$0xff] %v522
        %555 = vst [vmem:[#allocation2 + $0x78] sm:$0xff] %v523
        %556 = vst [vmem:[#allocation2 + $0x80] sm:$0xff] %v524
        %557 = vst [vmem:[#allocation2 + $0x88] sm:$0xff] %v525
        %558 = vst [vmem:[#allocation2 + $0x90] sm:$0xff] %v526
        %559 = vst [vmem:[#allocation2 + $0x98] sm:$0xff] %v527
        %560 = vst [vmem:[#allocation2 + $0xa0] sm:$0xff] %v528
        %561 = vst [vmem:[#allocation2 + $0xa8] sm:$0xff] %v529
        %562 = vst [vmem:[#allocation2 + $0xb0] sm:$0xff] %v530
        %563 = vst [vmem:[#allocation2 + $0xb8] sm:$0xff] %v531
        %564 = vst [vmem:[#allocation2 + $0xc0] sm:$0xff] %v532
        %565 = vst [vmem:[#allocation2 + $0xc8] sm:$0xff] %v533
        %566 = vst [vmem:[#allocation2 + $0xd0] sm:$0xff] %v534
        %567 = vst [vmem:[#allocation2 + $0xd8] sm:$0xff] %v535
        %568 = vst [vmem:[#allocation2 + $0xe0] sm:$0xff] %v536
        %569 = vst [vmem:[#allocation2 + $0xe8] sm:$0xff] %v537
        %570 = vst [vmem:[#allocation2 + $0xf0] sm:$0xff] %v538
        %571 = vst [vmem:[#allocation2 + $0xf8] sm:$0xff] %v539
        %v572 = vld [vmem:[%s220] sm:$0xf]
        %v573 = vld [vmem:[%s220 + $0x4] sm:$0xf]
        %v574 = vld [vmem:[%s220 + $0x8] sm:$0x1]
        %v575 = vld [vmem:[%s220 + $0xc] sm:$0xf]
        %v576 = vld [vmem:[%s220 + $0x10] sm:$0xf]
        %v577 = vld [vmem:[%s220 + $0x14] sm:$0x1]
        %v578 = vld [vmem:[%s220 + $0x18] sm:$0xf]
        %v579 = vld [vmem:[%s220 + $0x1c] sm:$0xf]
        %v580 = vld [vmem:[%s220 + $0x20] sm:$0x1]
        %v581 = vld [vmem:[%s220 + $0x24] sm:$0xf]
        %v582 = vld [vmem:[%s220 + $0x28] sm:$0xf]
        %v583 = vld [vmem:[%s220 + $0x2c] sm:$0x1]
        %v584 = vld [vmem:[%s220 + $0x30] sm:$0xf]
        %v585 = vld [vmem:[%s220 + $0x34] sm:$0xf]
        %v586 = vld [vmem:[%s220 + $0x38] sm:$0x1]
        %v587 = vld [vmem:[%s220 + $0x3c] sm:$0xf]
        %v588 = vld [vmem:[%s220 + $0x40] sm:$0xf]
        %v589 = vld [vmem:[%s220 + $0x44] sm:$0x1]
        %v590 = vld [vmem:[%s220 + $0x48] sm:$0xf]
        %v591 = vld [vmem:[%s220 + $0x4c] sm:$0xf]
        %v592 = vld [vmem:[%s220 + $0x50] sm:$0x1]
        %v593 = vld [vmem:[%s220 + $0x54] sm:$0xf]
        %v594 = vld [vmem:[%s220 + $0x58] sm:$0xf]
        %v595 = vld [vmem:[%s220 + $0x5c] sm:$0x1]
        %v596 = vld [vmem:[%s220 + $0x60] sm:$0xf]
        %v597 = vld [vmem:[%s220 + $0x64] sm:$0xf]
        %v598 = vld [vmem:[%s220 + $0x68] sm:$0x1]
        %v599 = vld [vmem:[%s220 + $0x6c] sm:$0xf]
        %v600 = vld [vmem:[%s220 + $0x70] sm:$0xf]
        %v601 = vld [vmem:[%s220 + $0x74] sm:$0x1]
        %v602 = vld [vmem:[%s220 + $0x78] sm:$0xf]
        %v603 = vld [vmem:[%s220 + $0x7c] sm:$0xf]
        %v604 = vld [vmem:[%s220 + $0x80] sm:$0x1]
        %v605 = vld [vmem:[%s220 + $0x84] sm:$0xf]
        %v606 = vld [vmem:[%s220 + $0x88] sm:$0xf]
        %v607 = vld [vmem:[%s220 + $0x8c] sm:$0x1]
        %v608 = vld [vmem:[%s220 + $0x90] sm:$0xf]
        %v609 = vld [vmem:[%s220 + $0x94] sm:$0xf]
        %v610 = vld [vmem:[%s220 + $0x98] sm:$0x1]
        %v611 = vld [vmem:[%s220 + $0x9c] sm:$0xf]
        %v612 = vld [vmem:[%s220 + $0xa0] sm:$0xf]
        %v613 = vld [vmem:[%s220 + $0xa4] sm:$0x1]
        %v614 = vld [vmem:[%s220 + $0xa8] sm:$0xf]
        %v615 = vld [vmem:[%s220 + $0xac] sm:$0xf]
        %v616 = vld [vmem:[%s220 + $0xb0] sm:$0x1]
        %v617 = vld [vmem:[%s220 + $0xb4] sm:$0xf]
        %v618 = vld [vmem:[%s220 + $0xb8] sm:$0xf]
        %v619 = vld [vmem:[%s220 + $0xbc] sm:$0x1]
        %v620 = vld [vmem:[#allocation2] sm:$0xff]
        %v621 = vld [vmem:[#allocation2 + $0x8] sm:$0xff]
        %v622 = vld [vmem:[#allocation2 + $0x10] sm:$0xff]
        %v623 = vld [vmem:[#allocation2 + $0x18] sm:$0xff]
        %v624 = vld [vmem:[#allocation2 + $0x20] sm:$0xff]
        %v625 = vld [vmem:[#allocation2 + $0x28] sm:$0xff]
        %v626 = vld [vmem:[#allocation2 + $0x30] sm:$0xff]
        %v627 = vld [vmem:[#allocation2 + $0x38] sm:$0xff]
        %v628 = vld [vmem:[#allocation2 + $0x40] sm:$0xff]
        %v629 = vld [vmem:[#allocation2 + $0x48] sm:$0xff]
        %v630 = vld [vmem:[#allocation2 + $0x50] sm:$0xff]
        %v631 = vld [vmem:[#allocation2 + $0x58] sm:$0xff]
        %v632 = vld [vmem:[#allocation2 + $0x60] sm:$0xff]
        %v633 = vld [vmem:[#allocation2 + $0x68] sm:$0xff]
        %v634 = vld [vmem:[#allocation2 + $0x70] sm:$0xff]
        %v635 = vld [vmem:[#allocation2 + $0x78] sm:$0xff]
        %v636 = vld [vmem:[#allocation2 + $0x80] sm:$0xff]
        %v637 = vld [vmem:[#allocation2 + $0x88] sm:$0xff]
        %v638 = vld [vmem:[#allocation2 + $0x90] sm:$0xff]
        %v639 = vld [vmem:[#allocation2 + $0x98] sm:$0xff]
        %v640 = vld [vmem:[#allocation2 + $0xa0] sm:$0xff]
        %v641 = vld [vmem:[#allocation2 + $0xa8] sm:$0xff]
        %v642 = vld [vmem:[#allocation2 + $0xb0] sm:$0xff]
        %v643 = vld [vmem:[#allocation2 + $0xb8] sm:$0xff]
        %v644 = vld [vmem:[#allocation2 + $0xc0] sm:$0xff]
        %v645 = vld [vmem:[#allocation2 + $0xc8] sm:$0xff]
        %v646 = vld [vmem:[#allocation2 + $0xd0] sm:$0xff]
        %v647 = vld [vmem:[#allocation2 + $0xd8] sm:$0xff]
        %v648 = vld [vmem:[#allocation2 + $0xe0] sm:$0xff]
        %v649 = vld [vmem:[#allocation2 + $0xe8] sm:$0xff]
        %v650 = vld [vmem:[#allocation2 + $0xf0] sm:$0xff]
        %v651 = vld [vmem:[#allocation2 + $0xf8] sm:$0xff]
        %vm652 = vsmask.f32 3328
        %vm653 = vsmask.f32 7440
        %vm654 = vmor %vm652, %vm653
        %v656 = vshrl.u32 %v572, 16
        %v658 = vrot.slane %v656, 4
        %v659 = vshll.u32 %v572, 16
        %v661 = vrot.slane %v659, 5
        %v662 = vor.u32 %v658, %v661
        %v663 = vrot.slane %v662, 4
        %v665 = vshll.u32 %v573, 16
        %v667 = vrot.slane %v665, 5
        %v668 = vsel %vm654, %v663, %v667
        %v669 = vshrl.u32 %v573, 16
        %v671 = vrot.slane %v669, 4
        %v672 = vor.u32 %v671, %v667
        %v673 = vrot.slane %v672, 4
        %v675 = vshll.u32 %v574, 16
        %v677 = vrot.slane %v675, 5
        %v678 = vsel %vm654, %v673, %v677
        %v680 = vshrl.u32 %v575, 16
        %v682 = vrot.slane %v680, 4
        %v683 = vshll.u32 %v575, 16
        %v685 = vrot.slane %v683, 5
        %v686 = vor.u32 %v682, %v685
        %v687 = vrot.slane %v686, 4
        %v689 = vshll.u32 %v576, 16
        %v691 = vrot.slane %v689, 5
        %v692 = vsel %vm654, %v687, %v691
        %v693 = vshrl.u32 %v576, 16
        %v695 = vrot.slane %v693, 4
        %v696 = vor.u32 %v695, %v691
        %v697 = vrot.slane %v696, 4
        %v699 = vshll.u32 %v577, 16
        %v701 = vrot.slane %v699, 5
        %v702 = vsel %vm654, %v697, %v701
        %v704 = vshrl.u32 %v578, 16
        %v706 = vrot.slane %v704, 4
        %v707 = vshll.u32 %v578, 16
        %v709 = vrot.slane %v707, 5
        %v710 = vor.u32 %v706, %v709
        %v711 = vrot.slane %v710, 4
        %v713 = vshll.u32 %v579, 16
        %v715 = vrot.slane %v713, 5
        %v716 = vsel %vm654, %v711, %v715
        %v717 = vshrl.u32 %v579, 16
        %v719 = vrot.slane %v717, 4
        %v720 = vor.u32 %v719, %v715
        %v721 = vrot.slane %v720, 4
        %v723 = vshll.u32 %v580, 16
        %v725 = vrot.slane %v723, 5
        %v726 = vsel %vm654, %v721, %v725
        %v728 = vshrl.u32 %v581, 16
        %v730 = vrot.slane %v728, 4
        %v731 = vshll.u32 %v581, 16
        %v733 = vrot.slane %v731, 5
        %v734 = vor.u32 %v730, %v733
        %v735 = vrot.slane %v734, 4
        %v737 = vshll.u32 %v582, 16
        %v739 = vrot.slane %v737, 5
        %v740 = vsel %vm654, %v735, %v739
        %v741 = vshrl.u32 %v582, 16
        %v743 = vrot.slane %v741, 4
        %v744 = vor.u32 %v743, %v739
        %v745 = vrot.slane %v744, 4
        %v747 = vshll.u32 %v583, 16
        %v749 = vrot.slane %v747, 5
        %v750 = vsel %vm654, %v745, %v749
        %v752 = vshrl.u32 %v584, 16
        %v754 = vrot.slane %v752, 4
        %v755 = vshll.u32 %v584, 16
        %v757 = vrot.slane %v755, 5
        %v758 = vor.u32 %v754, %v757
        %v759 = vrot.slane %v758, 4
        %v761 = vshll.u32 %v585, 16
        %v763 = vrot.slane %v761, 5
        %v764 = vsel %vm654, %v759, %v763
        %v765 = vshrl.u32 %v585, 16
        %v767 = vrot.slane %v765, 4
        %v768 = vor.u32 %v767, %v763
        %v769 = vrot.slane %v768, 4
        %v771 = vshll.u32 %v586, 16
        %v773 = vrot.slane %v771, 5
        %v774 = vsel %vm654, %v769, %v773
        %v776 = vshrl.u32 %v587, 16
        %v778 = vrot.slane %v776, 4
        %v779 = vshll.u32 %v587, 16
        %v781 = vrot.slane %v779, 5
        %v782 = vor.u32 %v778, %v781
        %v783 = vrot.slane %v782, 4
        %v785 = vshll.u32 %v588, 16
        %v787 = vrot.slane %v785, 5
        %v788 = vsel %vm654, %v783, %v787
        %v789 = vshrl.u32 %v588, 16
        %v791 = vrot.slane %v789, 4
        %v792 = vor.u32 %v791, %v787
        %v793 = vrot.slane %v792, 4
        %v795 = vshll.u32 %v589, 16
        %v797 = vrot.slane %v795, 5
        %v798 = vsel %vm654, %v793, %v797
        %v800 = vshrl.u32 %v590, 16
        %v802 = vrot.slane %v800, 4
        %v803 = vshll.u32 %v590, 16
        %v805 = vrot.slane %v803, 5
        %v806 = vor.u32 %v802, %v805
        %v807 = vrot.slane %v806, 4
        %v809 = vshll.u32 %v591, 16
        %v811 = vrot.slane %v809, 5
        %v812 = vsel %vm654, %v807, %v811
        %v813 = vshrl.u32 %v591, 16
        %v815 = vrot.slane %v813, 4
        %v816 = vor.u32 %v815, %v811
        %v817 = vrot.slane %v816, 4
        %v819 = vshll.u32 %v592, 16
        %v821 = vrot.slane %v819, 5
        %v822 = vsel %vm654, %v817, %v821
        %v824 = vshrl.u32 %v593, 16
        %v826 = vrot.slane %v824, 4
        %v827 = vshll.u32 %v593, 16
        %v829 = vrot.slane %v827, 5
        %v830 = vor.u32 %v826, %v829
        %v831 = vrot.slane %v830, 4
        %v833 = vshll.u32 %v594, 16
        %v835 = vrot.slane %v833, 5
        %v836 = vsel %vm654, %v831, %v835
        %v837 = vshrl.u32 %v594, 16
        %v839 = vrot.slane %v837, 4
        %v840 = vor.u32 %v839, %v835
        %v841 = vrot.slane %v840, 4
        %v843 = vshll.u32 %v595, 16
        %v845 = vrot.slane %v843, 5
        %v846 = vsel %vm654, %v841, %v845
        %v848 = vshrl.u32 %v596, 16
        %v850 = vrot.slane %v848, 4
        %v851 = vshll.u32 %v596, 16
        %v853 = vrot.slane %v851, 5
        %v854 = vor.u32 %v850, %v853
        %v855 = vrot.slane %v854, 4
        %v857 = vshll.u32 %v597, 16
        %v859 = vrot.slane %v857, 5
        %v860 = vsel %vm654, %v855, %v859
        %v861 = vshrl.u32 %v597, 16
        %v863 = vrot.slane %v861, 4
        %v864 = vor.u32 %v863, %v859
        %v865 = vrot.slane %v864, 4
        %v867 = vshll.u32 %v598, 16
        %v869 = vrot.slane %v867, 5
        %v870 = vsel %vm654, %v865, %v869
        %v872 = vshrl.u32 %v599, 16
        %v874 = vrot.slane %v872, 4
        %v875 = vshll.u32 %v599, 16
        %v877 = vrot.slane %v875, 5
        %v878 = vor.u32 %v874, %v877
        %v879 = vrot.slane %v878, 4
        %v881 = vshll.u32 %v600, 16
        %v883 = vrot.slane %v881, 5
        %v884 = vsel %vm654, %v879, %v883
        %v885 = vshrl.u32 %v600, 16
        %v887 = vrot.slane %v885, 4
        %v888 = vor.u32 %v887, %v883
        %v889 = vrot.slane %v888, 4
        %v891 = vshll.u32 %v601, 16
        %v893 = vrot.slane %v891, 5
        %v894 = vsel %vm654, %v889, %v893
        %v896 = vshrl.u32 %v602, 16
        %v898 = vrot.slane %v896, 4
        %v899 = vshll.u32 %v602, 16
        %v901 = vrot.slane %v899, 5
        %v902 = vor.u32 %v898, %v901
        %v903 = vrot.slane %v902, 4
        %v905 = vshll.u32 %v603, 16
        %v907 = vrot.slane %v905, 5
        %v908 = vsel %vm654, %v903, %v907
        %v909 = vshrl.u32 %v603, 16
        %v911 = vrot.slane %v909, 4
        %v912 = vor.u32 %v911, %v907
        %v913 = vrot.slane %v912, 4
        %v915 = vshll.u32 %v604, 16
        %v917 = vrot.slane %v915, 5
        %v918 = vsel %vm654, %v913, %v917
        %v920 = vshrl.u32 %v605, 16
        %v922 = vrot.slane %v920, 4
        %v923 = vshll.u32 %v605, 16
        %v925 = vrot.slane %v923, 5
        %v926 = vor.u32 %v922, %v925
        %v927 = vrot.slane %v926, 4
        %v929 = vshll.u32 %v606, 16
        %v931 = vrot.slane %v929, 5
        %v932 = vsel %vm654, %v927, %v931
        %v933 = vshrl.u32 %v606, 16
        %v935 = vrot.slane %v933, 4
        %v936 = vor.u32 %v935, %v931
        %v937 = vrot.slane %v936, 4
        %v939 = vshll.u32 %v607, 16
        %v941 = vrot.slane %v939, 5
        %v942 = vsel %vm654, %v937, %v941
        %v944 = vshrl.u32 %v608, 16
        %v946 = vrot.slane %v944, 4
        %v947 = vshll.u32 %v608, 16
        %v949 = vrot.slane %v947, 5
        %v950 = vor.u32 %v946, %v949
        %v951 = vrot.slane %v950, 4
        %v953 = vshll.u32 %v609, 16
        %v955 = vrot.slane %v953, 5
        %v956 = vsel %vm654, %v951, %v955
        %v957 = vshrl.u32 %v609, 16
        %v959 = vrot.slane %v957, 4
        %v960 = vor.u32 %v959, %v955
        %v961 = vrot.slane %v960, 4
        %v963 = vshll.u32 %v610, 16
        %v965 = vrot.slane %v963, 5
        %v966 = vsel %vm654, %v961, %v965
        %v968 = vshrl.u32 %v611, 16
        %v970 = vrot.slane %v968, 4
        %v971 = vshll.u32 %v611, 16
        %v973 = vrot.slane %v971, 5
        %v974 = vor.u32 %v970, %v973
        %v975 = vrot.slane %v974, 4
        %v977 = vshll.u32 %v612, 16
        %v979 = vrot.slane %v977, 5
        %v980 = vsel %vm654, %v975, %v979
        %v981 = vshrl.u32 %v612, 16
        %v983 = vrot.slane %v981, 4
        %v984 = vor.u32 %v983, %v979
        %v985 = vrot.slane %v984, 4
        %v987 = vshll.u32 %v613, 16
        %v989 = vrot.slane %v987, 5
        %v990 = vsel %vm654, %v985, %v989
        %v992 = vshrl.u32 %v614, 16
        %v994 = vrot.slane %v992, 4
        %v995 = vshll.u32 %v614, 16
        %v997 = vrot.slane %v995, 5
        %v998 = vor.u32 %v994, %v997
        %v999 = vrot.slane %v998, 4
        %v1001 = vshll.u32 %v615, 16
        %v1003 = vrot.slane %v1001, 5
        %v1004 = vsel %vm654, %v999, %v1003
        %v1005 = vshrl.u32 %v615, 16
        %v1007 = vrot.slane %v1005, 4
        %v1008 = vor.u32 %v1007, %v1003
        %v1009 = vrot.slane %v1008, 4
        %v1011 = vshll.u32 %v616, 16
        %v1013 = vrot.slane %v1011, 5
        %v1014 = vsel %vm654, %v1009, %v1013
        %v1016 = vshrl.u32 %v617, 16
        %v1018 = vrot.slane %v1016, 4
        %v1019 = vshll.u32 %v617, 16
        %v1021 = vrot.slane %v1019, 5
        %v1022 = vor.u32 %v1018, %v1021
        %v1023 = vrot.slane %v1022, 4
        %v1025 = vshll.u32 %v618, 16
        %v1027 = vrot.slane %v1025, 5
        %v1028 = vsel %vm654, %v1023, %v1027
        %v1029 = vshrl.u32 %v618, 16
        %v1031 = vrot.slane %v1029, 4
        %v1032 = vor.u32 %v1031, %v1027
        %v1033 = vrot.slane %v1032, 4
        %v1035 = vshll.u32 %v619, 16
        %v1037 = vrot.slane %v1035, 5
        %v1038 = vsel %vm654, %v1033, %v1037
        %s1039 = scalar_lea.vmem %s1, 2
        %v1040 = vld [vmem:[%s1039] sm:$0x3]
        %v1041 = vunpack.c.l.b16 %v668
        %v1042 = vunpack.c.l.b16 %v678
        %v1043 = vunpack.c.l.b16 %v692
        %v1044 = vunpack.c.l.b16 %v702
        %v1045 = vunpack.c.l.b16 %v716
        %v1046 = vunpack.c.l.b16 %v726
        %v1047 = vunpack.c.l.b16 %v740
        %v1048 = vunpack.c.l.b16 %v750
        %v1049 = vunpack.c.l.b16 %v764
        %v1050 = vunpack.c.l.b16 %v774
        %v1051 = vunpack.c.l.b16 %v788
        %v1052 = vunpack.c.l.b16 %v798
        %v1053 = vunpack.c.l.b16 %v812
        %v1054 = vunpack.c.l.b16 %v822
        %v1055 = vunpack.c.l.b16 %v836
        %v1056 = vunpack.c.l.b16 %v846
        %v1057 = vunpack.c.l.b16 %v860
        %v1058 = vunpack.c.l.b16 %v870
        %v1059 = vunpack.c.l.b16 %v884
        %v1060 = vunpack.c.l.b16 %v894
        %v1061 = vunpack.c.l.b16 %v908
        %v1062 = vunpack.c.l.b16 %v918
        %v1063 = vunpack.c.l.b16 %v932
        %v1064 = vunpack.c.l.b16 %v942
        %v1065 = vunpack.c.l.b16 %v956
        %v1066 = vunpack.c.l.b16 %v966
        %v1067 = vunpack.c.l.b16 %v980
        %v1068 = vunpack.c.l.b16 %v990
        %v1069 = vunpack.c.l.b16 %v1004
        %v1070 = vunpack.c.l.b16 %v1014
        %v1071 = vunpack.c.l.b16 %v1028
        %v1072 = vunpack.c.l.b16 %v1038
        %v1073 = vpack.c.b16 %v1042, %v1041
        %v1074 = vpack.c.b16 %v1044, %v1043
        %v1075 = vpack.c.b16 %v1046, %v1045
        %v1076 = vpack.c.b16 %v1048, %v1047
        %v1077 = vpack.c.b16 %v1050, %v1049
        %v1078 = vpack.c.b16 %v1052, %v1051
        %v1079 = vpack.c.b16 %v1054, %v1053
        %v1080 = vpack.c.b16 %v1056, %v1055
        %v1081 = vpack.c.b16 %v1058, %v1057
        %v1082 = vpack.c.b16 %v1060, %v1059
        %v1083 = vpack.c.b16 %v1062, %v1061
        %v1084 = vpack.c.b16 %v1064, %v1063
        %v1085 = vpack.c.b16 %v1066, %v1065
        %v1086 = vpack.c.b16 %v1068, %v1067
        %v1087 = vpack.c.b16 %v1070, %v1069
        %v1088 = vpack.c.b16 %v1072, %v1071
        %v1090 = vsel %vm366, %v1073, 0
        %v1093 = vsel %vm366, %v1074, 0
        %v1096 = vsel %vm366, %v1075, 0
        %v1099 = vsel %vm366, %v1076, 0
        %v1102 = vsel %vm366, %v1077, 0
        %v1105 = vsel %vm366, %v1078, 0
        %v1108 = vsel %vm366, %v1079, 0
        %v1111 = vsel %vm366, %v1080, 0
        %v1114 = vsel %vm366, %v1081, 0
        %v1117 = vsel %vm366, %v1082, 0
        %v1120 = vsel %vm366, %v1083, 0
        %v1123 = vsel %vm366, %v1084, 0
        %v1126 = vsel %vm366, %v1085, 0
        %v1129 = vsel %vm366, %v1086, 0
        %v1132 = vsel %vm366, %v1087, 0
        %v1135 = vsel %vm366, %v1088, 0
        %v1138 = vsel %vm415, %v1040, 0
        %1140 = vmatpush.bf16.msra.mxu0 0
        %1141 = vmatpush.bf16.msra.mxu0 0
        %1142 = vmatpush.bf16.msra.mxu0 0
        %1143 = vmatpush.bf16.msra.mxu0 0
        %1144 = vmatpush.bf16.msra.mxu0 0
        %1145 = vmatpush.bf16.msra.mxu0 0
        %1146 = vmatpush.bf16.msra.mxu0 0
        %1147 = vmatpush.bf16.msra.mxu0 %v1138
        %1148 = vmatmul.bf16.gmra.mxu0 %v1090
        %v1149 = vpop.f32.mrf.mxu0
        %v1150 = vadd.f32 0.0, %v1149
        %v1151 = vpop.f32.mrf.mxu0
        %v1152 = vadd.f32 0.0, %v1151
        %1153 = vmatmul.bf16.gmra.mxu0 %v1093
        %v1154 = vpop.f32.mrf.mxu0
        %v1155 = vadd.f32 0.0, %v1154
        %v1156 = vpop.f32.mrf.mxu0
        %v1157 = vadd.f32 0.0, %v1156
        %1158 = vmatmul.bf16.gmra.mxu0 %v1096
        %v1159 = vpop.f32.mrf.mxu0
        %v1160 = vadd.f32 0.0, %v1159
        %v1161 = vpop.f32.mrf.mxu0
        %v1162 = vadd.f32 0.0, %v1161
        %1163 = vmatmul.bf16.gmra.mxu0 %v1099
        %v1164 = vpop.f32.mrf.mxu0
        %v1165 = vadd.f32 0.0, %v1164
        %v1166 = vpop.f32.mrf.mxu0
        %v1167 = vadd.f32 0.0, %v1166
        %1168 = vmatmul.bf16.gmra.mxu0 %v1102
        %v1169 = vpop.f32.mrf.mxu0
        %v1170 = vadd.f32 0.0, %v1169
        %v1171 = vpop.f32.mrf.mxu0
        %v1172 = vadd.f32 0.0, %v1171
        %1173 = vmatmul.bf16.gmra.mxu0 %v1105
        %v1174 = vpop.f32.mrf.mxu0
        %v1175 = vadd.f32 0.0, %v1174
        %v1176 = vpop.f32.mrf.mxu0
        %v1177 = vadd.f32 0.0, %v1176
        %1178 = vmatmul.bf16.gmra.mxu0 %v1108
        %v1179 = vpop.f32.mrf.mxu0
        %v1180 = vadd.f32 0.0, %v1179
        %v1181 = vpop.f32.mrf.mxu0
        %v1182 = vadd.f32 0.0, %v1181
        %1183 = vmatmul.bf16.gmra.mxu0 %v1111
        %v1184 = vpop.f32.mrf.mxu0
        %v1185 = vadd.f32 0.0, %v1184
        %v1186 = vpop.f32.mrf.mxu0
        %v1187 = vadd.f32 0.0, %v1186
        %1188 = vmatmul.bf16.gmra.mxu0 %v1114
        %v1189 = vpop.f32.mrf.mxu0
        %v1190 = vadd.f32 0.0, %v1189
        %v1191 = vpop.f32.mrf.mxu0
        %v1192 = vadd.f32 0.0, %v1191
        %1193 = vmatmul.bf16.gmra.mxu0 %v1117
        %v1194 = vpop.f32.mrf.mxu0
        %v1195 = vadd.f32 0.0, %v1194
        %v1196 = vpop.f32.mrf.mxu0
        %v1197 = vadd.f32 0.0, %v1196
        %1198 = vmatmul.bf16.gmra.mxu0 %v1120
        %v1199 = vpop.f32.mrf.mxu0
        %v1200 = vadd.f32 0.0, %v1199
        %v1201 = vpop.f32.mrf.mxu0
        %v1202 = vadd.f32 0.0, %v1201
        %1203 = vmatmul.bf16.gmra.mxu0 %v1123
        %v1204 = vpop.f32.mrf.mxu0
        %v1205 = vadd.f32 0.0, %v1204
        %v1206 = vpop.f32.mrf.mxu0
        %v1207 = vadd.f32 0.0, %v1206
        %1208 = vmatmul.bf16.gmra.mxu0 %v1126
        %v1209 = vpop.f32.mrf.mxu0
        %v1210 = vadd.f32 0.0, %v1209
        %v1211 = vpop.f32.mrf.mxu0
        %v1212 = vadd.f32 0.0, %v1211
        %1213 = vmatmul.bf16.gmra.mxu0 %v1129
        %v1214 = vpop.f32.mrf.mxu0
        %v1215 = vadd.f32 0.0, %v1214
        %v1216 = vpop.f32.mrf.mxu0
        %v1217 = vadd.f32 0.0, %v1216
        %1218 = vmatmul.bf16.gmra.mxu0 %v1132
        %v1219 = vpop.f32.mrf.mxu0
        %v1220 = vadd.f32 0.0, %v1219
        %v1221 = vpop.f32.mrf.mxu0
        %v1222 = vadd.f32 0.0, %v1221
        %1223 = vmatmul.bf16.gmra.mxu0 %v1135
        %v1224 = vpop.f32.mrf.mxu0
        %v1225 = vadd.f32 0.0, %v1224
        %v1226 = vpop.f32.mrf.mxu0
        %v1227 = vadd.f32 0.0, %v1226
        %1228 = vdwg.mxu0
        %v1229 = vadd.f32 %v620, %v1150
        %v1230 = vadd.f32 %v621, %v1152
        %v1231 = vadd.f32 %v622, %v1155
        %v1232 = vadd.f32 %v623, %v1157
        %v1233 = vadd.f32 %v624, %v1160
        %v1234 = vadd.f32 %v625, %v1162
        %v1235 = vadd.f32 %v626, %v1165
        %v1236 = vadd.f32 %v627, %v1167
        %v1237 = vadd.f32 %v628, %v1170
        %v1238 = vadd.f32 %v629, %v1172
        %v1239 = vadd.f32 %v630, %v1175
        %v1240 = vadd.f32 %v631, %v1177
        %v1241 = vadd.f32 %v632, %v1180
        %v1242 = vadd.f32 %v633, %v1182
        %v1243 = vadd.f32 %v634, %v1185
        %v1244 = vadd.f32 %v635, %v1187
        %v1245 = vadd.f32 %v636, %v1190
        %v1246 = vadd.f32 %v637, %v1192
        %v1247 = vadd.f32 %v638, %v1195
        %v1248 = vadd.f32 %v639, %v1197
        %v1249 = vadd.f32 %v640, %v1200
        %v1250 = vadd.f32 %v641, %v1202
        %v1251 = vadd.f32 %v642, %v1205
        %v1252 = vadd.f32 %v643, %v1207
        %v1253 = vadd.f32 %v644, %v1210
        %v1254 = vadd.f32 %v645, %v1212
        %v1255 = vadd.f32 %v646, %v1215
        %v1256 = vadd.f32 %v647, %v1217
        %v1257 = vadd.f32 %v648, %v1220
        %v1258 = vadd.f32 %v649, %v1222
        %v1259 = vadd.f32 %v650, %v1225
        %v1260 = vadd.f32 %v651, %v1227
        %1261 = vst [vmem:[#allocation2] sm:$0xff] %v1229
        %1262 = vst [vmem:[#allocation2 + $0x8] sm:$0xff] %v1230
        %1263 = vst [vmem:[#allocation2 + $0x10] sm:$0xff] %v1231
        %1264 = vst [vmem:[#allocation2 + $0x18] sm:$0xff] %v1232
        %1265 = vst [vmem:[#allocation2 + $0x20] sm:$0xff] %v1233
        %1266 = vst [vmem:[#allocation2 + $0x28] sm:$0xff] %v1234
        %1267 = vst [vmem:[#allocation2 + $0x30] sm:$0xff] %v1235
        %1268 = vst [vmem:[#allocation2 + $0x38] sm:$0xff] %v1236
        %1269 = vst [vmem:[#allocation2 + $0x40] sm:$0xff] %v1237
        %1270 = vst [vmem:[#allocation2 + $0x48] sm:$0xff] %v1238
        %1271 = vst [vmem:[#allocation2 + $0x50] sm:$0xff] %v1239
        %1272 = vst [vmem:[#allocation2 + $0x58] sm:$0xff] %v1240
        %1273 = vst [vmem:[#allocation2 + $0x60] sm:$0xff] %v1241
        %1274 = vst [vmem:[#allocation2 + $0x68] sm:$0xff] %v1242
        %1275 = vst [vmem:[#allocation2 + $0x70] sm:$0xff] %v1243
        %1276 = vst [vmem:[#allocation2 + $0x78] sm:$0xff] %v1244
        %1277 = vst [vmem:[#allocation2 + $0x80] sm:$0xff] %v1245
        %1278 = vst [vmem:[#allocation2 + $0x88] sm:$0xff] %v1246
        %1279 = vst [vmem:[#allocation2 + $0x90] sm:$0xff] %v1247
        %1280 = vst [vmem:[#allocation2 + $0x98] sm:$0xff] %v1248
        %1281 = vst [vmem:[#allocation2 + $0xa0] sm:$0xff] %v1249
        %1282 = vst [vmem:[#allocation2 + $0xa8] sm:$0xff] %v1250
        %1283 = vst [vmem:[#allocation2 + $0xb0] sm:$0xff] %v1251
        %1284 = vst [vmem:[#allocation2 + $0xb8] sm:$0xff] %v1252
        %1285 = vst [vmem:[#allocation2 + $0xc0] sm:$0xff] %v1253
        %1286 = vst [vmem:[#allocation2 + $0xc8] sm:$0xff] %v1254
        %1287 = vst [vmem:[#allocation2 + $0xd0] sm:$0xff] %v1255
        %1288 = vst [vmem:[#allocation2 + $0xd8] sm:$0xff] %v1256
        %1289 = vst [vmem:[#allocation2 + $0xe0] sm:$0xff] %v1257
        %1290 = vst [vmem:[#allocation2 + $0xe8] sm:$0xff] %v1258
        %1291 = vst [vmem:[#allocation2 + $0xf0] sm:$0xff] %v1259
        %1292 = vst [vmem:[#allocation2 + $0xf8] sm:$0xff] %v1260
        %v1293 = vld [vmem:[%s220] sm:$0xe]
        %v1294 = vld [vmem:[%s220 + $0x4] sm:$0xf]
        %v1295 = vld [vmem:[%s220 + $0x8] sm:$0x1]
        %v1296 = vld [vmem:[%s220 + $0xc] sm:$0xe]
        %v1297 = vld [vmem:[%s220 + $0x10] sm:$0xf]
        %v1298 = vld [vmem:[%s220 + $0x14] sm:$0x1]
        %v1299 = vld [vmem:[%s220 + $0x18] sm:$0xe]
        %v1300 = vld [vmem:[%s220 + $0x1c] sm:$0xf]
        %v1301 = vld [vmem:[%s220 + $0x20] sm:$0x1]
        %v1302 = vld [vmem:[%s220 + $0x24] sm:$0xe]
        %v1303 = vld [vmem:[%s220 + $0x28] sm:$0xf]
        %v1304 = vld [vmem:[%s220 + $0x2c] sm:$0x1]
        %v1305 = vld [vmem:[%s220 + $0x30] sm:$0xe]
        %v1306 = vld [vmem:[%s220 + $0x34] sm:$0xf]
        %v1307 = vld [vmem:[%s220 + $0x38] sm:$0x1]
        %v1308 = vld [vmem:[%s220 + $0x3c] sm:$0xe]
        %v1309 = vld [vmem:[%s220 + $0x40] sm:$0xf]
        %v1310 = vld [vmem:[%s220 + $0x44] sm:$0x1]
        %v1311 = vld [vmem:[%s220 + $0x48] sm:$0xe]
        %v1312 = vld [vmem:[%s220 + $0x4c] sm:$0xf]
        %v1313 = vld [vmem:[%s220 + $0x50] sm:$0x1]
        %v1314 = vld [vmem:[%s220 + $0x54] sm:$0xe]
        %v1315 = vld [vmem:[%s220 + $0x58] sm:$0xf]
        %v1316 = vld [vmem:[%s220 + $0x5c] sm:$0x1]
        %v1317 = vld [vmem:[%s220 + $0x60] sm:$0xe]
        %v1318 = vld [vmem:[%s220 + $0x64] sm:$0xf]
        %v1319 = vld [vmem:[%s220 + $0x68] sm:$0x1]
        %v1320 = vld [vmem:[%s220 + $0x6c] sm:$0xe]
        %v1321 = vld [vmem:[%s220 + $0x70] sm:$0xf]
        %v1322 = vld [vmem:[%s220 + $0x74] sm:$0x1]
        %v1323 = vld [vmem:[%s220 + $0x78] sm:$0xe]
        %v1324 = vld [vmem:[%s220 + $0x7c] sm:$0xf]
        %v1325 = vld [vmem:[%s220 + $0x80] sm:$0x1]
        %v1326 = vld [vmem:[%s220 + $0x84] sm:$0xe]
        %v1327 = vld [vmem:[%s220 + $0x88] sm:$0xf]
        %v1328 = vld [vmem:[%s220 + $0x8c] sm:$0x1]
        %v1329 = vld [vmem:[%s220 + $0x90] sm:$0xe]
        %v1330 = vld [vmem:[%s220 + $0x94] sm:$0xf]
        %v1331 = vld [vmem:[%s220 + $0x98] sm:$0x1]
        %v1332 = vld [vmem:[%s220 + $0x9c] sm:$0xe]
        %v1333 = vld [vmem:[%s220 + $0xa0] sm:$0xf]
        %v1334 = vld [vmem:[%s220 + $0xa4] sm:$0x1]
        %v1335 = vld [vmem:[%s220 + $0xa8] sm:$0xe]
        %v1336 = vld [vmem:[%s220 + $0xac] sm:$0xf]
        %v1337 = vld [vmem:[%s220 + $0xb0] sm:$0x1]
        %v1338 = vld [vmem:[%s220 + $0xb4] sm:$0xe]
        %v1339 = vld [vmem:[%s220 + $0xb8] sm:$0xf]
        %v1340 = vld [vmem:[%s220 + $0xbc] sm:$0x1]
        %v1341 = vld [vmem:[#allocation2] sm:$0xff]
        %v1342 = vld [vmem:[#allocation2 + $0x8] sm:$0xff]
        %v1343 = vld [vmem:[#allocation2 + $0x10] sm:$0xff]
        %v1344 = vld [vmem:[#allocation2 + $0x18] sm:$0xff]
        %v1345 = vld [vmem:[#allocation2 + $0x20] sm:$0xff]
        %v1346 = vld [vmem:[#allocation2 + $0x28] sm:$0xff]
        %v1347 = vld [vmem:[#allocation2 + $0x30] sm:$0xff]
        %v1348 = vld [vmem:[#allocation2 + $0x38] sm:$0xff]
        %v1349 = vld [vmem:[#allocation2 + $0x40] sm:$0xff]
        %v1350 = vld [vmem:[#allocation2 + $0x48] sm:$0xff]
        %v1351 = vld [vmem:[#allocation2 + $0x50] sm:$0xff]
        %v1352 = vld [vmem:[#allocation2 + $0x58] sm:$0xff]
        %v1353 = vld [vmem:[#allocation2 + $0x60] sm:$0xff]
        %v1354 = vld [vmem:[#allocation2 + $0x68] sm:$0xff]
        %v1355 = vld [vmem:[#allocation2 + $0x70] sm:$0xff]
        %v1356 = vld [vmem:[#allocation2 + $0x78] sm:$0xff]
        %v1357 = vld [vmem:[#allocation2 + $0x80] sm:$0xff]
        %v1358 = vld [vmem:[#allocation2 + $0x88] sm:$0xff]
        %v1359 = vld [vmem:[#allocation2 + $0x90] sm:$0xff]
        %v1360 = vld [vmem:[#allocation2 + $0x98] sm:$0xff]
        %v1361 = vld [vmem:[#allocation2 + $0xa0] sm:$0xff]
        %v1362 = vld [vmem:[#allocation2 + $0xa8] sm:$0xff]
        %v1363 = vld [vmem:[#allocation2 + $0xb0] sm:$0xff]
        %v1364 = vld [vmem:[#allocation2 + $0xb8] sm:$0xff]
        %v1365 = vld [vmem:[#allocation2 + $0xc0] sm:$0xff]
        %v1366 = vld [vmem:[#allocation2 + $0xc8] sm:$0xff]
        %v1367 = vld [vmem:[#allocation2 + $0xd0] sm:$0xff]
        %v1368 = vld [vmem:[#allocation2 + $0xd8] sm:$0xff]
        %v1369 = vld [vmem:[#allocation2 + $0xe0] sm:$0xff]
        %v1370 = vld [vmem:[#allocation2 + $0xe8] sm:$0xff]
        %v1371 = vld [vmem:[#allocation2 + $0xf0] sm:$0xff]
        %v1372 = vld [vmem:[#allocation2 + $0xf8] sm:$0xff]
        %vm1421 = vcmask 1042432
        %vm1422 = vcmask 1046532
        %vm1423 = vmor %vm1421, %vm1422
        %v1424 = vrot.slane %v1293, 5
        %v1425 = vrot.slane %v1424, 4
        %v1426 = vrot.slane %v1294, 5
        %v1427 = vsel %vm1423, %v1425, %v1426
        %v1428 = vrot.slane %v1426, 4
        %v1429 = vrot.slane %v1295, 5
        %v1430 = vsel %vm1423, %v1428, %v1429
        %v1431 = vrot.slane %v1296, 5
        %v1432 = vrot.slane %v1431, 4
        %v1433 = vrot.slane %v1297, 5
        %v1434 = vsel %vm1423, %v1432, %v1433
        %v1435 = vrot.slane %v1433, 4
        %v1436 = vrot.slane %v1298, 5
        %v1437 = vsel %vm1423, %v1435, %v1436
        %v1438 = vrot.slane %v1299, 5
        %v1439 = vrot.slane %v1438, 4
        %v1440 = vrot.slane %v1300, 5
        %v1441 = vsel %vm1423, %v1439, %v1440
        %v1442 = vrot.slane %v1440, 4
        %v1443 = vrot.slane %v1301, 5
        %v1444 = vsel %vm1423, %v1442, %v1443
        %v1445 = vrot.slane %v1302, 5
        %v1446 = vrot.slane %v1445, 4
        %v1447 = vrot.slane %v1303, 5
        %v1448 = vsel %vm1423, %v1446, %v1447
        %v1449 = vrot.slane %v1447, 4
        %v1450 = vrot.slane %v1304, 5
        %v1451 = vsel %vm1423, %v1449, %v1450
        %v1452 = vrot.slane %v1305, 5
        %v1453 = vrot.slane %v1452, 4
        %v1454 = vrot.slane %v1306, 5
        %v1455 = vsel %vm1423, %v1453, %v1454
        %v1456 = vrot.slane %v1454, 4
        %v1457 = vrot.slane %v1307, 5
        %v1458 = vsel %vm1423, %v1456, %v1457
        %v1459 = vrot.slane %v1308, 5
        %v1460 = vrot.slane %v1459, 4
        %v1461 = vrot.slane %v1309, 5
        %v1462 = vsel %vm1423, %v1460, %v1461
        %v1463 = vrot.slane %v1461, 4
        %v1464 = vrot.slane %v1310, 5
        %v1465 = vsel %vm1423, %v1463, %v1464
        %v1466 = vrot.slane %v1311, 5
        %v1467 = vrot.slane %v1466, 4
        %v1468 = vrot.slane %v1312, 5
        %v1469 = vsel %vm1423, %v1467, %v1468
        %v1470 = vrot.slane %v1468, 4
        %v1471 = vrot.slane %v1313, 5
        %v1472 = vsel %vm1423, %v1470, %v1471
        %v1473 = vrot.slane %v1314, 5
        %v1474 = vrot.slane %v1473, 4
        %v1475 = vrot.slane %v1315, 5
        %v1476 = vsel %vm1423, %v1474, %v1475
        %v1477 = vrot.slane %v1475, 4
        %v1478 = vrot.slane %v1316, 5
        %v1479 = vsel %vm1423, %v1477, %v1478
        %v1480 = vrot.slane %v1317, 5
        %v1481 = vrot.slane %v1480, 4
        %v1482 = vrot.slane %v1318, 5
        %v1483 = vsel %vm1423, %v1481, %v1482
        %v1484 = vrot.slane %v1482, 4
        %v1485 = vrot.slane %v1319, 5
        %v1486 = vsel %vm1423, %v1484, %v1485
        %v1487 = vrot.slane %v1320, 5
        %v1488 = vrot.slane %v1487, 4
        %v1489 = vrot.slane %v1321, 5
        %v1490 = vsel %vm1423, %v1488, %v1489
        %v1491 = vrot.slane %v1489, 4
        %v1492 = vrot.slane %v1322, 5
        %v1493 = vsel %vm1423, %v1491, %v1492
        %v1494 = vrot.slane %v1323, 5
        %v1495 = vrot.slane %v1494, 4
        %v1496 = vrot.slane %v1324, 5
        %v1497 = vsel %vm1423, %v1495, %v1496
        %v1498 = vrot.slane %v1496, 4
        %v1499 = vrot.slane %v1325, 5
        %v1500 = vsel %vm1423, %v1498, %v1499
        %v1501 = vrot.slane %v1326, 5
        %v1502 = vrot.slane %v1501, 4
        %v1503 = vrot.slane %v1327, 5
        %v1504 = vsel %vm1423, %v1502, %v1503
        %v1505 = vrot.slane %v1503, 4
        %v1506 = vrot.slane %v1328, 5
        %v1507 = vsel %vm1423, %v1505, %v1506
        %v1508 = vrot.slane %v1329, 5
        %v1509 = vrot.slane %v1508, 4
        %v1510 = vrot.slane %v1330, 5
        %v1511 = vsel %vm1423, %v1509, %v1510
        %v1512 = vrot.slane %v1510, 4
        %v1513 = vrot.slane %v1331, 5
        %v1514 = vsel %vm1423, %v1512, %v1513
        %v1515 = vrot.slane %v1332, 5
        %v1516 = vrot.slane %v1515, 4
        %v1517 = vrot.slane %v1333, 5
        %v1518 = vsel %vm1423, %v1516, %v1517
        %v1519 = vrot.slane %v1517, 4
        %v1520 = vrot.slane %v1334, 5
        %v1521 = vsel %vm1423, %v1519, %v1520
        %v1522 = vrot.slane %v1335, 5
        %v1523 = vrot.slane %v1522, 4
        %v1524 = vrot.slane %v1336, 5
        %v1525 = vsel %vm1423, %v1523, %v1524
        %v1526 = vrot.slane %v1524, 4
        %v1527 = vrot.slane %v1337, 5
        %v1528 = vsel %vm1423, %v1526, %v1527
        %v1529 = vrot.slane %v1338, 5
        %v1530 = vrot.slane %v1529, 4
        %v1531 = vrot.slane %v1339, 5
        %v1532 = vsel %vm1423, %v1530, %v1531
        %v1533 = vrot.slane %v1531, 4
        %v1534 = vrot.slane %v1340, 5
        %v1535 = vsel %vm1423, %v1533, %v1534
        %s1536 = scalar_lea.vmem %s1, 4
        %v1537 = vld [vmem:[%s1536] sm:$0x3]
        %v1538 = vunpack.c.l.b16 %v1427
        %v1539 = vunpack.c.l.b16 %v1430
        %v1540 = vunpack.c.l.b16 %v1434
        %v1541 = vunpack.c.l.b16 %v1437
        %v1542 = vunpack.c.l.b16 %v1441
        %v1543 = vunpack.c.l.b16 %v1444
        %v1544 = vunpack.c.l.b16 %v1448
        %v1545 = vunpack.c.l.b16 %v1451
        %v1546 = vunpack.c.l.b16 %v1455
        %v1547 = vunpack.c.l.b16 %v1458
        %v1548 = vunpack.c.l.b16 %v1462
        %v1549 = vunpack.c.l.b16 %v1465
        %v1550 = vunpack.c.l.b16 %v1469
        %v1551 = vunpack.c.l.b16 %v1472
        %v1552 = vunpack.c.l.b16 %v1476
        %v1553 = vunpack.c.l.b16 %v1479
        %v1554 = vunpack.c.l.b16 %v1483
        %v1555 = vunpack.c.l.b16 %v1486
        %v1556 = vunpack.c.l.b16 %v1490
        %v1557 = vunpack.c.l.b16 %v1493
        %v1558 = vunpack.c.l.b16 %v1497
        %v1559 = vunpack.c.l.b16 %v1500
        %v1560 = vunpack.c.l.b16 %v1504
        %v1561 = vunpack.c.l.b16 %v1507
        %v1562 = vunpack.c.l.b16 %v1511
        %v1563 = vunpack.c.l.b16 %v1514
        %v1564 = vunpack.c.l.b16 %v1518
        %v1565 = vunpack.c.l.b16 %v1521
        %v1566 = vunpack.c.l.b16 %v1525
        %v1567 = vunpack.c.l.b16 %v1528
        %v1568 = vunpack.c.l.b16 %v1532
        %v1569 = vunpack.c.l.b16 %v1535
        %v1570 = vpack.c.b16 %v1539, %v1538
        %v1571 = vpack.c.b16 %v1541, %v1540
        %v1572 = vpack.c.b16 %v1543, %v1542
        %v1573 = vpack.c.b16 %v1545, %v1544
        %v1574 = vpack.c.b16 %v1547, %v1546
        %v1575 = vpack.c.b16 %v1549, %v1548
        %v1576 = vpack.c.b16 %v1551, %v1550
        %v1577 = vpack.c.b16 %v1553, %v1552
        %v1578 = vpack.c.b16 %v1555, %v1554
        %v1579 = vpack.c.b16 %v1557, %v1556
        %v1580 = vpack.c.b16 %v1559, %v1558
        %v1581 = vpack.c.b16 %v1561, %v1560
        %v1582 = vpack.c.b16 %v1563, %v1562
        %v1583 = vpack.c.b16 %v1565, %v1564
        %v1584 = vpack.c.b16 %v1567, %v1566
        %v1585 = vpack.c.b16 %v1569, %v1568
        %v1587 = vsel %vm366, %v1570, 0
        %v1590 = vsel %vm366, %v1571, 0
        %v1593 = vsel %vm366, %v1572, 0
        %v1596 = vsel %vm366, %v1573, 0
        %v1599 = vsel %vm366, %v1574, 0
        %v1602 = vsel %vm366, %v1575, 0
        %v1605 = vsel %vm366, %v1576, 0
        %v1608 = vsel %vm366, %v1577, 0
        %v1611 = vsel %vm366, %v1578, 0
        %v1614 = vsel %vm366, %v1579, 0
        %v1617 = vsel %vm366, %v1580, 0
        %v1620 = vsel %vm366, %v1581, 0
        %v1623 = vsel %vm366, %v1582, 0
        %v1626 = vsel %vm366, %v1583, 0
        %v1629 = vsel %vm366, %v1584, 0
        %v1632 = vsel %vm366, %v1585, 0
        %v1635 = vsel %vm415, %v1537, 0
        %1637 = vmatpush.bf16.msra.mxu0 0
        %1638 = vmatpush.bf16.msra.mxu0 0
        %1639 = vmatpush.bf16.msra.mxu0 0
        %1640 = vmatpush.bf16.msra.mxu0 0
        %1641 = vmatpush.bf16.msra.mxu0 0
        %1642 = vmatpush.bf16.msra.mxu0 0
        %1643 = vmatpush.bf16.msra.mxu0 0
        %1644 = vmatpush.bf16.msra.mxu0 %v1635
        %1645 = vmatmul.bf16.gmra.mxu0 %v1587
        %v1646 = vpop.f32.mrf.mxu0
        %v1647 = vadd.f32 0.0, %v1646
        %v1648 = vpop.f32.mrf.mxu0
        %v1649 = vadd.f32 0.0, %v1648
        %1650 = vmatmul.bf16.gmra.mxu0 %v1590
        %v1651 = vpop.f32.mrf.mxu0
        %v1652 = vadd.f32 0.0, %v1651
        %v1653 = vpop.f32.mrf.mxu0
        %v1654 = vadd.f32 0.0, %v1653
        %1655 = vmatmul.bf16.gmra.mxu0 %v1593
        %v1656 = vpop.f32.mrf.mxu0
        %v1657 = vadd.f32 0.0, %v1656
        %v1658 = vpop.f32.mrf.mxu0
        %v1659 = vadd.f32 0.0, %v1658
        %1660 = vmatmul.bf16.gmra.mxu0 %v1596
        %v1661 = vpop.f32.mrf.mxu0
        %v1662 = vadd.f32 0.0, %v1661
        %v1663 = vpop.f32.mrf.mxu0
        %v1664 = vadd.f32 0.0, %v1663
        %1665 = vmatmul.bf16.gmra.mxu0 %v1599
        %v1666 = vpop.f32.mrf.mxu0
        %v1667 = vadd.f32 0.0, %v1666
        %v1668 = vpop.f32.mrf.mxu0
        %v1669 = vadd.f32 0.0, %v1668
        %1670 = vmatmul.bf16.gmra.mxu0 %v1602
        %v1671 = vpop.f32.mrf.mxu0
        %v1672 = vadd.f32 0.0, %v1671
        %v1673 = vpop.f32.mrf.mxu0
        %v1674 = vadd.f32 0.0, %v1673
        %1675 = vmatmul.bf16.gmra.mxu0 %v1605
        %v1676 = vpop.f32.mrf.mxu0
        %v1677 = vadd.f32 0.0, %v1676
        %v1678 = vpop.f32.mrf.mxu0
        %v1679 = vadd.f32 0.0, %v1678
        %1680 = vmatmul.bf16.gmra.mxu0 %v1608
        %v1681 = vpop.f32.mrf.mxu0
        %v1682 = vadd.f32 0.0, %v1681
        %v1683 = vpop.f32.mrf.mxu0
        %v1684 = vadd.f32 0.0, %v1683
        %1685 = vmatmul.bf16.gmra.mxu0 %v1611
        %v1686 = vpop.f32.mrf.mxu0
        %v1687 = vadd.f32 0.0, %v1686
        %v1688 = vpop.f32.mrf.mxu0
        %v1689 = vadd.f32 0.0, %v1688
        %1690 = vmatmul.bf16.gmra.mxu0 %v1614
        %v1691 = vpop.f32.mrf.mxu0
        %v1692 = vadd.f32 0.0, %v1691
        %v1693 = vpop.f32.mrf.mxu0
        %v1694 = vadd.f32 0.0, %v1693
        %1695 = vmatmul.bf16.gmra.mxu0 %v1617
        %v1696 = vpop.f32.mrf.mxu0
        %v1697 = vadd.f32 0.0, %v1696
        %v1698 = vpop.f32.mrf.mxu0
        %v1699 = vadd.f32 0.0, %v1698
        %1700 = vmatmul.bf16.gmra.mxu0 %v1620
        %v1701 = vpop.f32.mrf.mxu0
        %v1702 = vadd.f32 0.0, %v1701
        %v1703 = vpop.f32.mrf.mxu0
        %v1704 = vadd.f32 0.0, %v1703
        %1705 = vmatmul.bf16.gmra.mxu0 %v1623
        %v1706 = vpop.f32.mrf.mxu0
        %v1707 = vadd.f32 0.0, %v1706
        %v1708 = vpop.f32.mrf.mxu0
        %v1709 = vadd.f32 0.0, %v1708
        %1710 = vmatmul.bf16.gmra.mxu0 %v1626
        %v1711 = vpop.f32.mrf.mxu0
        %v1712 = vadd.f32 0.0, %v1711
        %v1713 = vpop.f32.mrf.mxu0
        %v1714 = vadd.f32 0.0, %v1713
        %1715 = vmatmul.bf16.gmra.mxu0 %v1629
        %v1716 = vpop.f32.mrf.mxu0
        %v1717 = vadd.f32 0.0, %v1716
        %v1718 = vpop.f32.mrf.mxu0
        %v1719 = vadd.f32 0.0, %v1718
        %1720 = vmatmul.bf16.gmra.mxu0 %v1632
        %v1721 = vpop.f32.mrf.mxu0
        %v1722 = vadd.f32 0.0, %v1721
        %v1723 = vpop.f32.mrf.mxu0
        %v1724 = vadd.f32 0.0, %v1723
        %1725 = vdwg.mxu0
        %v1726 = vadd.f32 %v1341, %v1647
        %v1727 = vadd.f32 %v1342, %v1649
        %v1728 = vadd.f32 %v1343, %v1652
        %v1729 = vadd.f32 %v1344, %v1654
        %v1730 = vadd.f32 %v1345, %v1657
        %v1731 = vadd.f32 %v1346, %v1659
        %v1732 = vadd.f32 %v1347, %v1662
        %v1733 = vadd.f32 %v1348, %v1664
        %v1734 = vadd.f32 %v1349, %v1667
        %v1735 = vadd.f32 %v1350, %v1669
        %v1736 = vadd.f32 %v1351, %v1672
        %v1737 = vadd.f32 %v1352, %v1674
        %v1738 = vadd.f32 %v1353, %v1677
        %v1739 = vadd.f32 %v1354, %v1679
        %v1740 = vadd.f32 %v1355, %v1682
        %v1741 = vadd.f32 %v1356, %v1684
        %v1742 = vadd.f32 %v1357, %v1687
        %v1743 = vadd.f32 %v1358, %v1689
        %v1744 = vadd.f32 %v1359, %v1692
        %v1745 = vadd.f32 %v1360, %v1694
        %v1746 = vadd.f32 %v1361, %v1697
        %v1747 = vadd.f32 %v1362, %v1699
        %v1748 = vadd.f32 %v1363, %v1702
        %v1749 = vadd.f32 %v1364, %v1704
        %v1750 = vadd.f32 %v1365, %v1707
        %v1751 = vadd.f32 %v1366, %v1709
        %v1752 = vadd.f32 %v1367, %v1712
        %v1753 = vadd.f32 %v1368, %v1714
        %v1754 = vadd.f32 %v1369, %v1717
        %v1755 = vadd.f32 %v1370, %v1719
        %v1756 = vadd.f32 %v1371, %v1722
        %v1757 = vadd.f32 %v1372, %v1724
        %1758 = vst [vmem:[#allocation2] sm:$0xff] %v1726
        %1759 = vst [vmem:[#allocation2 + $0x8] sm:$0xff] %v1727
        %1760 = vst [vmem:[#allocation2 + $0x10] sm:$0xff] %v1728
        %1761 = vst [vmem:[#allocation2 + $0x18] sm:$0xff] %v1729
        %1762 = vst [vmem:[#allocation2 + $0x20] sm:$0xff] %v1730
        %1763 = vst [vmem:[#allocation2 + $0x28] sm:$0xff] %v1731
        %1764 = vst [vmem:[#allocation2 + $0x30] sm:$0xff] %v1732
        %1765 = vst [vmem:[#allocation2 + $0x38] sm:$0xff] %v1733
        %1766 = vst [vmem:[#allocation2 + $0x40] sm:$0xff] %v1734
        %1767 = vst [vmem:[#allocation2 + $0x48] sm:$0xff] %v1735
        %1768 = vst [vmem:[#allocation2 + $0x50] sm:$0xff] %v1736
        %1769 = vst [vmem:[#allocation2 + $0x58] sm:$0xff] %v1737
        %1770 = vst [vmem:[#allocation2 + $0x60] sm:$0xff] %v1738
        %1771 = vst [vmem:[#allocation2 + $0x68] sm:$0xff] %v1739
        %1772 = vst [vmem:[#allocation2 + $0x70] sm:$0xff] %v1740
        %1773 = vst [vmem:[#allocation2 + $0x78] sm:$0xff] %v1741
        %1774 = vst [vmem:[#allocation2 + $0x80] sm:$0xff] %v1742
        %1775 = vst [vmem:[#allocation2 + $0x88] sm:$0xff] %v1743
        %1776 = vst [vmem:[#allocation2 + $0x90] sm:$0xff] %v1744
        %1777 = vst [vmem:[#allocation2 + $0x98] sm:$0xff] %v1745
        %1778 = vst [vmem:[#allocation2 + $0xa0] sm:$0xff] %v1746
        %1779 = vst [vmem:[#allocation2 + $0xa8] sm:$0xff] %v1747
        %1780 = vst [vmem:[#allocation2 + $0xb0] sm:$0xff] %v1748
        %1781 = vst [vmem:[#allocation2 + $0xb8] sm:$0xff] %v1749
        %1782 = vst [vmem:[#allocation2 + $0xc0] sm:$0xff] %v1750
        %1783 = vst [vmem:[#allocation2 + $0xc8] sm:$0xff] %v1751
        %1784 = vst [vmem:[#allocation2 + $0xd0] sm:$0xff] %v1752
        %1785 = vst [vmem:[#allocation2 + $0xd8] sm:$0xff] %v1753
        %1786 = vst [vmem:[#allocation2 + $0xe0] sm:$0xff] %v1754
        %1787 = vst [vmem:[#allocation2 + $0xe8] sm:$0xff] %v1755
        %1788 = vst [vmem:[#allocation2 + $0xf0] sm:$0xff] %v1756
        %1789 = vst [vmem:[#allocation2 + $0xf8] sm:$0xff] %v1757
        %s1790 = sadd.s32 %s185, 1
        %s1791 = smul.u32 %s1790, 3
        %s1792 = smul.addr %s1791, 4
        %s1793 = scalar_lea.vmem %s182, %s1792
        %v1794 = vld [vmem:[%s1793] sm:$0xf]
        %v1795 = vld [vmem:[%s1793 + $0x4] sm:$0xf]
        %v1796 = vld [vmem:[%s1793 + $0xc] sm:$0xf]
        %v1797 = vld [vmem:[%s1793 + $0x10] sm:$0xf]
        %v1798 = vld [vmem:[%s1793 + $0x18] sm:$0xf]
        %v1799 = vld [vmem:[%s1793 + $0x1c] sm:$0xf]
        %v1800 = vld [vmem:[%s1793 + $0x24] sm:$0xf]
        %v1801 = vld [vmem:[%s1793 + $0x28] sm:$0xf]
        %v1802 = vld [vmem:[%s1793 + $0x30] sm:$0xf]
        %v1803 = vld [vmem:[%s1793 + $0x34] sm:$0xf]
        %v1804 = vld [vmem:[%s1793 + $0x3c] sm:$0xf]
        %v1805 = vld [vmem:[%s1793 + $0x40] sm:$0xf]
        %v1806 = vld [vmem:[%s1793 + $0x48] sm:$0xf]
        %v1807 = vld [vmem:[%s1793 + $0x4c] sm:$0xf]
        %v1808 = vld [vmem:[%s1793 + $0x54] sm:$0xf]
        %v1809 = vld [vmem:[%s1793 + $0x58] sm:$0xf]
        %v1810 = vld [vmem:[%s1793 + $0x60] sm:$0xf]
        %v1811 = vld [vmem:[%s1793 + $0x64] sm:$0xf]
        %v1812 = vld [vmem:[%s1793 + $0x6c] sm:$0xf]
        %v1813 = vld [vmem:[%s1793 + $0x70] sm:$0xf]
        %v1814 = vld [vmem:[%s1793 + $0x78] sm:$0xf]
        %v1815 = vld [vmem:[%s1793 + $0x7c] sm:$0xf]
        %v1816 = vld [vmem:[%s1793 + $0x84] sm:$0xf]
        %v1817 = vld [vmem:[%s1793 + $0x88] sm:$0xf]
        %v1818 = vld [vmem:[%s1793 + $0x90] sm:$0xf]
        %v1819 = vld [vmem:[%s1793 + $0x94] sm:$0xf]
        %v1820 = vld [vmem:[%s1793 + $0x9c] sm:$0xf]
        %v1821 = vld [vmem:[%s1793 + $0xa0] sm:$0xf]
        %v1822 = vld [vmem:[%s1793 + $0xa8] sm:$0xf]
        %v1823 = vld [vmem:[%s1793 + $0xac] sm:$0xf]
        %v1824 = vld [vmem:[%s1793 + $0xb4] sm:$0xf]
        %v1825 = vld [vmem:[%s1793 + $0xb8] sm:$0xf]
        %v1826 = vld [vmem:[#allocation2] sm:$0xff]
        %v1827 = vld [vmem:[#allocation2 + $0x8] sm:$0xff]
        %v1828 = vld [vmem:[#allocation2 + $0x10] sm:$0xff]
        %v1829 = vld [vmem:[#allocation2 + $0x18] sm:$0xff]
        %v1830 = vld [vmem:[#allocation2 + $0x20] sm:$0xff]
        %v1831 = vld [vmem:[#allocation2 + $0x28] sm:$0xff]
        %v1832 = vld [vmem:[#allocation2 + $0x30] sm:$0xff]
        %v1833 = vld [vmem:[#allocation2 + $0x38] sm:$0xff]
        %v1834 = vld [vmem:[#allocation2 + $0x40] sm:$0xff]
        %v1835 = vld [vmem:[#allocation2 + $0x48] sm:$0xff]
        %v1836 = vld [vmem:[#allocation2 + $0x50] sm:$0xff]
        %v1837 = vld [vmem:[#allocation2 + $0x58] sm:$0xff]
        %v1838 = vld [vmem:[#allocation2 + $0x60] sm:$0xff]
        %v1839 = vld [vmem:[#allocation2 + $0x68] sm:$0xff]
        %v1840 = vld [vmem:[#allocation2 + $0x70] sm:$0xff]
        %v1841 = vld [vmem:[#allocation2 + $0x78] sm:$0xff]
        %v1842 = vld [vmem:[#allocation2 + $0x80] sm:$0xff]
        %v1843 = vld [vmem:[#allocation2 + $0x88] sm:$0xff]
        %v1844 = vld [vmem:[#allocation2 + $0x90] sm:$0xff]
        %v1845 = vld [vmem:[#allocation2 + $0x98] sm:$0xff]
        %v1846 = vld [vmem:[#allocation2 + $0xa0] sm:$0xff]
        %v1847 = vld [vmem:[#allocation2 + $0xa8] sm:$0xff]
        %v1848 = vld [vmem:[#allocation2 + $0xb0] sm:$0xff]
        %v1849 = vld [vmem:[#allocation2 + $0xb8] sm:$0xff]
        %v1850 = vld [vmem:[#allocation2 + $0xc0] sm:$0xff]
        %v1851 = vld [vmem:[#allocation2 + $0xc8] sm:$0xff]
        %v1852 = vld [vmem:[#allocation2 + $0xd0] sm:$0xff]
        %v1853 = vld [vmem:[#allocation2 + $0xd8] sm:$0xff]
        %v1854 = vld [vmem:[#allocation2 + $0xe0] sm:$0xff]
        %v1855 = vld [vmem:[#allocation2 + $0xe8] sm:$0xff]
        %v1856 = vld [vmem:[#allocation2 + $0xf0] sm:$0xff]
        %v1857 = vld [vmem:[#allocation2 + $0xf8] sm:$0xff]
        %s1858 = scalar_lea.vmem %s1, 6
        %v1859 = vld [vmem:[%s1858] sm:$0x3]
        %v1892 = vunpack.c.l.b16 %v1794
        %v1893 = vunpack.c.l.b16 %v1795
        %v1894 = vunpack.c.l.b16 %v1796
        %v1895 = vunpack.c.l.b16 %v1797
        %v1896 = vunpack.c.l.b16 %v1798
        %v1897 = vunpack.c.l.b16 %v1799
        %v1898 = vunpack.c.l.b16 %v1800
        %v1899 = vunpack.c.l.b16 %v1801
        %v1900 = vunpack.c.l.b16 %v1802
        %v1901 = vunpack.c.l.b16 %v1803
        %v1902 = vunpack.c.l.b16 %v1804
        %v1903 = vunpack.c.l.b16 %v1805
        %v1904 = vunpack.c.l.b16 %v1806
        %v1905 = vunpack.c.l.b16 %v1807
        %v1906 = vunpack.c.l.b16 %v1808
        %v1907 = vunpack.c.l.b16 %v1809
        %v1908 = vunpack.c.l.b16 %v1810
        %v1909 = vunpack.c.l.b16 %v1811
        %v1910 = vunpack.c.l.b16 %v1812
        %v1911 = vunpack.c.l.b16 %v1813
        %v1912 = vunpack.c.l.b16 %v1814
        %v1913 = vunpack.c.l.b16 %v1815
        %v1914 = vunpack.c.l.b16 %v1816
        %v1915 = vunpack.c.l.b16 %v1817
        %v1916 = vunpack.c.l.b16 %v1818
        %v1917 = vunpack.c.l.b16 %v1819
        %v1918 = vunpack.c.l.b16 %v1820
        %v1919 = vunpack.c.l.b16 %v1821
        %v1920 = vunpack.c.l.b16 %v1822
        %v1921 = vunpack.c.l.b16 %v1823
        %v1922 = vunpack.c.l.b16 %v1824
        %v1923 = vunpack.c.l.b16 %v1825
        %v1924 = vpack.c.b16 %v1893, %v1892
        %v1925 = vpack.c.b16 %v1895, %v1894
        %v1926 = vpack.c.b16 %v1897, %v1896
        %v1927 = vpack.c.b16 %v1899, %v1898
        %v1928 = vpack.c.b16 %v1901, %v1900
        %v1929 = vpack.c.b16 %v1903, %v1902
        %v1930 = vpack.c.b16 %v1905, %v1904
        %v1931 = vpack.c.b16 %v1907, %v1906
        %v1932 = vpack.c.b16 %v1909, %v1908
        %v1933 = vpack.c.b16 %v1911, %v1910
        %v1934 = vpack.c.b16 %v1913, %v1912
        %v1935 = vpack.c.b16 %v1915, %v1914
        %v1936 = vpack.c.b16 %v1917, %v1916
        %v1937 = vpack.c.b16 %v1919, %v1918
        %v1938 = vpack.c.b16 %v1921, %v1920
        %v1939 = vpack.c.b16 %v1923, %v1922
        %v1941 = vsel %vm366, %v1924, 0
        %v1944 = vsel %vm366, %v1925, 0
        %v1947 = vsel %vm366, %v1926, 0
        %v1950 = vsel %vm366, %v1927, 0
        %v1953 = vsel %vm366, %v1928, 0
        %v1956 = vsel %vm366, %v1929, 0
        %v1959 = vsel %vm366, %v1930, 0
        %v1962 = vsel %vm366, %v1931, 0
        %v1965 = vsel %vm366, %v1932, 0
        %v1968 = vsel %vm366, %v1933, 0
        %v1971 = vsel %vm366, %v1934, 0
        %v1974 = vsel %vm366, %v1935, 0
        %v1977 = vsel %vm366, %v1936, 0
        %v1980 = vsel %vm366, %v1937, 0
        %v1983 = vsel %vm366, %v1938, 0
        %v1986 = vsel %vm366, %v1939, 0
        %v1989 = vsel %vm415, %v1859, 0
        %1991 = vmatpush.bf16.msra.mxu0 0
        %1992 = vmatpush.bf16.msra.mxu0 0
        %1993 = vmatpush.bf16.msra.mxu0 0
        %1994 = vmatpush.bf16.msra.mxu0 0
        %1995 = vmatpush.bf16.msra.mxu0 0
        %1996 = vmatpush.bf16.msra.mxu0 0
        %1997 = vmatpush.bf16.msra.mxu0 0
        %1998 = vmatpush.bf16.msra.mxu0 %v1989
        %1999 = vmatmul.bf16.gmra.mxu0 %v1941
        %v2000 = vpop.f32.mrf.mxu0
        %v2001 = vadd.f32 0.0, %v2000
        %v2002 = vpop.f32.mrf.mxu0
        %v2003 = vadd.f32 0.0, %v2002
        %2004 = vmatmul.bf16.gmra.mxu0 %v1944
        %v2005 = vpop.f32.mrf.mxu0
        %v2006 = vadd.f32 0.0, %v2005
        %v2007 = vpop.f32.mrf.mxu0
        %v2008 = vadd.f32 0.0, %v2007
        %2009 = vmatmul.bf16.gmra.mxu0 %v1947
        %v2010 = vpop.f32.mrf.mxu0
        %v2011 = vadd.f32 0.0, %v2010
        %v2012 = vpop.f32.mrf.mxu0
        %v2013 = vadd.f32 0.0, %v2012
        %2014 = vmatmul.bf16.gmra.mxu0 %v1950
        %v2015 = vpop.f32.mrf.mxu0
        %v2016 = vadd.f32 0.0, %v2015
        %v2017 = vpop.f32.mrf.mxu0
        %v2018 = vadd.f32 0.0, %v2017
        %2019 = vmatmul.bf16.gmra.mxu0 %v1953
        %v2020 = vpop.f32.mrf.mxu0
        %v2021 = vadd.f32 0.0, %v2020
        %v2022 = vpop.f32.mrf.mxu0
        %v2023 = vadd.f32 0.0, %v2022
        %2024 = vmatmul.bf16.gmra.mxu0 %v1956
        %v2025 = vpop.f32.mrf.mxu0
        %v2026 = vadd.f32 0.0, %v2025
        %v2027 = vpop.f32.mrf.mxu0
        %v2028 = vadd.f32 0.0, %v2027
        %2029 = vmatmul.bf16.gmra.mxu0 %v1959
        %v2030 = vpop.f32.mrf.mxu0
        %v2031 = vadd.f32 0.0, %v2030
        %v2032 = vpop.f32.mrf.mxu0
        %v2033 = vadd.f32 0.0, %v2032
        %2034 = vmatmul.bf16.gmra.mxu0 %v1962
        %v2035 = vpop.f32.mrf.mxu0
        %v2036 = vadd.f32 0.0, %v2035
        %v2037 = vpop.f32.mrf.mxu0
        %v2038 = vadd.f32 0.0, %v2037
        %2039 = vmatmul.bf16.gmra.mxu0 %v1965
        %v2040 = vpop.f32.mrf.mxu0
        %v2041 = vadd.f32 0.0, %v2040
        %v2042 = vpop.f32.mrf.mxu0
        %v2043 = vadd.f32 0.0, %v2042
        %2044 = vmatmul.bf16.gmra.mxu0 %v1968
        %v2045 = vpop.f32.mrf.mxu0
        %v2046 = vadd.f32 0.0, %v2045
        %v2047 = vpop.f32.mrf.mxu0
        %v2048 = vadd.f32 0.0, %v2047
        %2049 = vmatmul.bf16.gmra.mxu0 %v1971
        %v2050 = vpop.f32.mrf.mxu0
        %v2051 = vadd.f32 0.0, %v2050
        %v2052 = vpop.f32.mrf.mxu0
        %v2053 = vadd.f32 0.0, %v2052
        %2054 = vmatmul.bf16.gmra.mxu0 %v1974
        %v2055 = vpop.f32.mrf.mxu0
        %v2056 = vadd.f32 0.0, %v2055
        %v2057 = vpop.f32.mrf.mxu0
        %v2058 = vadd.f32 0.0, %v2057
        %2059 = vmatmul.bf16.gmra.mxu0 %v1977
        %v2060 = vpop.f32.mrf.mxu0
        %v2061 = vadd.f32 0.0, %v2060
        %v2062 = vpop.f32.mrf.mxu0
        %v2063 = vadd.f32 0.0, %v2062
        %2064 = vmatmul.bf16.gmra.mxu0 %v1980
        %v2065 = vpop.f32.mrf.mxu0
        %v2066 = vadd.f32 0.0, %v2065
        %v2067 = vpop.f32.mrf.mxu0
        %v2068 = vadd.f32 0.0, %v2067
        %2069 = vmatmul.bf16.gmra.mxu0 %v1983
        %v2070 = vpop.f32.mrf.mxu0
        %v2071 = vadd.f32 0.0, %v2070
        %v2072 = vpop.f32.mrf.mxu0
        %v2073 = vadd.f32 0.0, %v2072
        %2074 = vmatmul.bf16.gmra.mxu0 %v1986
        %v2075 = vpop.f32.mrf.mxu0
        %v2076 = vadd.f32 0.0, %v2075
        %v2077 = vpop.f32.mrf.mxu0
        %v2078 = vadd.f32 0.0, %v2077
        %2079 = vdwg.mxu0
        %v2080 = vadd.f32 %v1826, %v2001
        %v2081 = vadd.f32 %v1827, %v2003
        %v2082 = vadd.f32 %v1828, %v2006
        %v2083 = vadd.f32 %v1829, %v2008
        %v2084 = vadd.f32 %v1830, %v2011
        %v2085 = vadd.f32 %v1831, %v2013
        %v2086 = vadd.f32 %v1832, %v2016
        %v2087 = vadd.f32 %v1833, %v2018
        %v2088 = vadd.f32 %v1834, %v2021
        %v2089 = vadd.f32 %v1835, %v2023
        %v2090 = vadd.f32 %v1836, %v2026
        %v2091 = vadd.f32 %v1837, %v2028
        %v2092 = vadd.f32 %v1838, %v2031
        %v2093 = vadd.f32 %v1839, %v2033
        %v2094 = vadd.f32 %v1840, %v2036
        %v2095 = vadd.f32 %v1841, %v2038
        %v2096 = vadd.f32 %v1842, %v2041
        %v2097 = vadd.f32 %v1843, %v2043
        %v2098 = vadd.f32 %v1844, %v2046
        %v2099 = vadd.f32 %v1845, %v2048
        %v2100 = vadd.f32 %v1846, %v2051
        %v2101 = vadd.f32 %v1847, %v2053
        %v2102 = vadd.f32 %v1848, %v2056
        %v2103 = vadd.f32 %v1849, %v2058
        %v2104 = vadd.f32 %v1850, %v2061
        %v2105 = vadd.f32 %v1851, %v2063
        %v2106 = vadd.f32 %v1852, %v2066
        %v2107 = vadd.f32 %v1853, %v2068
        %v2108 = vadd.f32 %v1854, %v2071
        %v2109 = vadd.f32 %v1855, %v2073
        %v2110 = vadd.f32 %v1856, %v2076
        %v2111 = vadd.f32 %v1857, %v2078
        %2112 = vst [vmem:[#allocation2] sm:$0xff] %v2080
        %2113 = vst [vmem:[#allocation2 + $0x8] sm:$0xff] %v2081
        %2114 = vst [vmem:[#allocation2 + $0x10] sm:$0xff] %v2082
        %2115 = vst [vmem:[#allocation2 + $0x18] sm:$0xff] %v2083
        %2116 = vst [vmem:[#allocation2 + $0x20] sm:$0xff] %v2084
        %2117 = vst [vmem:[#allocation2 + $0x28] sm:$0xff] %v2085
        %2118 = vst [vmem:[#allocation2 + $0x30] sm:$0xff] %v2086
        %2119 = vst [vmem:[#allocation2 + $0x38] sm:$0xff] %v2087
        %2120 = vst [vmem:[#allocation2 + $0x40] sm:$0xff] %v2088
        %2121 = vst [vmem:[#allocation2 + $0x48] sm:$0xff] %v2089
        %2122 = vst [vmem:[#allocation2 + $0x50] sm:$0xff] %v2090
        %2123 = vst [vmem:[#allocation2 + $0x58] sm:$0xff] %v2091
        %2124 = vst [vmem:[#allocation2 + $0x60] sm:$0xff] %v2092
        %2125 = vst [vmem:[#allocation2 + $0x68] sm:$0xff] %v2093
        %2126 = vst [vmem:[#allocation2 + $0x70] sm:$0xff] %v2094
        %2127 = vst [vmem:[#allocation2 + $0x78] sm:$0xff] %v2095
        %2128 = vst [vmem:[#allocation2 + $0x80] sm:$0xff] %v2096
        %2129 = vst [vmem:[#allocation2 + $0x88] sm:$0xff] %v2097
        %2130 = vst [vmem:[#allocation2 + $0x90] sm:$0xff] %v2098
        %2131 = vst [vmem:[#allocation2 + $0x98] sm:$0xff] %v2099
        %2132 = vst [vmem:[#allocation2 + $0xa0] sm:$0xff] %v2100
        %2133 = vst [vmem:[#allocation2 + $0xa8] sm:$0xff] %v2101
        %2134 = vst [vmem:[#allocation2 + $0xb0] sm:$0xff] %v2102
        %2135 = vst [vmem:[#allocation2 + $0xb8] sm:$0xff] %v2103
        %2136 = vst [vmem:[#allocation2 + $0xc0] sm:$0xff] %v2104
        %2137 = vst [vmem:[#allocation2 + $0xc8] sm:$0xff] %v2105
        %2138 = vst [vmem:[#allocation2 + $0xd0] sm:$0xff] %v2106
        %2139 = vst [vmem:[#allocation2 + $0xd8] sm:$0xff] %v2107
        %2140 = vst [vmem:[#allocation2 + $0xe0] sm:$0xff] %v2108
        %2141 = vst [vmem:[#allocation2 + $0xe8] sm:$0xff] %v2109
        %2142 = vst [vmem:[#allocation2 + $0xf0] sm:$0xff] %v2110
        %2143 = vst [vmem:[#allocation2 + $0xf8] sm:$0xff] %v2111
        %v2144 = vld [vmem:[%s1793] sm:$0xf]
        %v2145 = vld [vmem:[%s1793 + $0x4] sm:$0xf]
        %v2146 = vld [vmem:[%s1793 + $0x8] sm:$0x1]
        %v2147 = vld [vmem:[%s1793 + $0xc] sm:$0xf]
        %v2148 = vld [vmem:[%s1793 + $0x10] sm:$0xf]
        %v2149 = vld [vmem:[%s1793 + $0x14] sm:$0x1]
        %v2150 = vld [vmem:[%s1793 + $0x18] sm:$0xf]
        %v2151 = vld [vmem:[%s1793 + $0x1c] sm:$0xf]
        %v2152 = vld [vmem:[%s1793 + $0x20] sm:$0x1]
        %v2153 = vld [vmem:[%s1793 + $0x24] sm:$0xf]
        %v2154 = vld [vmem:[%s1793 + $0x28] sm:$0xf]
        %v2155 = vld [vmem:[%s1793 + $0x2c] sm:$0x1]
        %v2156 = vld [vmem:[%s1793 + $0x30] sm:$0xf]
        %v2157 = vld [vmem:[%s1793 + $0x34] sm:$0xf]
        %v2158 = vld [vmem:[%s1793 + $0x38] sm:$0x1]
        %v2159 = vld [vmem:[%s1793 + $0x3c] sm:$0xf]
        %v2160 = vld [vmem:[%s1793 + $0x40] sm:$0xf]
        %v2161 = vld [vmem:[%s1793 + $0x44] sm:$0x1]
        %v2162 = vld [vmem:[%s1793 + $0x48] sm:$0xf]
        %v2163 = vld [vmem:[%s1793 + $0x4c] sm:$0xf]
        %v2164 = vld [vmem:[%s1793 + $0x50] sm:$0x1]
        %v2165 = vld [vmem:[%s1793 + $0x54] sm:$0xf]
        %v2166 = vld [vmem:[%s1793 + $0x58] sm:$0xf]
        %v2167 = vld [vmem:[%s1793 + $0x5c] sm:$0x1]
        %v2168 = vld [vmem:[%s1793 + $0x60] sm:$0xf]
        %v2169 = vld [vmem:[%s1793 + $0x64] sm:$0xf]
        %v2170 = vld [vmem:[%s1793 + $0x68] sm:$0x1]
        %v2171 = vld [vmem:[%s1793 + $0x6c] sm:$0xf]
        %v2172 = vld [vmem:[%s1793 + $0x70] sm:$0xf]
        %v2173 = vld [vmem:[%s1793 + $0x74] sm:$0x1]
        %v2174 = vld [vmem:[%s1793 + $0x78] sm:$0xf]
        %v2175 = vld [vmem:[%s1793 + $0x7c] sm:$0xf]
        %v2176 = vld [vmem:[%s1793 + $0x80] sm:$0x1]
        %v2177 = vld [vmem:[%s1793 + $0x84] sm:$0xf]
        %v2178 = vld [vmem:[%s1793 + $0x88] sm:$0xf]
        %v2179 = vld [vmem:[%s1793 + $0x8c] sm:$0x1]
        %v2180 = vld [vmem:[%s1793 + $0x90] sm:$0xf]
        %v2181 = vld [vmem:[%s1793 + $0x94] sm:$0xf]
        %v2182 = vld [vmem:[%s1793 + $0x98] sm:$0x1]
        %v2183 = vld [vmem:[%s1793 + $0x9c] sm:$0xf]
        %v2184 = vld [vmem:[%s1793 + $0xa0] sm:$0xf]
        %v2185 = vld [vmem:[%s1793 + $0xa4] sm:$0x1]
        %v2186 = vld [vmem:[%s1793 + $0xa8] sm:$0xf]
        %v2187 = vld [vmem:[%s1793 + $0xac] sm:$0xf]
        %v2188 = vld [vmem:[%s1793 + $0xb0] sm:$0x1]
        %v2189 = vld [vmem:[%s1793 + $0xb4] sm:$0xf]
        %v2190 = vld [vmem:[%s1793 + $0xb8] sm:$0xf]
        %v2191 = vld [vmem:[%s1793 + $0xbc] sm:$0x1]
        %v2192 = vld [vmem:[#allocation2] sm:$0xff]
        %v2193 = vld [vmem:[#allocation2 + $0x8] sm:$0xff]
        %v2194 = vld [vmem:[#allocation2 + $0x10] sm:$0xff]
        %v2195 = vld [vmem:[#allocation2 + $0x18] sm:$0xff]
        %v2196 = vld [vmem:[#allocation2 + $0x20] sm:$0xff]
        %v2197 = vld [vmem:[#allocation2 + $0x28] sm:$0xff]
        %v2198 = vld [vmem:[#allocation2 + $0x30] sm:$0xff]
        %v2199 = vld [vmem:[#allocation2 + $0x38] sm:$0xff]
        %v2200 = vld [vmem:[#allocation2 + $0x40] sm:$0xff]
        %v2201 = vld [vmem:[#allocation2 + $0x48] sm:$0xff]
        %v2202 = vld [vmem:[#allocation2 + $0x50] sm:$0xff]
        %v2203 = vld [vmem:[#allocation2 + $0x58] sm:$0xff]
        %v2204 = vld [vmem:[#allocation2 + $0x60] sm:$0xff]
        %v2205 = vld [vmem:[#allocation2 + $0x68] sm:$0xff]
        %v2206 = vld [vmem:[#allocation2 + $0x70] sm:$0xff]
        %v2207 = vld [vmem:[#allocation2 + $0x78] sm:$0xff]
        %v2208 = vld [vmem:[#allocation2 + $0x80] sm:$0xff]
        %v2209 = vld [vmem:[#allocation2 + $0x88] sm:$0xff]
        %v2210 = vld [vmem:[#allocation2 + $0x90] sm:$0xff]
        %v2211 = vld [vmem:[#allocation2 + $0x98] sm:$0xff]
        %v2212 = vld [vmem:[#allocation2 + $0xa0] sm:$0xff]
        %v2213 = vld [vmem:[#allocation2 + $0xa8] sm:$0xff]
        %v2214 = vld [vmem:[#allocation2 + $0xb0] sm:$0xff]
        %v2215 = vld [vmem:[#allocation2 + $0xb8] sm:$0xff]
        %v2216 = vld [vmem:[#allocation2 + $0xc0] sm:$0xff]
        %v2217 = vld [vmem:[#allocation2 + $0xc8] sm:$0xff]
        %v2218 = vld [vmem:[#allocation2 + $0xd0] sm:$0xff]
        %v2219 = vld [vmem:[#allocation2 + $0xd8] sm:$0xff]
        %v2220 = vld [vmem:[#allocation2 + $0xe0] sm:$0xff]
        %v2221 = vld [vmem:[#allocation2 + $0xe8] sm:$0xff]
        %v2222 = vld [vmem:[#allocation2 + $0xf0] sm:$0xff]
        %v2223 = vld [vmem:[#allocation2 + $0xf8] sm:$0xff]
        %v2225 = vshrl.u32 %v2144, 16
        %v2227 = vrot.slane %v2225, 4
        %v2228 = vshll.u32 %v2144, 16
        %v2230 = vrot.slane %v2228, 5
        %v2231 = vor.u32 %v2227, %v2230
        %v2232 = vrot.slane %v2231, 4
        %v2234 = vshll.u32 %v2145, 16
        %v2236 = vrot.slane %v2234, 5
        %v2237 = vsel %vm654, %v2232, %v2236
        %v2238 = vshrl.u32 %v2145, 16
        %v2240 = vrot.slane %v2238, 4
        %v2241 = vor.u32 %v2240, %v2236
        %v2242 = vrot.slane %v2241, 4
        %v2244 = vshll.u32 %v2146, 16
        %v2246 = vrot.slane %v2244, 5
        %v2247 = vsel %vm654, %v2242, %v2246
        %v2249 = vshrl.u32 %v2147, 16
        %v2251 = vrot.slane %v2249, 4
        %v2252 = vshll.u32 %v2147, 16
        %v2254 = vrot.slane %v2252, 5
        %v2255 = vor.u32 %v2251, %v2254
        %v2256 = vrot.slane %v2255, 4
        %v2258 = vshll.u32 %v2148, 16
        %v2260 = vrot.slane %v2258, 5
        %v2261 = vsel %vm654, %v2256, %v2260
        %v2262 = vshrl.u32 %v2148, 16
        %v2264 = vrot.slane %v2262, 4
        %v2265 = vor.u32 %v2264, %v2260
        %v2266 = vrot.slane %v2265, 4
        %v2268 = vshll.u32 %v2149, 16
        %v2270 = vrot.slane %v2268, 5
        %v2271 = vsel %vm654, %v2266, %v2270
        %v2273 = vshrl.u32 %v2150, 16
        %v2275 = vrot.slane %v2273, 4
        %v2276 = vshll.u32 %v2150, 16
        %v2278 = vrot.slane %v2276, 5
        %v2279 = vor.u32 %v2275, %v2278
        %v2280 = vrot.slane %v2279, 4
        %v2282 = vshll.u32 %v2151, 16
        %v2284 = vrot.slane %v2282, 5
        %v2285 = vsel %vm654, %v2280, %v2284
        %v2286 = vshrl.u32 %v2151, 16
        %v2288 = vrot.slane %v2286, 4
        %v2289 = vor.u32 %v2288, %v2284
        %v2290 = vrot.slane %v2289, 4
        %v2292 = vshll.u32 %v2152, 16
        %v2294 = vrot.slane %v2292, 5
        %v2295 = vsel %vm654, %v2290, %v2294
        %v2297 = vshrl.u32 %v2153, 16
        %v2299 = vrot.slane %v2297, 4
        %v2300 = vshll.u32 %v2153, 16
        %v2302 = vrot.slane %v2300, 5
        %v2303 = vor.u32 %v2299, %v2302
        %v2304 = vrot.slane %v2303, 4
        %v2306 = vshll.u32 %v2154, 16
        %v2308 = vrot.slane %v2306, 5
        %v2309 = vsel %vm654, %v2304, %v2308
        %v2310 = vshrl.u32 %v2154, 16
        %v2312 = vrot.slane %v2310, 4
        %v2313 = vor.u32 %v2312, %v2308
        %v2314 = vrot.slane %v2313, 4
        %v2316 = vshll.u32 %v2155, 16
        %v2318 = vrot.slane %v2316, 5
        %v2319 = vsel %vm654, %v2314, %v2318
        %v2321 = vshrl.u32 %v2156, 16
        %v2323 = vrot.slane %v2321, 4
        %v2324 = vshll.u32 %v2156, 16
        %v2326 = vrot.slane %v2324, 5
        %v2327 = vor.u32 %v2323, %v2326
        %v2328 = vrot.slane %v2327, 4
        %v2330 = vshll.u32 %v2157, 16
        %v2332 = vrot.slane %v2330, 5
        %v2333 = vsel %vm654, %v2328, %v2332
        %v2334 = vshrl.u32 %v2157, 16
        %v2336 = vrot.slane %v2334, 4
        %v2337 = vor.u32 %v2336, %v2332
        %v2338 = vrot.slane %v2337, 4
        %v2340 = vshll.u32 %v2158, 16
        %v2342 = vrot.slane %v2340, 5
        %v2343 = vsel %vm654, %v2338, %v2342
        %v2345 = vshrl.u32 %v2159, 16
        %v2347 = vrot.slane %v2345, 4
        %v2348 = vshll.u32 %v2159, 16
        %v2350 = vrot.slane %v2348, 5
        %v2351 = vor.u32 %v2347, %v2350
        %v2352 = vrot.slane %v2351, 4
        %v2354 = vshll.u32 %v2160, 16
        %v2356 = vrot.slane %v2354, 5
        %v2357 = vsel %vm654, %v2352, %v2356
        %v2358 = vshrl.u32 %v2160, 16
        %v2360 = vrot.slane %v2358, 4
        %v2361 = vor.u32 %v2360, %v2356
        %v2362 = vrot.slane %v2361, 4
        %v2364 = vshll.u32 %v2161, 16
        %v2366 = vrot.slane %v2364, 5
        %v2367 = vsel %vm654, %v2362, %v2366
        %v2369 = vshrl.u32 %v2162, 16
        %v2371 = vrot.slane %v2369, 4
        %v2372 = vshll.u32 %v2162, 16
        %v2374 = vrot.slane %v2372, 5
        %v2375 = vor.u32 %v2371, %v2374
        %v2376 = vrot.slane %v2375, 4
        %v2378 = vshll.u32 %v2163, 16
        %v2380 = vrot.slane %v2378, 5
        %v2381 = vsel %vm654, %v2376, %v2380
        %v2382 = vshrl.u32 %v2163, 16
        %v2384 = vrot.slane %v2382, 4
        %v2385 = vor.u32 %v2384, %v2380
        %v2386 = vrot.slane %v2385, 4
        %v2388 = vshll.u32 %v2164, 16
        %v2390 = vrot.slane %v2388, 5
        %v2391 = vsel %vm654, %v2386, %v2390
        %v2393 = vshrl.u32 %v2165, 16
        %v2395 = vrot.slane %v2393, 4
        %v2396 = vshll.u32 %v2165, 16
        %v2398 = vrot.slane %v2396, 5
        %v2399 = vor.u32 %v2395, %v2398
        %v2400 = vrot.slane %v2399, 4
        %v2402 = vshll.u32 %v2166, 16
        %v2404 = vrot.slane %v2402, 5
        %v2405 = vsel %vm654, %v2400, %v2404
        %v2406 = vshrl.u32 %v2166, 16
        %v2408 = vrot.slane %v2406, 4
        %v2409 = vor.u32 %v2408, %v2404
        %v2410 = vrot.slane %v2409, 4
        %v2412 = vshll.u32 %v2167, 16
        %v2414 = vrot.slane %v2412, 5
        %v2415 = vsel %vm654, %v2410, %v2414
        %v2417 = vshrl.u32 %v2168, 16
        %v2419 = vrot.slane %v2417, 4
        %v2420 = vshll.u32 %v2168, 16
        %v2422 = vrot.slane %v2420, 5
        %v2423 = vor.u32 %v2419, %v2422
        %v2424 = vrot.slane %v2423, 4
        %v2426 = vshll.u32 %v2169, 16
        %v2428 = vrot.slane %v2426, 5
        %v2429 = vsel %vm654, %v2424, %v2428
        %v2430 = vshrl.u32 %v2169, 16
        %v2432 = vrot.slane %v2430, 4
        %v2433 = vor.u32 %v2432, %v2428
        %v2434 = vrot.slane %v2433, 4
        %v2436 = vshll.u32 %v2170, 16
        %v2438 = vrot.slane %v2436, 5
        %v2439 = vsel %vm654, %v2434, %v2438
        %v2441 = vshrl.u32 %v2171, 16
        %v2443 = vrot.slane %v2441, 4
        %v2444 = vshll.u32 %v2171, 16
        %v2446 = vrot.slane %v2444, 5
        %v2447 = vor.u32 %v2443, %v2446
        %v2448 = vrot.slane %v2447, 4
        %v2450 = vshll.u32 %v2172, 16
        %v2452 = vrot.slane %v2450, 5
        %v2453 = vsel %vm654, %v2448, %v2452
        %v2454 = vshrl.u32 %v2172, 16
        %v2456 = vrot.slane %v2454, 4
        %v2457 = vor.u32 %v2456, %v2452
        %v2458 = vrot.slane %v2457, 4
        %v2460 = vshll.u32 %v2173, 16
        %v2462 = vrot.slane %v2460, 5
        %v2463 = vsel %vm654, %v2458, %v2462
        %v2465 = vshrl.u32 %v2174, 16
        %v2467 = vrot.slane %v2465, 4
        %v2468 = vshll.u32 %v2174, 16
        %v2470 = vrot.slane %v2468, 5
        %v2471 = vor.u32 %v2467, %v2470
        %v2472 = vrot.slane %v2471, 4
        %v2474 = vshll.u32 %v2175, 16
        %v2476 = vrot.slane %v2474, 5
        %v2477 = vsel %vm654, %v2472, %v2476
        %v2478 = vshrl.u32 %v2175, 16
        %v2480 = vrot.slane %v2478, 4
        %v2481 = vor.u32 %v2480, %v2476
        %v2482 = vrot.slane %v2481, 4
        %v2484 = vshll.u32 %v2176, 16
        %v2486 = vrot.slane %v2484, 5
        %v2487 = vsel %vm654, %v2482, %v2486
        %v2489 = vshrl.u32 %v2177, 16
        %v2491 = vrot.slane %v2489, 4
        %v2492 = vshll.u32 %v2177, 16
        %v2494 = vrot.slane %v2492, 5
        %v2495 = vor.u32 %v2491, %v2494
        %v2496 = vrot.slane %v2495, 4
        %v2498 = vshll.u32 %v2178, 16
        %v2500 = vrot.slane %v2498, 5
        %v2501 = vsel %vm654, %v2496, %v2500
        %v2502 = vshrl.u32 %v2178, 16
        %v2504 = vrot.slane %v2502, 4
        %v2505 = vor.u32 %v2504, %v2500
        %v2506 = vrot.slane %v2505, 4
        %v2508 = vshll.u32 %v2179, 16
        %v2510 = vrot.slane %v2508, 5
        %v2511 = vsel %vm654, %v2506, %v2510
        %v2513 = vshrl.u32 %v2180, 16
        %v2515 = vrot.slane %v2513, 4
        %v2516 = vshll.u32 %v2180, 16
        %v2518 = vrot.slane %v2516, 5
        %v2519 = vor.u32 %v2515, %v2518
        %v2520 = vrot.slane %v2519, 4
        %v2522 = vshll.u32 %v2181, 16
        %v2524 = vrot.slane %v2522, 5
        %v2525 = vsel %vm654, %v2520, %v2524
        %v2526 = vshrl.u32 %v2181, 16
        %v2528 = vrot.slane %v2526, 4
        %v2529 = vor.u32 %v2528, %v2524
        %v2530 = vrot.slane %v2529, 4
        %v2532 = vshll.u32 %v2182, 16
        %v2534 = vrot.slane %v2532, 5
        %v2535 = vsel %vm654, %v2530, %v2534
        %v2537 = vshrl.u32 %v2183, 16
        %v2539 = vrot.slane %v2537, 4
        %v2540 = vshll.u32 %v2183, 16
        %v2542 = vrot.slane %v2540, 5
        %v2543 = vor.u32 %v2539, %v2542
        %v2544 = vrot.slane %v2543, 4
        %v2546 = vshll.u32 %v2184, 16
        %v2548 = vrot.slane %v2546, 5
        %v2549 = vsel %vm654, %v2544, %v2548
        %v2550 = vshrl.u32 %v2184, 16
        %v2552 = vrot.slane %v2550, 4
        %v2553 = vor.u32 %v2552, %v2548
        %v2554 = vrot.slane %v2553, 4
        %v2556 = vshll.u32 %v2185, 16
        %v2558 = vrot.slane %v2556, 5
        %v2559 = vsel %vm654, %v2554, %v2558
        %v2561 = vshrl.u32 %v2186, 16
        %v2563 = vrot.slane %v2561, 4
        %v2564 = vshll.u32 %v2186, 16
        %v2566 = vrot.slane %v2564, 5
        %v2567 = vor.u32 %v2563, %v2566
        %v2568 = vrot.slane %v2567, 4
        %v2570 = vshll.u32 %v2187, 16
        %v2572 = vrot.slane %v2570, 5
        %v2573 = vsel %vm654, %v2568, %v2572
        %v2574 = vshrl.u32 %v2187, 16
        %v2576 = vrot.slane %v2574, 4
        %v2577 = vor.u32 %v2576, %v2572
        %v2578 = vrot.slane %v2577, 4
        %v2580 = vshll.u32 %v2188, 16
        %v2582 = vrot.slane %v2580, 5
        %v2583 = vsel %vm654, %v2578, %v2582
        %v2585 = vshrl.u32 %v2189, 16
        %v2587 = vrot.slane %v2585, 4
        %v2588 = vshll.u32 %v2189, 16
        %v2590 = vrot.slane %v2588, 5
        %v2591 = vor.u32 %v2587, %v2590
        %v2592 = vrot.slane %v2591, 4
        %v2594 = vshll.u32 %v2190, 16
        %v2596 = vrot.slane %v2594, 5
        %v2597 = vsel %vm654, %v2592, %v2596
        %v2598 = vshrl.u32 %v2190, 16
        %v2600 = vrot.slane %v2598, 4
        %v2601 = vor.u32 %v2600, %v2596
        %v2602 = vrot.slane %v2601, 4
        %v2604 = vshll.u32 %v2191, 16
        %v2606 = vrot.slane %v2604, 5
        %v2607 = vsel %vm654, %v2602, %v2606
        %s2608 = scalar_lea.vmem %s1, 8
        %v2609 = vld [vmem:[%s2608] sm:$0x3]
        %v2610 = vunpack.c.l.b16 %v2237
        %v2611 = vunpack.c.l.b16 %v2247
        %v2612 = vunpack.c.l.b16 %v2261
        %v2613 = vunpack.c.l.b16 %v2271
        %v2614 = vunpack.c.l.b16 %v2285
        %v2615 = vunpack.c.l.b16 %v2295
        %v2616 = vunpack.c.l.b16 %v2309
        %v2617 = vunpack.c.l.b16 %v2319
        %v2618 = vunpack.c.l.b16 %v2333
        %v2619 = vunpack.c.l.b16 %v2343
        %v2620 = vunpack.c.l.b16 %v2357
        %v2621 = vunpack.c.l.b16 %v2367
        %v2622 = vunpack.c.l.b16 %v2381
        %v2623 = vunpack.c.l.b16 %v2391
        %v2624 = vunpack.c.l.b16 %v2405
        %v2625 = vunpack.c.l.b16 %v2415
        %v2626 = vunpack.c.l.b16 %v2429
        %v2627 = vunpack.c.l.b16 %v2439
        %v2628 = vunpack.c.l.b16 %v2453
        %v2629 = vunpack.c.l.b16 %v2463
        %v2630 = vunpack.c.l.b16 %v2477
        %v2631 = vunpack.c.l.b16 %v2487
        %v2632 = vunpack.c.l.b16 %v2501
        %v2633 = vunpack.c.l.b16 %v2511
        %v2634 = vunpack.c.l.b16 %v2525
        %v2635 = vunpack.c.l.b16 %v2535
        %v2636 = vunpack.c.l.b16 %v2549
        %v2637 = vunpack.c.l.b16 %v2559
        %v2638 = vunpack.c.l.b16 %v2573
        %v2639 = vunpack.c.l.b16 %v2583
        %v2640 = vunpack.c.l.b16 %v2597
        %v2641 = vunpack.c.l.b16 %v2607
        %v2642 = vpack.c.b16 %v2611, %v2610
        %v2643 = vpack.c.b16 %v2613, %v2612
        %v2644 = vpack.c.b16 %v2615, %v2614
        %v2645 = vpack.c.b16 %v2617, %v2616
        %v2646 = vpack.c.b16 %v2619, %v2618
        %v2647 = vpack.c.b16 %v2621, %v2620
        %v2648 = vpack.c.b16 %v2623, %v2622
        %v2649 = vpack.c.b16 %v2625, %v2624
        %v2650 = vpack.c.b16 %v2627, %v2626
        %v2651 = vpack.c.b16 %v2629, %v2628
        %v2652 = vpack.c.b16 %v2631, %v2630
        %v2653 = vpack.c.b16 %v2633, %v2632
        %v2654 = vpack.c.b16 %v2635, %v2634
        %v2655 = vpack.c.b16 %v2637, %v2636
        %v2656 = vpack.c.b16 %v2639, %v2638
        %v2657 = vpack.c.b16 %v2641, %v2640
        %v2659 = vsel %vm366, %v2642, 0
        %v2662 = vsel %vm366, %v2643, 0
        %v2665 = vsel %vm366, %v2644, 0
        %v2668 = vsel %vm366, %v2645, 0
        %v2671 = vsel %vm366, %v2646, 0
        %v2674 = vsel %vm366, %v2647, 0
        %v2677 = vsel %vm366, %v2648, 0
        %v2680 = vsel %vm366, %v2649, 0
        %v2683 = vsel %vm366, %v2650, 0
        %v2686 = vsel %vm366, %v2651, 0
        %v2689 = vsel %vm366, %v2652, 0
        %v2692 = vsel %vm366, %v2653, 0
        %v2695 = vsel %vm366, %v2654, 0
        %v2698 = vsel %vm366, %v2655, 0
        %v2701 = vsel %vm366, %v2656, 0
        %v2704 = vsel %vm366, %v2657, 0
        %v2707 = vsel %vm415, %v2609, 0
        %2709 = vmatpush.bf16.msra.mxu0 0
        %2710 = vmatpush.bf16.msra.mxu0 0
        %2711 = vmatpush.bf16.msra.mxu0 0
        %2712 = vmatpush.bf16.msra.mxu0 0
        %2713 = vmatpush.bf16.msra.mxu0 0
        %2714 = vmatpush.bf16.msra.mxu0 0
        %2715 = vmatpush.bf16.msra.mxu0 0
        %2716 = vmatpush.bf16.msra.mxu0 %v2707
        %2717 = vmatmul.bf16.gmra.mxu0 %v2659
        %v2718 = vpop.f32.mrf.mxu0
        %v2719 = vadd.f32 0.0, %v2718
        %v2720 = vpop.f32.mrf.mxu0
        %v2721 = vadd.f32 0.0, %v2720
        %2722 = vmatmul.bf16.gmra.mxu0 %v2662
        %v2723 = vpop.f32.mrf.mxu0
        %v2724 = vadd.f32 0.0, %v2723
        %v2725 = vpop.f32.mrf.mxu0
        %v2726 = vadd.f32 0.0, %v2725
        %2727 = vmatmul.bf16.gmra.mxu0 %v2665
        %v2728 = vpop.f32.mrf.mxu0
        %v2729 = vadd.f32 0.0, %v2728
        %v2730 = vpop.f32.mrf.mxu0
        %v2731 = vadd.f32 0.0, %v2730
        %2732 = vmatmul.bf16.gmra.mxu0 %v2668
        %v2733 = vpop.f32.mrf.mxu0
        %v2734 = vadd.f32 0.0, %v2733
        %v2735 = vpop.f32.mrf.mxu0
        %v2736 = vadd.f32 0.0, %v2735
        %2737 = vmatmul.bf16.gmra.mxu0 %v2671
        %v2738 = vpop.f32.mrf.mxu0
        %v2739 = vadd.f32 0.0, %v2738
        %v2740 = vpop.f32.mrf.mxu0
        %v2741 = vadd.f32 0.0, %v2740
        %2742 = vmatmul.bf16.gmra.mxu0 %v2674
        %v2743 = vpop.f32.mrf.mxu0
        %v2744 = vadd.f32 0.0, %v2743
        %v2745 = vpop.f32.mrf.mxu0
        %v2746 = vadd.f32 0.0, %v2745
        %2747 = vmatmul.bf16.gmra.mxu0 %v2677
        %v2748 = vpop.f32.mrf.mxu0
        %v2749 = vadd.f32 0.0, %v2748
        %v2750 = vpop.f32.mrf.mxu0
        %v2751 = vadd.f32 0.0, %v2750
        %2752 = vmatmul.bf16.gmra.mxu0 %v2680
        %v2753 = vpop.f32.mrf.mxu0
        %v2754 = vadd.f32 0.0, %v2753
        %v2755 = vpop.f32.mrf.mxu0
        %v2756 = vadd.f32 0.0, %v2755
        %2757 = vmatmul.bf16.gmra.mxu0 %v2683
        %v2758 = vpop.f32.mrf.mxu0
        %v2759 = vadd.f32 0.0, %v2758
        %v2760 = vpop.f32.mrf.mxu0
        %v2761 = vadd.f32 0.0, %v2760
        %2762 = vmatmul.bf16.gmra.mxu0 %v2686
        %v2763 = vpop.f32.mrf.mxu0
        %v2764 = vadd.f32 0.0, %v2763
        %v2765 = vpop.f32.mrf.mxu0
        %v2766 = vadd.f32 0.0, %v2765
        %2767 = vmatmul.bf16.gmra.mxu0 %v2689
        %v2768 = vpop.f32.mrf.mxu0
        %v2769 = vadd.f32 0.0, %v2768
        %v2770 = vpop.f32.mrf.mxu0
        %v2771 = vadd.f32 0.0, %v2770
        %2772 = vmatmul.bf16.gmra.mxu0 %v2692
        %v2773 = vpop.f32.mrf.mxu0
        %v2774 = vadd.f32 0.0, %v2773
        %v2775 = vpop.f32.mrf.mxu0
        %v2776 = vadd.f32 0.0, %v2775
        %2777 = vmatmul.bf16.gmra.mxu0 %v2695
        %v2778 = vpop.f32.mrf.mxu0
        %v2779 = vadd.f32 0.0, %v2778
        %v2780 = vpop.f32.mrf.mxu0
        %v2781 = vadd.f32 0.0, %v2780
        %2782 = vmatmul.bf16.gmra.mxu0 %v2698
        %v2783 = vpop.f32.mrf.mxu0
        %v2784 = vadd.f32 0.0, %v2783
        %v2785 = vpop.f32.mrf.mxu0
        %v2786 = vadd.f32 0.0, %v2785
        %2787 = vmatmul.bf16.gmra.mxu0 %v2701
        %v2788 = vpop.f32.mrf.mxu0
        %v2789 = vadd.f32 0.0, %v2788
        %v2790 = vpop.f32.mrf.mxu0
        %v2791 = vadd.f32 0.0, %v2790
        %2792 = vmatmul.bf16.gmra.mxu0 %v2704
        %v2793 = vpop.f32.mrf.mxu0
        %v2794 = vadd.f32 0.0, %v2793
        %v2795 = vpop.f32.mrf.mxu0
        %v2796 = vadd.f32 0.0, %v2795
        %2797 = vdwg.mxu0
        %v2798 = vadd.f32 %v2192, %v2719
        %v2799 = vadd.f32 %v2193, %v2721
        %v2800 = vadd.f32 %v2194, %v2724
        %v2801 = vadd.f32 %v2195, %v2726
        %v2802 = vadd.f32 %v2196, %v2729
        %v2803 = vadd.f32 %v2197, %v2731
        %v2804 = vadd.f32 %v2198, %v2734
        %v2805 = vadd.f32 %v2199, %v2736
        %v2806 = vadd.f32 %v2200, %v2739
        %v2807 = vadd.f32 %v2201, %v2741
        %v2808 = vadd.f32 %v2202, %v2744
        %v2809 = vadd.f32 %v2203, %v2746
        %v2810 = vadd.f32 %v2204, %v2749
        %v2811 = vadd.f32 %v2205, %v2751
        %v2812 = vadd.f32 %v2206, %v2754
        %v2813 = vadd.f32 %v2207, %v2756
        %v2814 = vadd.f32 %v2208, %v2759
        %v2815 = vadd.f32 %v2209, %v2761
        %v2816 = vadd.f32 %v2210, %v2764
        %v2817 = vadd.f32 %v2211, %v2766
        %v2818 = vadd.f32 %v2212, %v2769
        %v2819 = vadd.f32 %v2213, %v2771
        %v2820 = vadd.f32 %v2214, %v2774
        %v2821 = vadd.f32 %v2215, %v2776
        %v2822 = vadd.f32 %v2216, %v2779
        %v2823 = vadd.f32 %v2217, %v2781
        %v2824 = vadd.f32 %v2218, %v2784
        %v2825 = vadd.f32 %v2219, %v2786
        %v2826 = vadd.f32 %v2220, %v2789
        %v2827 = vadd.f32 %v2221, %v2791
        %v2828 = vadd.f32 %v2222, %v2794
        %v2829 = vadd.f32 %v2223, %v2796
        %2830 = vst [vmem:[#allocation2] sm:$0xff] %v2798
        %2831 = vst [vmem:[#allocation2 + $0x8] sm:$0xff] %v2799
        %2832 = vst [vmem:[#allocation2 + $0x10] sm:$0xff] %v2800
        %2833 = vst [vmem:[#allocation2 + $0x18] sm:$0xff] %v2801
        %2834 = vst [vmem:[#allocation2 + $0x20] sm:$0xff] %v2802
        %2835 = vst [vmem:[#allocation2 + $0x28] sm:$0xff] %v2803
        %2836 = vst [vmem:[#allocation2 + $0x30] sm:$0xff] %v2804
        %2837 = vst [vmem:[#allocation2 + $0x38] sm:$0xff] %v2805
        %2838 = vst [vmem:[#allocation2 + $0x40] sm:$0xff] %v2806
        %2839 = vst [vmem:[#allocation2 + $0x48] sm:$0xff] %v2807
        %2840 = vst [vmem:[#allocation2 + $0x50] sm:$0xff] %v2808
        %2841 = vst [vmem:[#allocation2 + $0x58] sm:$0xff] %v2809
        %2842 = vst [vmem:[#allocation2 + $0x60] sm:$0xff] %v2810
        %2843 = vst [vmem:[#allocation2 + $0x68] sm:$0xff] %v2811
        %2844 = vst [vmem:[#allocation2 + $0x70] sm:$0xff] %v2812
        %2845 = vst [vmem:[#allocation2 + $0x78] sm:$0xff] %v2813
        %2846 = vst [vmem:[#allocation2 + $0x80] sm:$0xff] %v2814
        %2847 = vst [vmem:[#allocation2 + $0x88] sm:$0xff] %v2815
        %2848 = vst [vmem:[#allocation2 + $0x90] sm:$0xff] %v2816
        %2849 = vst [vmem:[#allocation2 + $0x98] sm:$0xff] %v2817
        %2850 = vst [vmem:[#allocation2 + $0xa0] sm:$0xff] %v2818
        %2851 = vst [vmem:[#allocation2 + $0xa8] sm:$0xff] %v2819
        %2852 = vst [vmem:[#allocation2 + $0xb0] sm:$0xff] %v2820
        %2853 = vst [vmem:[#allocation2 + $0xb8] sm:$0xff] %v2821
        %2854 = vst [vmem:[#allocation2 + $0xc0] sm:$0xff] %v2822
        %2855 = vst [vmem:[#allocation2 + $0xc8] sm:$0xff] %v2823
        %2856 = vst [vmem:[#allocation2 + $0xd0] sm:$0xff] %v2824
        %2857 = vst [vmem:[#allocation2 + $0xd8] sm:$0xff] %v2825
        %2858 = vst [vmem:[#allocation2 + $0xe0] sm:$0xff] %v2826
        %2859 = vst [vmem:[#allocation2 + $0xe8] sm:$0xff] %v2827
        %2860 = vst [vmem:[#allocation2 + $0xf0] sm:$0xff] %v2828
        %2861 = vst [vmem:[#allocation2 + $0xf8] sm:$0xff] %v2829
        %v2862 = vld [vmem:[%s1793] sm:$0xe]
        %v2863 = vld [vmem:[%s1793 + $0x4] sm:$0xf]
        %v2864 = vld [vmem:[%s1793 + $0x8] sm:$0x1]
        %v2865 = vld [vmem:[%s1793 + $0xc] sm:$0xe]
        %v2866 = vld [vmem:[%s1793 + $0x10] sm:$0xf]
        %v2867 = vld [vmem:[%s1793 + $0x14] sm:$0x1]
        %v2868 = vld [vmem:[%s1793 + $0x18] sm:$0xe]
        %v2869 = vld [vmem:[%s1793 + $0x1c] sm:$0xf]
        %v2870 = vld [vmem:[%s1793 + $0x20] sm:$0x1]
        %v2871 = vld [vmem:[%s1793 + $0x24] sm:$0xe]
        %v2872 = vld [vmem:[%s1793 + $0x28] sm:$0xf]
        %v2873 = vld [vmem:[%s1793 + $0x2c] sm:$0x1]
        %v2874 = vld [vmem:[%s1793 + $0x30] sm:$0xe]
        %v2875 = vld [vmem:[%s1793 + $0x34] sm:$0xf]
        %v2876 = vld [vmem:[%s1793 + $0x38] sm:$0x1]
        %v2877 = vld [vmem:[%s1793 + $0x3c] sm:$0xe]
        %v2878 = vld [vmem:[%s1793 + $0x40] sm:$0xf]
        %v2879 = vld [vmem:[%s1793 + $0x44] sm:$0x1]
        %v2880 = vld [vmem:[%s1793 + $0x48] sm:$0xe]
        %v2881 = vld [vmem:[%s1793 + $0x4c] sm:$0xf]
        %v2882 = vld [vmem:[%s1793 + $0x50] sm:$0x1]
        %v2883 = vld [vmem:[%s1793 + $0x54] sm:$0xe]
        %v2884 = vld [vmem:[%s1793 + $0x58] sm:$0xf]
        %v2885 = vld [vmem:[%s1793 + $0x5c] sm:$0x1]
        %v2886 = vld [vmem:[%s1793 + $0x60] sm:$0xe]
        %v2887 = vld [vmem:[%s1793 + $0x64] sm:$0xf]
        %v2888 = vld [vmem:[%s1793 + $0x68] sm:$0x1]
        %v2889 = vld [vmem:[%s1793 + $0x6c] sm:$0xe]
        %v2890 = vld [vmem:[%s1793 + $0x70] sm:$0xf]
        %v2891 = vld [vmem:[%s1793 + $0x74] sm:$0x1]
        %v2892 = vld [vmem:[%s1793 + $0x78] sm:$0xe]
        %v2893 = vld [vmem:[%s1793 + $0x7c] sm:$0xf]
        %v2894 = vld [vmem:[%s1793 + $0x80] sm:$0x1]
        %v2895 = vld [vmem:[%s1793 + $0x84] sm:$0xe]
        %v2896 = vld [vmem:[%s1793 + $0x88] sm:$0xf]
        %v2897 = vld [vmem:[%s1793 + $0x8c] sm:$0x1]
        %v2898 = vld [vmem:[%s1793 + $0x90] sm:$0xe]
        %v2899 = vld [vmem:[%s1793 + $0x94] sm:$0xf]
        %v2900 = vld [vmem:[%s1793 + $0x98] sm:$0x1]
        %v2901 = vld [vmem:[%s1793 + $0x9c] sm:$0xe]
        %v2902 = vld [vmem:[%s1793 + $0xa0] sm:$0xf]
        %v2903 = vld [vmem:[%s1793 + $0xa4] sm:$0x1]
        %v2904 = vld [vmem:[%s1793 + $0xa8] sm:$0xe]
        %v2905 = vld [vmem:[%s1793 + $0xac] sm:$0xf]
        %v2906 = vld [vmem:[%s1793 + $0xb0] sm:$0x1]
        %v2907 = vld [vmem:[%s1793 + $0xb4] sm:$0xe]
        %v2908 = vld [vmem:[%s1793 + $0xb8] sm:$0xf]
        %v2909 = vld [vmem:[%s1793 + $0xbc] sm:$0x1]
        %v2910 = vld [vmem:[#allocation2] sm:$0xff]
        %v2911 = vld [vmem:[#allocation2 + $0x8] sm:$0xff]
        %v2912 = vld [vmem:[#allocation2 + $0x10] sm:$0xff]
        %v2913 = vld [vmem:[#allocation2 + $0x18] sm:$0xff]
        %v2914 = vld [vmem:[#allocation2 + $0x20] sm:$0xff]
        %v2915 = vld [vmem:[#allocation2 + $0x28] sm:$0xff]
        %v2916 = vld [vmem:[#allocation2 + $0x30] sm:$0xff]
        %v2917 = vld [vmem:[#allocation2 + $0x38] sm:$0xff]
        %v2918 = vld [vmem:[#allocation2 + $0x40] sm:$0xff]
        %v2919 = vld [vmem:[#allocation2 + $0x48] sm:$0xff]
        %v2920 = vld [vmem:[#allocation2 + $0x50] sm:$0xff]
        %v2921 = vld [vmem:[#allocation2 + $0x58] sm:$0xff]
        %v2922 = vld [vmem:[#allocation2 + $0x60] sm:$0xff]
        %v2923 = vld [vmem:[#allocation2 + $0x68] sm:$0xff]
        %v2924 = vld [vmem:[#allocation2 + $0x70] sm:$0xff]
        %v2925 = vld [vmem:[#allocation2 + $0x78] sm:$0xff]
        %v2926 = vld [vmem:[#allocation2 + $0x80] sm:$0xff]
        %v2927 = vld [vmem:[#allocation2 + $0x88] sm:$0xff]
        %v2928 = vld [vmem:[#allocation2 + $0x90] sm:$0xff]
        %v2929 = vld [vmem:[#allocation2 + $0x98] sm:$0xff]
        %v2930 = vld [vmem:[#allocation2 + $0xa0] sm:$0xff]
        %v2931 = vld [vmem:[#allocation2 + $0xa8] sm:$0xff]
        %v2932 = vld [vmem:[#allocation2 + $0xb0] sm:$0xff]
        %v2933 = vld [vmem:[#allocation2 + $0xb8] sm:$0xff]
        %v2934 = vld [vmem:[#allocation2 + $0xc0] sm:$0xff]
        %v2935 = vld [vmem:[#allocation2 + $0xc8] sm:$0xff]
        %v2936 = vld [vmem:[#allocation2 + $0xd0] sm:$0xff]
        %v2937 = vld [vmem:[#allocation2 + $0xd8] sm:$0xff]
        %v2938 = vld [vmem:[#allocation2 + $0xe0] sm:$0xff]
        %v2939 = vld [vmem:[#allocation2 + $0xe8] sm:$0xff]
        %v2940 = vld [vmem:[#allocation2 + $0xf0] sm:$0xff]
        %v2941 = vld [vmem:[#allocation2 + $0xf8] sm:$0xff]
        %v2990 = vrot.slane %v2862, 5
        %v2991 = vrot.slane %v2990, 4
        %v2992 = vrot.slane %v2863, 5
        %v2993 = vsel %vm1423, %v2991, %v2992
        %v2994 = vrot.slane %v2992, 4
        %v2995 = vrot.slane %v2864, 5
        %v2996 = vsel %vm1423, %v2994, %v2995
        %v2997 = vrot.slane %v2865, 5
        %v2998 = vrot.slane %v2997, 4
        %v2999 = vrot.slane %v2866, 5
        %v3000 = vsel %vm1423, %v2998, %v2999
        %v3001 = vrot.slane %v2999, 4
        %v3002 = vrot.slane %v2867, 5
        %v3003 = vsel %vm1423, %v3001, %v3002
        %v3004 = vrot.slane %v2868, 5
        %v3005 = vrot.slane %v3004, 4
        %v3006 = vrot.slane %v2869, 5
        %v3007 = vsel %vm1423, %v3005, %v3006
        %v3008 = vrot.slane %v3006, 4
        %v3009 = vrot.slane %v2870, 5
        %v3010 = vsel %vm1423, %v3008, %v3009
        %v3011 = vrot.slane %v2871, 5
        %v3012 = vrot.slane %v3011, 4
        %v3013 = vrot.slane %v2872, 5
        %v3014 = vsel %vm1423, %v3012, %v3013
        %v3015 = vrot.slane %v3013, 4
        %v3016 = vrot.slane %v2873, 5
        %v3017 = vsel %vm1423, %v3015, %v3016
        %v3018 = vrot.slane %v2874, 5
        %v3019 = vrot.slane %v3018, 4
        %v3020 = vrot.slane %v2875, 5
        %v3021 = vsel %vm1423, %v3019, %v3020
        %v3022 = vrot.slane %v3020, 4
        %v3023 = vrot.slane %v2876, 5
        %v3024 = vsel %vm1423, %v3022, %v3023
        %v3025 = vrot.slane %v2877, 5
        %v3026 = vrot.slane %v3025, 4
        %v3027 = vrot.slane %v2878, 5
        %v3028 = vsel %vm1423, %v3026, %v3027
        %v3029 = vrot.slane %v3027, 4
        %v3030 = vrot.slane %v2879, 5
        %v3031 = vsel %vm1423, %v3029, %v3030
        %v3032 = vrot.slane %v2880, 5
        %v3033 = vrot.slane %v3032, 4
        %v3034 = vrot.slane %v2881, 5
        %v3035 = vsel %vm1423, %v3033, %v3034
        %v3036 = vrot.slane %v3034, 4
        %v3037 = vrot.slane %v2882, 5
        %v3038 = vsel %vm1423, %v3036, %v3037
        %v3039 = vrot.slane %v2883, 5
        %v3040 = vrot.slane %v3039, 4
        %v3041 = vrot.slane %v2884, 5
        %v3042 = vsel %vm1423, %v3040, %v3041
        %v3043 = vrot.slane %v3041, 4
        %v3044 = vrot.slane %v2885, 5
        %v3045 = vsel %vm1423, %v3043, %v3044
        %v3046 = vrot.slane %v2886, 5
        %v3047 = vrot.slane %v3046, 4
        %v3048 = vrot.slane %v2887, 5
        %v3049 = vsel %vm1423, %v3047, %v3048
        %v3050 = vrot.slane %v3048, 4
        %v3051 = vrot.slane %v2888, 5
        %v3052 = vsel %vm1423, %v3050, %v3051
        %v3053 = vrot.slane %v2889, 5
        %v3054 = vrot.slane %v3053, 4
        %v3055 = vrot.slane %v2890, 5
        %v3056 = vsel %vm1423, %v3054, %v3055
        %v3057 = vrot.slane %v3055, 4
        %v3058 = vrot.slane %v2891, 5
        %v3059 = vsel %vm1423, %v3057, %v3058
        %v3060 = vrot.slane %v2892, 5
        %v3061 = vrot.slane %v3060, 4
        %v3062 = vrot.slane %v2893, 5
        %v3063 = vsel %vm1423, %v3061, %v3062
        %v3064 = vrot.slane %v3062, 4
        %v3065 = vrot.slane %v2894, 5
        %v3066 = vsel %vm1423, %v3064, %v3065
        %v3067 = vrot.slane %v2895, 5
        %v3068 = vrot.slane %v3067, 4
        %v3069 = vrot.slane %v2896, 5
        %v3070 = vsel %vm1423, %v3068, %v3069
        %v3071 = vrot.slane %v3069, 4
        %v3072 = vrot.slane %v2897, 5
        %v3073 = vsel %vm1423, %v3071, %v3072
        %v3074 = vrot.slane %v2898, 5
        %v3075 = vrot.slane %v3074, 4
        %v3076 = vrot.slane %v2899, 5
        %v3077 = vsel %vm1423, %v3075, %v3076
        %v3078 = vrot.slane %v3076, 4
        %v3079 = vrot.slane %v2900, 5
        %v3080 = vsel %vm1423, %v3078, %v3079
        %v3081 = vrot.slane %v2901, 5
        %v3082 = vrot.slane %v3081, 4
        %v3083 = vrot.slane %v2902, 5
        %v3084 = vsel %vm1423, %v3082, %v3083
        %v3085 = vrot.slane %v3083, 4
        %v3086 = vrot.slane %v2903, 5
        %v3087 = vsel %vm1423, %v3085, %v3086
        %v3088 = vrot.slane %v2904, 5
        %v3089 = vrot.slane %v3088, 4
        %v3090 = vrot.slane %v2905, 5
        %v3091 = vsel %vm1423, %v3089, %v3090
        %v3092 = vrot.slane %v3090, 4
        %v3093 = vrot.slane %v2906, 5
        %v3094 = vsel %vm1423, %v3092, %v3093
        %v3095 = vrot.slane %v2907, 5
        %v3096 = vrot.slane %v3095, 4
        %v3097 = vrot.slane %v2908, 5
        %v3098 = vsel %vm1423, %v3096, %v3097
        %v3099 = vrot.slane %v3097, 4
        %v3100 = vrot.slane %v2909, 5
        %v3101 = vsel %vm1423, %v3099, %v3100
        %s3102 = scalar_lea.vmem %s1, 10
        %v3103 = vld [vmem:[%s3102] sm:$0x3]
        %v3104 = vunpack.c.l.b16 %v2993
        %v3105 = vunpack.c.l.b16 %v2996
        %v3106 = vunpack.c.l.b16 %v3000
        %v3107 = vunpack.c.l.b16 %v3003
        %v3108 = vunpack.c.l.b16 %v3007
        %v3109 = vunpack.c.l.b16 %v3010
        %v3110 = vunpack.c.l.b16 %v3014
        %v3111 = vunpack.c.l.b16 %v3017
        %v3112 = vunpack.c.l.b16 %v3021
        %v3113 = vunpack.c.l.b16 %v3024
        %v3114 = vunpack.c.l.b16 %v3028
        %v3115 = vunpack.c.l.b16 %v3031
        %v3116 = vunpack.c.l.b16 %v3035
        %v3117 = vunpack.c.l.b16 %v3038
        %v3118 = vunpack.c.l.b16 %v3042
        %v3119 = vunpack.c.l.b16 %v3045
        %v3120 = vunpack.c.l.b16 %v3049
        %v3121 = vunpack.c.l.b16 %v3052
        %v3122 = vunpack.c.l.b16 %v3056
        %v3123 = vunpack.c.l.b16 %v3059
        %v3124 = vunpack.c.l.b16 %v3063
        %v3125 = vunpack.c.l.b16 %v3066
        %v3126 = vunpack.c.l.b16 %v3070
        %v3127 = vunpack.c.l.b16 %v3073
        %v3128 = vunpack.c.l.b16 %v3077
        %v3129 = vunpack.c.l.b16 %v3080
        %v3130 = vunpack.c.l.b16 %v3084
        %v3131 = vunpack.c.l.b16 %v3087
        %v3132 = vunpack.c.l.b16 %v3091
        %v3133 = vunpack.c.l.b16 %v3094
        %v3134 = vunpack.c.l.b16 %v3098
        %v3135 = vunpack.c.l.b16 %v3101
        %v3136 = vpack.c.b16 %v3105, %v3104
        %v3137 = vpack.c.b16 %v3107, %v3106
        %v3138 = vpack.c.b16 %v3109, %v3108
        %v3139 = vpack.c.b16 %v3111, %v3110
        %v3140 = vpack.c.b16 %v3113, %v3112
        %v3141 = vpack.c.b16 %v3115, %v3114
        %v3142 = vpack.c.b16 %v3117, %v3116
        %v3143 = vpack.c.b16 %v3119, %v3118
        %v3144 = vpack.c.b16 %v3121, %v3120
        %v3145 = vpack.c.b16 %v3123, %v3122
        %v3146 = vpack.c.b16 %v3125, %v3124
        %v3147 = vpack.c.b16 %v3127, %v3126
        %v3148 = vpack.c.b16 %v3129, %v3128
        %v3149 = vpack.c.b16 %v3131, %v3130
        %v3150 = vpack.c.b16 %v3133, %v3132
        %v3151 = vpack.c.b16 %v3135, %v3134
        %v3153 = vsel %vm366, %v3136, 0
        %v3156 = vsel %vm366, %v3137, 0
        %v3159 = vsel %vm366, %v3138, 0
        %v3162 = vsel %vm366, %v3139, 0
        %v3165 = vsel %vm366, %v3140, 0
        %v3168 = vsel %vm366, %v3141, 0
        %v3171 = vsel %vm366, %v3142, 0
        %v3174 = vsel %vm366, %v3143, 0
        %v3177 = vsel %vm366, %v3144, 0
        %v3180 = vsel %vm366, %v3145, 0
        %v3183 = vsel %vm366, %v3146, 0
        %v3186 = vsel %vm366, %v3147, 0
        %v3189 = vsel %vm366, %v3148, 0
        %v3192 = vsel %vm366, %v3149, 0
        %v3195 = vsel %vm366, %v3150, 0
        %v3198 = vsel %vm366, %v3151, 0
        %v3201 = vsel %vm415, %v3103, 0
        %3203 = vmatpush.bf16.msra.mxu0 0
        %3204 = vmatpush.bf16.msra.mxu0 0
        %3205 = vmatpush.bf16.msra.mxu0 0
        %3206 = vmatpush.bf16.msra.mxu0 0
        %3207 = vmatpush.bf16.msra.mxu0 0
        %3208 = vmatpush.bf16.msra.mxu0 0
        %3209 = vmatpush.bf16.msra.mxu0 0
        %3210 = vmatpush.bf16.msra.mxu0 %v3201
        %3211 = vmatmul.bf16.gmra.mxu0 %v3153
        %v3212 = vpop.f32.mrf.mxu0
        %v3213 = vadd.f32 0.0, %v3212
        %v3214 = vpop.f32.mrf.mxu0
        %v3215 = vadd.f32 0.0, %v3214
        %3216 = vmatmul.bf16.gmra.mxu0 %v3156
        %v3217 = vpop.f32.mrf.mxu0
        %v3218 = vadd.f32 0.0, %v3217
        %v3219 = vpop.f32.mrf.mxu0
        %v3220 = vadd.f32 0.0, %v3219
        %3221 = vmatmul.bf16.gmra.mxu0 %v3159
        %v3222 = vpop.f32.mrf.mxu0
        %v3223 = vadd.f32 0.0, %v3222
        %v3224 = vpop.f32.mrf.mxu0
        %v3225 = vadd.f32 0.0, %v3224
        %3226 = vmatmul.bf16.gmra.mxu0 %v3162
        %v3227 = vpop.f32.mrf.mxu0
        %v3228 = vadd.f32 0.0, %v3227
        %v3229 = vpop.f32.mrf.mxu0
        %v3230 = vadd.f32 0.0, %v3229
        %3231 = vmatmul.bf16.gmra.mxu0 %v3165
        %v3232 = vpop.f32.mrf.mxu0
        %v3233 = vadd.f32 0.0, %v3232
        %v3234 = vpop.f32.mrf.mxu0
        %v3235 = vadd.f32 0.0, %v3234
        %3236 = vmatmul.bf16.gmra.mxu0 %v3168
        %v3237 = vpop.f32.mrf.mxu0
        %v3238 = vadd.f32 0.0, %v3237
        %v3239 = vpop.f32.mrf.mxu0
        %v3240 = vadd.f32 0.0, %v3239
        %3241 = vmatmul.bf16.gmra.mxu0 %v3171
        %v3242 = vpop.f32.mrf.mxu0
        %v3243 = vadd.f32 0.0, %v3242
        %v3244 = vpop.f32.mrf.mxu0
        %v3245 = vadd.f32 0.0, %v3244
        %3246 = vmatmul.bf16.gmra.mxu0 %v3174
        %v3247 = vpop.f32.mrf.mxu0
        %v3248 = vadd.f32 0.0, %v3247
        %v3249 = vpop.f32.mrf.mxu0
        %v3250 = vadd.f32 0.0, %v3249
        %3251 = vmatmul.bf16.gmra.mxu0 %v3177
        %v3252 = vpop.f32.mrf.mxu0
        %v3253 = vadd.f32 0.0, %v3252
        %v3254 = vpop.f32.mrf.mxu0
        %v3255 = vadd.f32 0.0, %v3254
        %3256 = vmatmul.bf16.gmra.mxu0 %v3180
        %v3257 = vpop.f32.mrf.mxu0
        %v3258 = vadd.f32 0.0, %v3257
        %v3259 = vpop.f32.mrf.mxu0
        %v3260 = vadd.f32 0.0, %v3259
        %3261 = vmatmul.bf16.gmra.mxu0 %v3183
        %v3262 = vpop.f32.mrf.mxu0
        %v3263 = vadd.f32 0.0, %v3262
        %v3264 = vpop.f32.mrf.mxu0
        %v3265 = vadd.f32 0.0, %v3264
        %3266 = vmatmul.bf16.gmra.mxu0 %v3186
        %v3267 = vpop.f32.mrf.mxu0
        %v3268 = vadd.f32 0.0, %v3267
        %v3269 = vpop.f32.mrf.mxu0
        %v3270 = vadd.f32 0.0, %v3269
        %3271 = vmatmul.bf16.gmra.mxu0 %v3189
        %v3272 = vpop.f32.mrf.mxu0
        %v3273 = vadd.f32 0.0, %v3272
        %v3274 = vpop.f32.mrf.mxu0
        %v3275 = vadd.f32 0.0, %v3274
        %3276 = vmatmul.bf16.gmra.mxu0 %v3192
        %v3277 = vpop.f32.mrf.mxu0
        %v3278 = vadd.f32 0.0, %v3277
        %v3279 = vpop.f32.mrf.mxu0
        %v3280 = vadd.f32 0.0, %v3279
        %3281 = vmatmul.bf16.gmra.mxu0 %v3195
        %v3282 = vpop.f32.mrf.mxu0
        %v3283 = vadd.f32 0.0, %v3282
        %v3284 = vpop.f32.mrf.mxu0
        %v3285 = vadd.f32 0.0, %v3284
        %3286 = vmatmul.bf16.gmra.mxu0 %v3198
        %v3287 = vpop.f32.mrf.mxu0
        %v3288 = vadd.f32 0.0, %v3287
        %v3289 = vpop.f32.mrf.mxu0
        %v3290 = vadd.f32 0.0, %v3289
        %3291 = vdwg.mxu0
        %v3292 = vadd.f32 %v2910, %v3213
        %v3293 = vadd.f32 %v2911, %v3215
        %v3294 = vadd.f32 %v2912, %v3218
        %v3295 = vadd.f32 %v2913, %v3220
        %v3296 = vadd.f32 %v2914, %v3223
        %v3297 = vadd.f32 %v2915, %v3225
        %v3298 = vadd.f32 %v2916, %v3228
        %v3299 = vadd.f32 %v2917, %v3230
        %v3300 = vadd.f32 %v2918, %v3233
        %v3301 = vadd.f32 %v2919, %v3235
        %v3302 = vadd.f32 %v2920, %v3238
        %v3303 = vadd.f32 %v2921, %v3240
        %v3304 = vadd.f32 %v2922, %v3243
        %v3305 = vadd.f32 %v2923, %v3245
        %v3306 = vadd.f32 %v2924, %v3248
        %v3307 = vadd.f32 %v2925, %v3250
        %v3308 = vadd.f32 %v2926, %v3253
        %v3309 = vadd.f32 %v2927, %v3255
        %v3310 = vadd.f32 %v2928, %v3258
        %v3311 = vadd.f32 %v2929, %v3260
        %v3312 = vadd.f32 %v2930, %v3263
        %v3313 = vadd.f32 %v2931, %v3265
        %v3314 = vadd.f32 %v2932, %v3268
        %v3315 = vadd.f32 %v2933, %v3270
        %v3316 = vadd.f32 %v2934, %v3273
        %v3317 = vadd.f32 %v2935, %v3275
        %v3318 = vadd.f32 %v2936, %v3278
        %v3319 = vadd.f32 %v2937, %v3280
        %v3320 = vadd.f32 %v2938, %v3283
        %v3321 = vadd.f32 %v2939, %v3285
        %v3322 = vadd.f32 %v2940, %v3288
        %v3323 = vadd.f32 %v2941, %v3290
        %3324 = vst [vmem:[#allocation2] sm:$0xff] %v3292
        %3325 = vst [vmem:[#allocation2 + $0x8] sm:$0xff] %v3293
        %3326 = vst [vmem:[#allocation2 + $0x10] sm:$0xff] %v3294
        %3327 = vst [vmem:[#allocation2 + $0x18] sm:$0xff] %v3295
        %3328 = vst [vmem:[#allocation2 + $0x20] sm:$0xff] %v3296
        %3329 = vst [vmem:[#allocation2 + $0x28] sm:$0xff] %v3297
        %3330 = vst [vmem:[#allocation2 + $0x30] sm:$0xff] %v3298
        %3331 = vst [vmem:[#allocation2 + $0x38] sm:$0xff] %v3299
        %3332 = vst [vmem:[#allocation2 + $0x40] sm:$0xff] %v3300
        %3333 = vst [vmem:[#allocation2 + $0x48] sm:$0xff] %v3301
        %3334 = vst [vmem:[#allocation2 + $0x50] sm:$0xff] %v3302
        %3335 = vst [vmem:[#allocation2 + $0x58] sm:$0xff] %v3303
        %3336 = vst [vmem:[#allocation2 + $0x60] sm:$0xff] %v3304
        %3337 = vst [vmem:[#allocation2 + $0x68] sm:$0xff] %v3305
        %3338 = vst [vmem:[#allocation2 + $0x70] sm:$0xff] %v3306
        %3339 = vst [vmem:[#allocation2 + $0x78] sm:$0xff] %v3307
        %3340 = vst [vmem:[#allocation2 + $0x80] sm:$0xff] %v3308
        %3341 = vst [vmem:[#allocation2 + $0x88] sm:$0xff] %v3309
        %3342 = vst [vmem:[#allocation2 + $0x90] sm:$0xff] %v3310
        %3343 = vst [vmem:[#allocation2 + $0x98] sm:$0xff] %v3311
        %3344 = vst [vmem:[#allocation2 + $0xa0] sm:$0xff] %v3312
        %3345 = vst [vmem:[#allocation2 + $0xa8] sm:$0xff] %v3313
        %3346 = vst [vmem:[#allocation2 + $0xb0] sm:$0xff] %v3314
        %3347 = vst [vmem:[#allocation2 + $0xb8] sm:$0xff] %v3315
        %3348 = vst [vmem:[#allocation2 + $0xc0] sm:$0xff] %v3316
        %3349 = vst [vmem:[#allocation2 + $0xc8] sm:$0xff] %v3317
        %3350 = vst [vmem:[#allocation2 + $0xd0] sm:$0xff] %v3318
        %3351 = vst [vmem:[#allocation2 + $0xd8] sm:$0xff] %v3319
        %3352 = vst [vmem:[#allocation2 + $0xe0] sm:$0xff] %v3320
        %3353 = vst [vmem:[#allocation2 + $0xe8] sm:$0xff] %v3321
        %3354 = vst [vmem:[#allocation2 + $0xf0] sm:$0xff] %v3322
        %3355 = vst [vmem:[#allocation2 + $0xf8] sm:$0xff] %v3323
        %s3356 = sadd.s32 %s185, 2
        %s3357 = smul.u32 %s3356, 3
        %s3358 = smul.addr %s3357, 4
        %s3359 = scalar_lea.vmem %s182, %s3358
        %v3360 = vld [vmem:[%s3359] sm:$0xf]
        %v3361 = vld [vmem:[%s3359 + $0x4] sm:$0xf]
        %v3362 = vld [vmem:[%s3359 + $0xc] sm:$0xf]
        %v3363 = vld [vmem:[%s3359 + $0x10] sm:$0xf]
        %v3364 = vld [vmem:[%s3359 + $0x18] sm:$0xf]
        %v3365 = vld [vmem:[%s3359 + $0x1c] sm:$0xf]
        %v3366 = vld [vmem:[%s3359 + $0x24] sm:$0xf]
        %v3367 = vld [vmem:[%s3359 + $0x28] sm:$0xf]
        %v3368 = vld [vmem:[%s3359 + $0x30] sm:$0xf]
        %v3369 = vld [vmem:[%s3359 + $0x34] sm:$0xf]
        %v3370 = vld [vmem:[%s3359 + $0x3c] sm:$0xf]
        %v3371 = vld [vmem:[%s3359 + $0x40] sm:$0xf]
        %v3372 = vld [vmem:[%s3359 + $0x48] sm:$0xf]
        %v3373 = vld [vmem:[%s3359 + $0x4c] sm:$0xf]
        %v3374 = vld [vmem:[%s3359 + $0x54] sm:$0xf]
        %v3375 = vld [vmem:[%s3359 + $0x58] sm:$0xf]
        %v3376 = vld [vmem:[%s3359 + $0x60] sm:$0xf]
        %v3377 = vld [vmem:[%s3359 + $0x64] sm:$0xf]
        %v3378 = vld [vmem:[%s3359 + $0x6c] sm:$0xf]
        %v3379 = vld [vmem:[%s3359 + $0x70] sm:$0xf]
        %v3380 = vld [vmem:[%s3359 + $0x78] sm:$0xf]
        %v3381 = vld [vmem:[%s3359 + $0x7c] sm:$0xf]
        %v3382 = vld [vmem:[%s3359 + $0x84] sm:$0xf]
        %v3383 = vld [vmem:[%s3359 + $0x88] sm:$0xf]
        %v3384 = vld [vmem:[%s3359 + $0x90] sm:$0xf]
        %v3385 = vld [vmem:[%s3359 + $0x94] sm:$0xf]
        %v3386 = vld [vmem:[%s3359 + $0x9c] sm:$0xf]
        %v3387 = vld [vmem:[%s3359 + $0xa0] sm:$0xf]
        %v3388 = vld [vmem:[%s3359 + $0xa8] sm:$0xf]
        %v3389 = vld [vmem:[%s3359 + $0xac] sm:$0xf]
        %v3390 = vld [vmem:[%s3359 + $0xb4] sm:$0xf]
        %v3391 = vld [vmem:[%s3359 + $0xb8] sm:$0xf]
        %v3392 = vld [vmem:[#allocation2] sm:$0xff]
        %v3393 = vld [vmem:[#allocation2 + $0x8] sm:$0xff]
        %v3394 = vld [vmem:[#allocation2 + $0x10] sm:$0xff]
        %v3395 = vld [vmem:[#allocation2 + $0x18] sm:$0xff]
        %v3396 = vld [vmem:[#allocation2 + $0x20] sm:$0xff]
        %v3397 = vld [vmem:[#allocation2 + $0x28] sm:$0xff]
        %v3398 = vld [vmem:[#allocation2 + $0x30] sm:$0xff]
        %v3399 = vld [vmem:[#allocation2 + $0x38] sm:$0xff]
        %v3400 = vld [vmem:[#allocation2 + $0x40] sm:$0xff]
        %v3401 = vld [vmem:[#allocation2 + $0x48] sm:$0xff]
        %v3402 = vld [vmem:[#allocation2 + $0x50] sm:$0xff]
        %v3403 = vld [vmem:[#allocation2 + $0x58] sm:$0xff]
        %v3404 = vld [vmem:[#allocation2 + $0x60] sm:$0xff]
        %v3405 = vld [vmem:[#allocation2 + $0x68] sm:$0xff]
        %v3406 = vld [vmem:[#allocation2 + $0x70] sm:$0xff]
        %v3407 = vld [vmem:[#allocation2 + $0x78] sm:$0xff]
        %v3408 = vld [vmem:[#allocation2 + $0x80] sm:$0xff]
        %v3409 = vld [vmem:[#allocation2 + $0x88] sm:$0xff]
        %v3410 = vld [vmem:[#allocation2 + $0x90] sm:$0xff]
        %v3411 = vld [vmem:[#allocation2 + $0x98] sm:$0xff]
        %v3412 = vld [vmem:[#allocation2 + $0xa0] sm:$0xff]
        %v3413 = vld [vmem:[#allocation2 + $0xa8] sm:$0xff]
        %v3414 = vld [vmem:[#allocation2 + $0xb0] sm:$0xff]
        %v3415 = vld [vmem:[#allocation2 + $0xb8] sm:$0xff]
        %v3416 = vld [vmem:[#allocation2 + $0xc0] sm:$0xff]
        %v3417 = vld [vmem:[#allocation2 + $0xc8] sm:$0xff]
        %v3418 = vld [vmem:[#allocation2 + $0xd0] sm:$0xff]
        %v3419 = vld [vmem:[#allocation2 + $0xd8] sm:$0xff]
        %v3420 = vld [vmem:[#allocation2 + $0xe0] sm:$0xff]
        %v3421 = vld [vmem:[#allocation2 + $0xe8] sm:$0xff]
        %v3422 = vld [vmem:[#allocation2 + $0xf0] sm:$0xff]
        %v3423 = vld [vmem:[#allocation2 + $0xf8] sm:$0xff]
        %s3424 = scalar_lea.vmem %s1, 12
        %v3425 = vld [vmem:[%s3424] sm:$0x3]
        %v3458 = vunpack.c.l.b16 %v3360
        %v3459 = vunpack.c.l.b16 %v3361
        %v3460 = vunpack.c.l.b16 %v3362
        %v3461 = vunpack.c.l.b16 %v3363
        %v3462 = vunpack.c.l.b16 %v3364
        %v3463 = vunpack.c.l.b16 %v3365
        %v3464 = vunpack.c.l.b16 %v3366
        %v3465 = vunpack.c.l.b16 %v3367
        %v3466 = vunpack.c.l.b16 %v3368
        %v3467 = vunpack.c.l.b16 %v3369
        %v3468 = vunpack.c.l.b16 %v3370
        %v3469 = vunpack.c.l.b16 %v3371
        %v3470 = vunpack.c.l.b16 %v3372
        %v3471 = vunpack.c.l.b16 %v3373
        %v3472 = vunpack.c.l.b16 %v3374
        %v3473 = vunpack.c.l.b16 %v3375
        %v3474 = vunpack.c.l.b16 %v3376
        %v3475 = vunpack.c.l.b16 %v3377
        %v3476 = vunpack.c.l.b16 %v3378
        %v3477 = vunpack.c.l.b16 %v3379
        %v3478 = vunpack.c.l.b16 %v3380
        %v3479 = vunpack.c.l.b16 %v3381
        %v3480 = vunpack.c.l.b16 %v3382
        %v3481 = vunpack.c.l.b16 %v3383
        %v3482 = vunpack.c.l.b16 %v3384
        %v3483 = vunpack.c.l.b16 %v3385
        %v3484 = vunpack.c.l.b16 %v3386
        %v3485 = vunpack.c.l.b16 %v3387
        %v3486 = vunpack.c.l.b16 %v3388
        %v3487 = vunpack.c.l.b16 %v3389
        %v3488 = vunpack.c.l.b16 %v3390
        %v3489 = vunpack.c.l.b16 %v3391
        %v3490 = vpack.c.b16 %v3459, %v3458
        %v3491 = vpack.c.b16 %v3461, %v3460
        %v3492 = vpack.c.b16 %v3463, %v3462
        %v3493 = vpack.c.b16 %v3465, %v3464
        %v3494 = vpack.c.b16 %v3467, %v3466
        %v3495 = vpack.c.b16 %v3469, %v3468
        %v3496 = vpack.c.b16 %v3471, %v3470
        %v3497 = vpack.c.b16 %v3473, %v3472
        %v3498 = vpack.c.b16 %v3475, %v3474
        %v3499 = vpack.c.b16 %v3477, %v3476
        %v3500 = vpack.c.b16 %v3479, %v3478
        %v3501 = vpack.c.b16 %v3481, %v3480
        %v3502 = vpack.c.b16 %v3483, %v3482
        %v3503 = vpack.c.b16 %v3485, %v3484
        %v3504 = vpack.c.b16 %v3487, %v3486
        %v3505 = vpack.c.b16 %v3489, %v3488
        %v3507 = vsel %vm366, %v3490, 0
        %v3510 = vsel %vm366, %v3491, 0
        %v3513 = vsel %vm366, %v3492, 0
        %v3516 = vsel %vm366, %v3493, 0
        %v3519 = vsel %vm366, %v3494, 0
        %v3522 = vsel %vm366, %v3495, 0
        %v3525 = vsel %vm366, %v3496, 0
        %v3528 = vsel %vm366, %v3497, 0
        %v3531 = vsel %vm366, %v3498, 0
        %v3534 = vsel %vm366, %v3499, 0
        %v3537 = vsel %vm366, %v3500, 0
        %v3540 = vsel %vm366, %v3501, 0
        %v3543 = vsel %vm366, %v3502, 0
        %v3546 = vsel %vm366, %v3503, 0
        %v3549 = vsel %vm366, %v3504, 0
        %v3552 = vsel %vm366, %v3505, 0
        %v3555 = vsel %vm415, %v3425, 0
        %3557 = vmatpush.bf16.msra.mxu0 0
        %3558 = vmatpush.bf16.msra.mxu0 0
        %3559 = vmatpush.bf16.msra.mxu0 0
        %3560 = vmatpush.bf16.msra.mxu0 0
        %3561 = vmatpush.bf16.msra.mxu0 0
        %3562 = vmatpush.bf16.msra.mxu0 0
        %3563 = vmatpush.bf16.msra.mxu0 0
        %3564 = vmatpush.bf16.msra.mxu0 %v3555
        %3565 = vmatmul.bf16.gmra.mxu0 %v3507
        %v3566 = vpop.f32.mrf.mxu0
        %v3567 = vadd.f32 0.0, %v3566
        %v3568 = vpop.f32.mrf.mxu0
        %v3569 = vadd.f32 0.0, %v3568
        %3570 = vmatmul.bf16.gmra.mxu0 %v3510
        %v3571 = vpop.f32.mrf.mxu0
        %v3572 = vadd.f32 0.0, %v3571
        %v3573 = vpop.f32.mrf.mxu0
        %v3574 = vadd.f32 0.0, %v3573
        %3575 = vmatmul.bf16.gmra.mxu0 %v3513
        %v3576 = vpop.f32.mrf.mxu0
        %v3577 = vadd.f32 0.0, %v3576
        %v3578 = vpop.f32.mrf.mxu0
        %v3579 = vadd.f32 0.0, %v3578
        %3580 = vmatmul.bf16.gmra.mxu0 %v3516
        %v3581 = vpop.f32.mrf.mxu0
        %v3582 = vadd.f32 0.0, %v3581
        %v3583 = vpop.f32.mrf.mxu0
        %v3584 = vadd.f32 0.0, %v3583
        %3585 = vmatmul.bf16.gmra.mxu0 %v3519
        %v3586 = vpop.f32.mrf.mxu0
        %v3587 = vadd.f32 0.0, %v3586
        %v3588 = vpop.f32.mrf.mxu0
        %v3589 = vadd.f32 0.0, %v3588
        %3590 = vmatmul.bf16.gmra.mxu0 %v3522
        %v3591 = vpop.f32.mrf.mxu0
        %v3592 = vadd.f32 0.0, %v3591
        %v3593 = vpop.f32.mrf.mxu0
        %v3594 = vadd.f32 0.0, %v3593
        %3595 = vmatmul.bf16.gmra.mxu0 %v3525
        %v3596 = vpop.f32.mrf.mxu0
        %v3597 = vadd.f32 0.0, %v3596
        %v3598 = vpop.f32.mrf.mxu0
        %v3599 = vadd.f32 0.0, %v3598
        %3600 = vmatmul.bf16.gmra.mxu0 %v3528
        %v3601 = vpop.f32.mrf.mxu0
        %v3602 = vadd.f32 0.0, %v3601
        %v3603 = vpop.f32.mrf.mxu0
        %v3604 = vadd.f32 0.0, %v3603
        %3605 = vmatmul.bf16.gmra.mxu0 %v3531
        %v3606 = vpop.f32.mrf.mxu0
        %v3607 = vadd.f32 0.0, %v3606
        %v3608 = vpop.f32.mrf.mxu0
        %v3609 = vadd.f32 0.0, %v3608
        %3610 = vmatmul.bf16.gmra.mxu0 %v3534
        %v3611 = vpop.f32.mrf.mxu0
        %v3612 = vadd.f32 0.0, %v3611
        %v3613 = vpop.f32.mrf.mxu0
        %v3614 = vadd.f32 0.0, %v3613
        %3615 = vmatmul.bf16.gmra.mxu0 %v3537
        %v3616 = vpop.f32.mrf.mxu0
        %v3617 = vadd.f32 0.0, %v3616
        %v3618 = vpop.f32.mrf.mxu0
        %v3619 = vadd.f32 0.0, %v3618
        %3620 = vmatmul.bf16.gmra.mxu0 %v3540
        %v3621 = vpop.f32.mrf.mxu0
        %v3622 = vadd.f32 0.0, %v3621
        %v3623 = vpop.f32.mrf.mxu0
        %v3624 = vadd.f32 0.0, %v3623
        %3625 = vmatmul.bf16.gmra.mxu0 %v3543
        %v3626 = vpop.f32.mrf.mxu0
        %v3627 = vadd.f32 0.0, %v3626
        %v3628 = vpop.f32.mrf.mxu0
        %v3629 = vadd.f32 0.0, %v3628
        %3630 = vmatmul.bf16.gmra.mxu0 %v3546
        %v3631 = vpop.f32.mrf.mxu0
        %v3632 = vadd.f32 0.0, %v3631
        %v3633 = vpop.f32.mrf.mxu0
        %v3634 = vadd.f32 0.0, %v3633
        %3635 = vmatmul.bf16.gmra.mxu0 %v3549
        %v3636 = vpop.f32.mrf.mxu0
        %v3637 = vadd.f32 0.0, %v3636
        %v3638 = vpop.f32.mrf.mxu0
        %v3639 = vadd.f32 0.0, %v3638
        %3640 = vmatmul.bf16.gmra.mxu0 %v3552
        %v3641 = vpop.f32.mrf.mxu0
        %v3642 = vadd.f32 0.0, %v3641
        %v3643 = vpop.f32.mrf.mxu0
        %v3644 = vadd.f32 0.0, %v3643
        %3645 = vdwg.mxu0
        %v3646 = vadd.f32 %v3392, %v3567
        %v3647 = vadd.f32 %v3393, %v3569
        %v3648 = vadd.f32 %v3394, %v3572
        %v3649 = vadd.f32 %v3395, %v3574
        %v3650 = vadd.f32 %v3396, %v3577
        %v3651 = vadd.f32 %v3397, %v3579
        %v3652 = vadd.f32 %v3398, %v3582
        %v3653 = vadd.f32 %v3399, %v3584
        %v3654 = vadd.f32 %v3400, %v3587
        %v3655 = vadd.f32 %v3401, %v3589
        %v3656 = vadd.f32 %v3402, %v3592
        %v3657 = vadd.f32 %v3403, %v3594
        %v3658 = vadd.f32 %v3404, %v3597
        %v3659 = vadd.f32 %v3405, %v3599
        %v3660 = vadd.f32 %v3406, %v3602
        %v3661 = vadd.f32 %v3407, %v3604
        %v3662 = vadd.f32 %v3408, %v3607
        %v3663 = vadd.f32 %v3409, %v3609
        %v3664 = vadd.f32 %v3410, %v3612
        %v3665 = vadd.f32 %v3411, %v3614
        %v3666 = vadd.f32 %v3412, %v3617
        %v3667 = vadd.f32 %v3413, %v3619
        %v3668 = vadd.f32 %v3414, %v3622
        %v3669 = vadd.f32 %v3415, %v3624
        %v3670 = vadd.f32 %v3416, %v3627
        %v3671 = vadd.f32 %v3417, %v3629
        %v3672 = vadd.f32 %v3418, %v3632
        %v3673 = vadd.f32 %v3419, %v3634
        %v3674 = vadd.f32 %v3420, %v3637
        %v3675 = vadd.f32 %v3421, %v3639
        %v3676 = vadd.f32 %v3422, %v3642
        %v3677 = vadd.f32 %v3423, %v3644
        %3678 = vst [vmem:[#allocation2] sm:$0xff] %v3646
        %3679 = vst [vmem:[#allocation2 + $0x8] sm:$0xff] %v3647
        %3680 = vst [vmem:[#allocation2 + $0x10] sm:$0xff] %v3648
        %3681 = vst [vmem:[#allocation2 + $0x18] sm:$0xff] %v3649
        %3682 = vst [vmem:[#allocation2 + $0x20] sm:$0xff] %v3650
        %3683 = vst [vmem:[#allocation2 + $0x28] sm:$0xff] %v3651
        %3684 = vst [vmem:[#allocation2 + $0x30] sm:$0xff] %v3652
        %3685 = vst [vmem:[#allocation2 + $0x38] sm:$0xff] %v3653
        %3686 = vst [vmem:[#allocation2 + $0x40] sm:$0xff] %v3654
        %3687 = vst [vmem:[#allocation2 + $0x48] sm:$0xff] %v3655
        %3688 = vst [vmem:[#allocation2 + $0x50] sm:$0xff] %v3656
        %3689 = vst [vmem:[#allocation2 + $0x58] sm:$0xff] %v3657
        %3690 = vst [vmem:[#allocation2 + $0x60] sm:$0xff] %v3658
        %3691 = vst [vmem:[#allocation2 + $0x68] sm:$0xff] %v3659
        %3692 = vst [vmem:[#allocation2 + $0x70] sm:$0xff] %v3660
        %3693 = vst [vmem:[#allocation2 + $0x78] sm:$0xff] %v3661
        %3694 = vst [vmem:[#allocation2 + $0x80] sm:$0xff] %v3662
        %3695 = vst [vmem:[#allocation2 + $0x88] sm:$0xff] %v3663
        %3696 = vst [vmem:[#allocation2 + $0x90] sm:$0xff] %v3664
        %3697 = vst [vmem:[#allocation2 + $0x98] sm:$0xff] %v3665
        %3698 = vst [vmem:[#allocation2 + $0xa0] sm:$0xff] %v3666
        %3699 = vst [vmem:[#allocation2 + $0xa8] sm:$0xff] %v3667
        %3700 = vst [vmem:[#allocation2 + $0xb0] sm:$0xff] %v3668
        %3701 = vst [vmem:[#allocation2 + $0xb8] sm:$0xff] %v3669
        %3702 = vst [vmem:[#allocation2 + $0xc0] sm:$0xff] %v3670
        %3703 = vst [vmem:[#allocation2 + $0xc8] sm:$0xff] %v3671
        %3704 = vst [vmem:[#allocation2 + $0xd0] sm:$0xff] %v3672
        %3705 = vst [vmem:[#allocation2 + $0xd8] sm:$0xff] %v3673
        %3706 = vst [vmem:[#allocation2 + $0xe0] sm:$0xff] %v3674
        %3707 = vst [vmem:[#allocation2 + $0xe8] sm:$0xff] %v3675
        %3708 = vst [vmem:[#allocation2 + $0xf0] sm:$0xff] %v3676
        %3709 = vst [vmem:[#allocation2 + $0xf8] sm:$0xff] %v3677
        %v3710 = vld [vmem:[%s3359] sm:$0xf]
        %v3711 = vld [vmem:[%s3359 + $0x4] sm:$0xf]
        %v3712 = vld [vmem:[%s3359 + $0x8] sm:$0x1]
        %v3713 = vld [vmem:[%s3359 + $0xc] sm:$0xf]
        %v3714 = vld [vmem:[%s3359 + $0x10] sm:$0xf]
        %v3715 = vld [vmem:[%s3359 + $0x14] sm:$0x1]
        %v3716 = vld [vmem:[%s3359 + $0x18] sm:$0xf]
        %v3717 = vld [vmem:[%s3359 + $0x1c] sm:$0xf]
        %v3718 = vld [vmem:[%s3359 + $0x20] sm:$0x1]
        %v3719 = vld [vmem:[%s3359 + $0x24] sm:$0xf]
        %v3720 = vld [vmem:[%s3359 + $0x28] sm:$0xf]
        %v3721 = vld [vmem:[%s3359 + $0x2c] sm:$0x1]
        %v3722 = vld [vmem:[%s3359 + $0x30] sm:$0xf]
        %v3723 = vld [vmem:[%s3359 + $0x34] sm:$0xf]
        %v3724 = vld [vmem:[%s3359 + $0x38] sm:$0x1]
        %v3725 = vld [vmem:[%s3359 + $0x3c] sm:$0xf]
        %v3726 = vld [vmem:[%s3359 + $0x40] sm:$0xf]
        %v3727 = vld [vmem:[%s3359 + $0x44] sm:$0x1]
        %v3728 = vld [vmem:[%s3359 + $0x48] sm:$0xf]
        %v3729 = vld [vmem:[%s3359 + $0x4c] sm:$0xf]
        %v3730 = vld [vmem:[%s3359 + $0x50] sm:$0x1]
        %v3731 = vld [vmem:[%s3359 + $0x54] sm:$0xf]
        %v3732 = vld [vmem:[%s3359 + $0x58] sm:$0xf]
        %v3733 = vld [vmem:[%s3359 + $0x5c] sm:$0x1]
        %v3734 = vld [vmem:[%s3359 + $0x60] sm:$0xf]
        %v3735 = vld [vmem:[%s3359 + $0x64] sm:$0xf]
        %v3736 = vld [vmem:[%s3359 + $0x68] sm:$0x1]
        %v3737 = vld [vmem:[%s3359 + $0x6c] sm:$0xf]
        %v3738 = vld [vmem:[%s3359 + $0x70] sm:$0xf]
        %v3739 = vld [vmem:[%s3359 + $0x74] sm:$0x1]
        %v3740 = vld [vmem:[%s3359 + $0x78] sm:$0xf]
        %v3741 = vld [vmem:[%s3359 + $0x7c] sm:$0xf]
        %v3742 = vld [vmem:[%s3359 + $0x80] sm:$0x1]
        %v3743 = vld [vmem:[%s3359 + $0x84] sm:$0xf]
        %v3744 = vld [vmem:[%s3359 + $0x88] sm:$0xf]
        %v3745 = vld [vmem:[%s3359 + $0x8c] sm:$0x1]
        %v3746 = vld [vmem:[%s3359 + $0x90] sm:$0xf]
        %v3747 = vld [vmem:[%s3359 + $0x94] sm:$0xf]
        %v3748 = vld [vmem:[%s3359 + $0x98] sm:$0x1]
        %v3749 = vld [vmem:[%s3359 + $0x9c] sm:$0xf]
        %v3750 = vld [vmem:[%s3359 + $0xa0] sm:$0xf]
        %v3751 = vld [vmem:[%s3359 + $0xa4] sm:$0x1]
        %v3752 = vld [vmem:[%s3359 + $0xa8] sm:$0xf]
        %v3753 = vld [vmem:[%s3359 + $0xac] sm:$0xf]
        %v3754 = vld [vmem:[%s3359 + $0xb0] sm:$0x1]
        %v3755 = vld [vmem:[%s3359 + $0xb4] sm:$0xf]
        %v3756 = vld [vmem:[%s3359 + $0xb8] sm:$0xf]
        %v3757 = vld [vmem:[%s3359 + $0xbc] sm:$0x1]
        %v3758 = vld [vmem:[#allocation2] sm:$0xff]
        %v3759 = vld [vmem:[#allocation2 + $0x8] sm:$0xff]
        %v3760 = vld [vmem:[#allocation2 + $0x10] sm:$0xff]
        %v3761 = vld [vmem:[#allocation2 + $0x18] sm:$0xff]
        %v3762 = vld [vmem:[#allocation2 + $0x20] sm:$0xff]
        %v3763 = vld [vmem:[#allocation2 + $0x28] sm:$0xff]
        %v3764 = vld [vmem:[#allocation2 + $0x30] sm:$0xff]
        %v3765 = vld [vmem:[#allocation2 + $0x38] sm:$0xff]
        %v3766 = vld [vmem:[#allocation2 + $0x40] sm:$0xff]
        %v3767 = vld [vmem:[#allocation2 + $0x48] sm:$0xff]
        %v3768 = vld [vmem:[#allocation2 + $0x50] sm:$0xff]
        %v3769 = vld [vmem:[#allocation2 + $0x58] sm:$0xff]
        %v3770 = vld [vmem:[#allocation2 + $0x60] sm:$0xff]
        %v3771 = vld [vmem:[#allocation2 + $0x68] sm:$0xff]
        %v3772 = vld [vmem:[#allocation2 + $0x70] sm:$0xff]
        %v3773 = vld [vmem:[#allocation2 + $0x78] sm:$0xff]
        %v3774 = vld [vmem:[#allocation2 + $0x80] sm:$0xff]
        %v3775 = vld [vmem:[#allocation2 + $0x88] sm:$0xff]
        %v3776 = vld [vmem:[#allocation2 + $0x90] sm:$0xff]
        %v3777 = vld [vmem:[#allocation2 + $0x98] sm:$0xff]
        %v3778 = vld [vmem:[#allocation2 + $0xa0] sm:$0xff]
        %v3779 = vld [vmem:[#allocation2 + $0xa8] sm:$0xff]
        %v3780 = vld [vmem:[#allocation2 + $0xb0] sm:$0xff]
        %v3781 = vld [vmem:[#allocation2 + $0xb8] sm:$0xff]
        %v3782 = vld [vmem:[#allocation2 + $0xc0] sm:$0xff]
        %v3783 = vld [vmem:[#allocation2 + $0xc8] sm:$0xff]
        %v3784 = vld [vmem:[#allocation2 + $0xd0] sm:$0xff]
        %v3785 = vld [vmem:[#allocation2 + $0xd8] sm:$0xff]
        %v3786 = vld [vmem:[#allocation2 + $0xe0] sm:$0xff]
        %v3787 = vld [vmem:[#allocation2 + $0xe8] sm:$0xff]
        %v3788 = vld [vmem:[#allocation2 + $0xf0] sm:$0xff]
        %v3789 = vld [vmem:[#allocation2 + $0xf8] sm:$0xff]
        %v3791 = vshrl.u32 %v3710, 16
        %v3793 = vrot.slane %v3791, 4
        %v3794 = vshll.u32 %v3710, 16
        %v3796 = vrot.slane %v3794, 5
        %v3797 = vor.u32 %v3793, %v3796
        %v3798 = vrot.slane %v3797, 4
        %v3800 = vshll.u32 %v3711, 16
        %v3802 = vrot.slane %v3800, 5
        %v3803 = vsel %vm654, %v3798, %v3802
        %v3804 = vshrl.u32 %v3711, 16
        %v3806 = vrot.slane %v3804, 4
        %v3807 = vor.u32 %v3806, %v3802
        %v3808 = vrot.slane %v3807, 4
        %v3810 = vshll.u32 %v3712, 16
        %v3812 = vrot.slane %v3810, 5
        %v3813 = vsel %vm654, %v3808, %v3812
        %v3815 = vshrl.u32 %v3713, 16
        %v3817 = vrot.slane %v3815, 4
        %v3818 = vshll.u32 %v3713, 16
        %v3820 = vrot.slane %v3818, 5
        %v3821 = vor.u32 %v3817, %v3820
        %v3822 = vrot.slane %v3821, 4
        %v3824 = vshll.u32 %v3714, 16
        %v3826 = vrot.slane %v3824, 5
        %v3827 = vsel %vm654, %v3822, %v3826
        %v3828 = vshrl.u32 %v3714, 16
        %v3830 = vrot.slane %v3828, 4
        %v3831 = vor.u32 %v3830, %v3826
        %v3832 = vrot.slane %v3831, 4
        %v3834 = vshll.u32 %v3715, 16
        %v3836 = vrot.slane %v3834, 5
        %v3837 = vsel %vm654, %v3832, %v3836
        %v3839 = vshrl.u32 %v3716, 16
        %v3841 = vrot.slane %v3839, 4
        %v3842 = vshll.u32 %v3716, 16
        %v3844 = vrot.slane %v3842, 5
        %v3845 = vor.u32 %v3841, %v3844
        %v3846 = vrot.slane %v3845, 4
        %v3848 = vshll.u32 %v3717, 16
        %v3850 = vrot.slane %v3848, 5
        %v3851 = vsel %vm654, %v3846, %v3850
        %v3852 = vshrl.u32 %v3717, 16
        %v3854 = vrot.slane %v3852, 4
        %v3855 = vor.u32 %v3854, %v3850
        %v3856 = vrot.slane %v3855, 4
        %v3858 = vshll.u32 %v3718, 16
        %v3860 = vrot.slane %v3858, 5
        %v3861 = vsel %vm654, %v3856, %v3860
        %v3863 = vshrl.u32 %v3719, 16
        %v3865 = vrot.slane %v3863, 4
        %v3866 = vshll.u32 %v3719, 16
        %v3868 = vrot.slane %v3866, 5
        %v3869 = vor.u32 %v3865, %v3868
        %v3870 = vrot.slane %v3869, 4
        %v3872 = vshll.u32 %v3720, 16
        %v3874 = vrot.slane %v3872, 5
        %v3875 = vsel %vm654, %v3870, %v3874
        %v3876 = vshrl.u32 %v3720, 16
        %v3878 = vrot.slane %v3876, 4
        %v3879 = vor.u32 %v3878, %v3874
        %v3880 = vrot.slane %v3879, 4
        %v3882 = vshll.u32 %v3721, 16
        %v3884 = vrot.slane %v3882, 5
        %v3885 = vsel %vm654, %v3880, %v3884
        %v3887 = vshrl.u32 %v3722, 16
        %v3889 = vrot.slane %v3887, 4
        %v3890 = vshll.u32 %v3722, 16
        %v3892 = vrot.slane %v3890, 5
        %v3893 = vor.u32 %v3889, %v3892
        %v3894 = vrot.slane %v3893, 4
        %v3896 = vshll.u32 %v3723, 16
        %v3898 = vrot.slane %v3896, 5
        %v3899 = vsel %vm654, %v3894, %v3898
        %v3900 = vshrl.u32 %v3723, 16
        %v3902 = vrot.slane %v3900, 4
        %v3903 = vor.u32 %v3902, %v3898
        %v3904 = vrot.slane %v3903, 4
        %v3906 = vshll.u32 %v3724, 16
        %v3908 = vrot.slane %v3906, 5
        %v3909 = vsel %vm654, %v3904, %v3908
        %v3911 = vshrl.u32 %v3725, 16
        %v3913 = vrot.slane %v3911, 4
        %v3914 = vshll.u32 %v3725, 16
        %v3916 = vrot.slane %v3914, 5
        %v3917 = vor.u32 %v3913, %v3916
        %v3918 = vrot.slane %v3917, 4
        %v3920 = vshll.u32 %v3726, 16
        %v3922 = vrot.slane %v3920, 5
        %v3923 = vsel %vm654, %v3918, %v3922
        %v3924 = vshrl.u32 %v3726, 16
        %v3926 = vrot.slane %v3924, 4
        %v3927 = vor.u32 %v3926, %v3922
        %v3928 = vrot.slane %v3927, 4
        %v3930 = vshll.u32 %v3727, 16
        %v3932 = vrot.slane %v3930, 5
        %v3933 = vsel %vm654, %v3928, %v3932
        %v3935 = vshrl.u32 %v3728, 16
        %v3937 = vrot.slane %v3935, 4
        %v3938 = vshll.u32 %v3728, 16
        %v3940 = vrot.slane %v3938, 5
        %v3941 = vor.u32 %v3937, %v3940
        %v3942 = vrot.slane %v3941, 4
        %v3944 = vshll.u32 %v3729, 16
        %v3946 = vrot.slane %v3944, 5
        %v3947 = vsel %vm654, %v3942, %v3946
        %v3948 = vshrl.u32 %v3729, 16
        %v3950 = vrot.slane %v3948, 4
        %v3951 = vor.u32 %v3950, %v3946
        %v3952 = vrot.slane %v3951, 4
        %v3954 = vshll.u32 %v3730, 16
        %v3956 = vrot.slane %v3954, 5
        %v3957 = vsel %vm654, %v3952, %v3956
        %v3959 = vshrl.u32 %v3731, 16
        %v3961 = vrot.slane %v3959, 4
        %v3962 = vshll.u32 %v3731, 16
        %v3964 = vrot.slane %v3962, 5
        %v3965 = vor.u32 %v3961, %v3964
        %v3966 = vrot.slane %v3965, 4
        %v3968 = vshll.u32 %v3732, 16
        %v3970 = vrot.slane %v3968, 5
        %v3971 = vsel %vm654, %v3966, %v3970
        %v3972 = vshrl.u32 %v3732, 16
        %v3974 = vrot.slane %v3972, 4
        %v3975 = vor.u32 %v3974, %v3970
        %v3976 = vrot.slane %v3975, 4
        %v3978 = vshll.u32 %v3733, 16
        %v3980 = vrot.slane %v3978, 5
        %v3981 = vsel %vm654, %v3976, %v3980
        %v3983 = vshrl.u32 %v3734, 16
        %v3985 = vrot.slane %v3983, 4
        %v3986 = vshll.u32 %v3734, 16
        %v3988 = vrot.slane %v3986, 5
        %v3989 = vor.u32 %v3985, %v3988
        %v3990 = vrot.slane %v3989, 4
        %v3992 = vshll.u32 %v3735, 16
        %v3994 = vrot.slane %v3992, 5
        %v3995 = vsel %vm654, %v3990, %v3994
        %v3996 = vshrl.u32 %v3735, 16
        %v3998 = vrot.slane %v3996, 4
        %v3999 = vor.u32 %v3998, %v3994
        %v4000 = vrot.slane %v3999, 4
        %v4002 = vshll.u32 %v3736, 16
        %v4004 = vrot.slane %v4002, 5
        %v4005 = vsel %vm654, %v4000, %v4004
        %v4007 = vshrl.u32 %v3737, 16
        %v4009 = vrot.slane %v4007, 4
        %v4010 = vshll.u32 %v3737, 16
        %v4012 = vrot.slane %v4010, 5
        %v4013 = vor.u32 %v4009, %v4012
        %v4014 = vrot.slane %v4013, 4
        %v4016 = vshll.u32 %v3738, 16
        %v4018 = vrot.slane %v4016, 5
        %v4019 = vsel %vm654, %v4014, %v4018
        %v4020 = vshrl.u32 %v3738, 16
        %v4022 = vrot.slane %v4020, 4
        %v4023 = vor.u32 %v4022, %v4018
        %v4024 = vrot.slane %v4023, 4
        %v4026 = vshll.u32 %v3739, 16
        %v4028 = vrot.slane %v4026, 5
        %v4029 = vsel %vm654, %v4024, %v4028
        %v4031 = vshrl.u32 %v3740, 16
        %v4033 = vrot.slane %v4031, 4
        %v4034 = vshll.u32 %v3740, 16
        %v4036 = vrot.slane %v4034, 5
        %v4037 = vor.u32 %v4033, %v4036
        %v4038 = vrot.slane %v4037, 4
        %v4040 = vshll.u32 %v3741, 16
        %v4042 = vrot.slane %v4040, 5
        %v4043 = vsel %vm654, %v4038, %v4042
        %v4044 = vshrl.u32 %v3741, 16
        %v4046 = vrot.slane %v4044, 4
        %v4047 = vor.u32 %v4046, %v4042
        %v4048 = vrot.slane %v4047, 4
        %v4050 = vshll.u32 %v3742, 16
        %v4052 = vrot.slane %v4050, 5
        %v4053 = vsel %vm654, %v4048, %v4052
        %v4055 = vshrl.u32 %v3743, 16
        %v4057 = vrot.slane %v4055, 4
        %v4058 = vshll.u32 %v3743, 16
        %v4060 = vrot.slane %v4058, 5
        %v4061 = vor.u32 %v4057, %v4060
        %v4062 = vrot.slane %v4061, 4
        %v4064 = vshll.u32 %v3744, 16
        %v4066 = vrot.slane %v4064, 5
        %v4067 = vsel %vm654, %v4062, %v4066
        %v4068 = vshrl.u32 %v3744, 16
        %v4070 = vrot.slane %v4068, 4
        %v4071 = vor.u32 %v4070, %v4066
        %v4072 = vrot.slane %v4071, 4
        %v4074 = vshll.u32 %v3745, 16
        %v4076 = vrot.slane %v4074, 5
        %v4077 = vsel %vm654, %v4072, %v4076
        %v4079 = vshrl.u32 %v3746, 16
        %v4081 = vrot.slane %v4079, 4
        %v4082 = vshll.u32 %v3746, 16
        %v4084 = vrot.slane %v4082, 5
        %v4085 = vor.u32 %v4081, %v4084
        %v4086 = vrot.slane %v4085, 4
        %v4088 = vshll.u32 %v3747, 16
        %v4090 = vrot.slane %v4088, 5
        %v4091 = vsel %vm654, %v4086, %v4090
        %v4092 = vshrl.u32 %v3747, 16
        %v4094 = vrot.slane %v4092, 4
        %v4095 = vor.u32 %v4094, %v4090
        %v4096 = vrot.slane %v4095, 4
        %v4098 = vshll.u32 %v3748, 16
        %v4100 = vrot.slane %v4098, 5
        %v4101 = vsel %vm654, %v4096, %v4100
        %v4103 = vshrl.u32 %v3749, 16
        %v4105 = vrot.slane %v4103, 4
        %v4106 = vshll.u32 %v3749, 16
        %v4108 = vrot.slane %v4106, 5
        %v4109 = vor.u32 %v4105, %v4108
        %v4110 = vrot.slane %v4109, 4
        %v4112 = vshll.u32 %v3750, 16
        %v4114 = vrot.slane %v4112, 5
        %v4115 = vsel %vm654, %v4110, %v4114
        %v4116 = vshrl.u32 %v3750, 16
        %v4118 = vrot.slane %v4116, 4
        %v4119 = vor.u32 %v4118, %v4114
        %v4120 = vrot.slane %v4119, 4
        %v4122 = vshll.u32 %v3751, 16
        %v4124 = vrot.slane %v4122, 5
        %v4125 = vsel %vm654, %v4120, %v4124
        %v4127 = vshrl.u32 %v3752, 16
        %v4129 = vrot.slane %v4127, 4
        %v4130 = vshll.u32 %v3752, 16
        %v4132 = vrot.slane %v4130, 5
        %v4133 = vor.u32 %v4129, %v4132
        %v4134 = vrot.slane %v4133, 4
        %v4136 = vshll.u32 %v3753, 16
        %v4138 = vrot.slane %v4136, 5
        %v4139 = vsel %vm654, %v4134, %v4138
        %v4140 = vshrl.u32 %v3753, 16
        %v4142 = vrot.slane %v4140, 4
        %v4143 = vor.u32 %v4142, %v4138
        %v4144 = vrot.slane %v4143, 4
        %v4146 = vshll.u32 %v3754, 16
        %v4148 = vrot.slane %v4146, 5
        %v4149 = vsel %vm654, %v4144, %v4148
        %v4151 = vshrl.u32 %v3755, 16
        %v4153 = vrot.slane %v4151, 4
        %v4154 = vshll.u32 %v3755, 16
        %v4156 = vrot.slane %v4154, 5
        %v4157 = vor.u32 %v4153, %v4156
        %v4158 = vrot.slane %v4157, 4
        %v4160 = vshll.u32 %v3756, 16
        %v4162 = vrot.slane %v4160, 5
        %v4163 = vsel %vm654, %v4158, %v4162
        %v4164 = vshrl.u32 %v3756, 16
        %v4166 = vrot.slane %v4164, 4
        %v4167 = vor.u32 %v4166, %v4162
        %v4168 = vrot.slane %v4167, 4
        %v4170 = vshll.u32 %v3757, 16
        %v4172 = vrot.slane %v4170, 5
        %v4173 = vsel %vm654, %v4168, %v4172
        %s4174 = scalar_lea.vmem %s1, 14
        %v4175 = vld [vmem:[%s4174] sm:$0x3]
        %v4176 = vunpack.c.l.b16 %v3803
        %v4177 = vunpack.c.l.b16 %v3813
        %v4178 = vunpack.c.l.b16 %v3827
        %v4179 = vunpack.c.l.b16 %v3837
        %v4180 = vunpack.c.l.b16 %v3851
        %v4181 = vunpack.c.l.b16 %v3861
        %v4182 = vunpack.c.l.b16 %v3875
        %v4183 = vunpack.c.l.b16 %v3885
        %v4184 = vunpack.c.l.b16 %v3899
        %v4185 = vunpack.c.l.b16 %v3909
        %v4186 = vunpack.c.l.b16 %v3923
        %v4187 = vunpack.c.l.b16 %v3933
        %v4188 = vunpack.c.l.b16 %v3947
        %v4189 = vunpack.c.l.b16 %v3957
        %v4190 = vunpack.c.l.b16 %v3971
        %v4191 = vunpack.c.l.b16 %v3981
        %v4192 = vunpack.c.l.b16 %v3995
        %v4193 = vunpack.c.l.b16 %v4005
        %v4194 = vunpack.c.l.b16 %v4019
        %v4195 = vunpack.c.l.b16 %v4029
        %v4196 = vunpack.c.l.b16 %v4043
        %v4197 = vunpack.c.l.b16 %v4053
        %v4198 = vunpack.c.l.b16 %v4067
        %v4199 = vunpack.c.l.b16 %v4077
        %v4200 = vunpack.c.l.b16 %v4091
        %v4201 = vunpack.c.l.b16 %v4101
        %v4202 = vunpack.c.l.b16 %v4115
        %v4203 = vunpack.c.l.b16 %v4125
        %v4204 = vunpack.c.l.b16 %v4139
        %v4205 = vunpack.c.l.b16 %v4149
        %v4206 = vunpack.c.l.b16 %v4163
        %v4207 = vunpack.c.l.b16 %v4173
        %v4208 = vpack.c.b16 %v4177, %v4176
        %v4209 = vpack.c.b16 %v4179, %v4178
        %v4210 = vpack.c.b16 %v4181, %v4180
        %v4211 = vpack.c.b16 %v4183, %v4182
        %v4212 = vpack.c.b16 %v4185, %v4184
        %v4213 = vpack.c.b16 %v4187, %v4186
        %v4214 = vpack.c.b16 %v4189, %v4188
        %v4215 = vpack.c.b16 %v4191, %v4190
        %v4216 = vpack.c.b16 %v4193, %v4192
        %v4217 = vpack.c.b16 %v4195, %v4194
        %v4218 = vpack.c.b16 %v4197, %v4196
        %v4219 = vpack.c.b16 %v4199, %v4198
        %v4220 = vpack.c.b16 %v4201, %v4200
        %v4221 = vpack.c.b16 %v4203, %v4202
        %v4222 = vpack.c.b16 %v4205, %v4204
        %v4223 = vpack.c.b16 %v4207, %v4206
        %v4225 = vsel %vm366, %v4208, 0
        %v4228 = vsel %vm366, %v4209, 0
        %v4231 = vsel %vm366, %v4210, 0
        %v4234 = vsel %vm366, %v4211, 0
        %v4237 = vsel %vm366, %v4212, 0
        %v4240 = vsel %vm366, %v4213, 0
        %v4243 = vsel %vm366, %v4214, 0
        %v4246 = vsel %vm366, %v4215, 0
        %v4249 = vsel %vm366, %v4216, 0
        %v4252 = vsel %vm366, %v4217, 0
        %v4255 = vsel %vm366, %v4218, 0
        %v4258 = vsel %vm366, %v4219, 0
        %v4261 = vsel %vm366, %v4220, 0
        %v4264 = vsel %vm366, %v4221, 0
        %v4267 = vsel %vm366, %v4222, 0
        %v4270 = vsel %vm366, %v4223, 0
        %v4273 = vsel %vm415, %v4175, 0
        %4275 = vmatpush.bf16.msra.mxu0 0
        %4276 = vmatpush.bf16.msra.mxu0 0
        %4277 = vmatpush.bf16.msra.mxu0 0
        %4278 = vmatpush.bf16.msra.mxu0 0
        %4279 = vmatpush.bf16.msra.mxu0 0
        %4280 = vmatpush.bf16.msra.mxu0 0
        %4281 = vmatpush.bf16.msra.mxu0 0
        %4282 = vmatpush.bf16.msra.mxu0 %v4273
        %4283 = vmatmul.bf16.gmra.mxu0 %v4225
        %v4284 = vpop.f32.mrf.mxu0
        %v4285 = vadd.f32 0.0, %v4284
        %v4286 = vpop.f32.mrf.mxu0
        %v4287 = vadd.f32 0.0, %v4286
        %4288 = vmatmul.bf16.gmra.mxu0 %v4228
        %v4289 = vpop.f32.mrf.mxu0
        %v4290 = vadd.f32 0.0, %v4289
        %v4291 = vpop.f32.mrf.mxu0
        %v4292 = vadd.f32 0.0, %v4291
        %4293 = vmatmul.bf16.gmra.mxu0 %v4231
        %v4294 = vpop.f32.mrf.mxu0
        %v4295 = vadd.f32 0.0, %v4294
        %v4296 = vpop.f32.mrf.mxu0
        %v4297 = vadd.f32 0.0, %v4296
        %4298 = vmatmul.bf16.gmra.mxu0 %v4234
        %v4299 = vpop.f32.mrf.mxu0
        %v4300 = vadd.f32 0.0, %v4299
        %v4301 = vpop.f32.mrf.mxu0
        %v4302 = vadd.f32 0.0, %v4301
        %4303 = vmatmul.bf16.gmra.mxu0 %v4237
        %v4304 = vpop.f32.mrf.mxu0
        %v4305 = vadd.f32 0.0, %v4304
        %v4306 = vpop.f32.mrf.mxu0
        %v4307 = vadd.f32 0.0, %v4306
        %4308 = vmatmul.bf16.gmra.mxu0 %v4240
        %v4309 = vpop.f32.mrf.mxu0
        %v4310 = vadd.f32 0.0, %v4309
        %v4311 = vpop.f32.mrf.mxu0
        %v4312 = vadd.f32 0.0, %v4311
        %4313 = vmatmul.bf16.gmra.mxu0 %v4243
        %v4314 = vpop.f32.mrf.mxu0
        %v4315 = vadd.f32 0.0, %v4314
        %v4316 = vpop.f32.mrf.mxu0
        %v4317 = vadd.f32 0.0, %v4316
        %4318 = vmatmul.bf16.gmra.mxu0 %v4246
        %v4319 = vpop.f32.mrf.mxu0
        %v4320 = vadd.f32 0.0, %v4319
        %v4321 = vpop.f32.mrf.mxu0
        %v4322 = vadd.f32 0.0, %v4321
        %4323 = vmatmul.bf16.gmra.mxu0 %v4249
        %v4324 = vpop.f32.mrf.mxu0
        %v4325 = vadd.f32 0.0, %v4324
        %v4326 = vpop.f32.mrf.mxu0
        %v4327 = vadd.f32 0.0, %v4326
        %4328 = vmatmul.bf16.gmra.mxu0 %v4252
        %v4329 = vpop.f32.mrf.mxu0
        %v4330 = vadd.f32 0.0, %v4329
        %v4331 = vpop.f32.mrf.mxu0
        %v4332 = vadd.f32 0.0, %v4331
        %4333 = vmatmul.bf16.gmra.mxu0 %v4255
        %v4334 = vpop.f32.mrf.mxu0
        %v4335 = vadd.f32 0.0, %v4334
        %v4336 = vpop.f32.mrf.mxu0
        %v4337 = vadd.f32 0.0, %v4336
        %4338 = vmatmul.bf16.gmra.mxu0 %v4258
        %v4339 = vpop.f32.mrf.mxu0
        %v4340 = vadd.f32 0.0, %v4339
        %v4341 = vpop.f32.mrf.mxu0
        %v4342 = vadd.f32 0.0, %v4341
        %4343 = vmatmul.bf16.gmra.mxu0 %v4261
        %v4344 = vpop.f32.mrf.mxu0
        %v4345 = vadd.f32 0.0, %v4344
        %v4346 = vpop.f32.mrf.mxu0
        %v4347 = vadd.f32 0.0, %v4346
        %4348 = vmatmul.bf16.gmra.mxu0 %v4264
        %v4349 = vpop.f32.mrf.mxu0
        %v4350 = vadd.f32 0.0, %v4349
        %v4351 = vpop.f32.mrf.mxu0
        %v4352 = vadd.f32 0.0, %v4351
        %4353 = vmatmul.bf16.gmra.mxu0 %v4267
        %v4354 = vpop.f32.mrf.mxu0
        %v4355 = vadd.f32 0.0, %v4354
        %v4356 = vpop.f32.mrf.mxu0
        %v4357 = vadd.f32 0.0, %v4356
        %4358 = vmatmul.bf16.gmra.mxu0 %v4270
        %v4359 = vpop.f32.mrf.mxu0
        %v4360 = vadd.f32 0.0, %v4359
        %v4361 = vpop.f32.mrf.mxu0
        %v4362 = vadd.f32 0.0, %v4361
        %4363 = vdwg.mxu0
        %v4364 = vadd.f32 %v3758, %v4285
        %v4365 = vadd.f32 %v3759, %v4287
        %v4366 = vadd.f32 %v3760, %v4290
        %v4367 = vadd.f32 %v3761, %v4292
        %v4368 = vadd.f32 %v3762, %v4295
        %v4369 = vadd.f32 %v3763, %v4297
        %v4370 = vadd.f32 %v3764, %v4300
        %v4371 = vadd.f32 %v3765, %v4302
        %v4372 = vadd.f32 %v3766, %v4305
        %v4373 = vadd.f32 %v3767, %v4307
        %v4374 = vadd.f32 %v3768, %v4310
        %v4375 = vadd.f32 %v3769, %v4312
        %v4376 = vadd.f32 %v3770, %v4315
        %v4377 = vadd.f32 %v3771, %v4317
        %v4378 = vadd.f32 %v3772, %v4320
        %v4379 = vadd.f32 %v3773, %v4322
        %v4380 = vadd.f32 %v3774, %v4325
        %v4381 = vadd.f32 %v3775, %v4327
        %v4382 = vadd.f32 %v3776, %v4330
        %v4383 = vadd.f32 %v3777, %v4332
        %v4384 = vadd.f32 %v3778, %v4335
        %v4385 = vadd.f32 %v3779, %v4337
        %v4386 = vadd.f32 %v3780, %v4340
        %v4387 = vadd.f32 %v3781, %v4342
        %v4388 = vadd.f32 %v3782, %v4345
        %v4389 = vadd.f32 %v3783, %v4347
        %v4390 = vadd.f32 %v3784, %v4350
        %v4391 = vadd.f32 %v3785, %v4352
        %v4392 = vadd.f32 %v3786, %v4355
        %v4393 = vadd.f32 %v3787, %v4357
        %v4394 = vadd.f32 %v3788, %v4360
        %v4395 = vadd.f32 %v3789, %v4362
        %4396 = vst [vmem:[#allocation2] sm:$0xff] %v4364
        %4397 = vst [vmem:[#allocation2 + $0x8] sm:$0xff] %v4365
        %4398 = vst [vmem:[#allocation2 + $0x10] sm:$0xff] %v4366
        %4399 = vst [vmem:[#allocation2 + $0x18] sm:$0xff] %v4367
        %4400 = vst [vmem:[#allocation2 + $0x20] sm:$0xff] %v4368
        %4401 = vst [vmem:[#allocation2 + $0x28] sm:$0xff] %v4369
        %4402 = vst [vmem:[#allocation2 + $0x30] sm:$0xff] %v4370
        %4403 = vst [vmem:[#allocation2 + $0x38] sm:$0xff] %v4371
        %4404 = vst [vmem:[#allocation2 + $0x40] sm:$0xff] %v4372
        %4405 = vst [vmem:[#allocation2 + $0x48] sm:$0xff] %v4373
        %4406 = vst [vmem:[#allocation2 + $0x50] sm:$0xff] %v4374
        %4407 = vst [vmem:[#allocation2 + $0x58] sm:$0xff] %v4375
        %4408 = vst [vmem:[#allocation2 + $0x60] sm:$0xff] %v4376
        %4409 = vst [vmem:[#allocation2 + $0x68] sm:$0xff] %v4377
        %4410 = vst [vmem:[#allocation2 + $0x70] sm:$0xff] %v4378
        %4411 = vst [vmem:[#allocation2 + $0x78] sm:$0xff] %v4379
        %4412 = vst [vmem:[#allocation2 + $0x80] sm:$0xff] %v4380
        %4413 = vst [vmem:[#allocation2 + $0x88] sm:$0xff] %v4381
        %4414 = vst [vmem:[#allocation2 + $0x90] sm:$0xff] %v4382
        %4415 = vst [vmem:[#allocation2 + $0x98] sm:$0xff] %v4383
        %4416 = vst [vmem:[#allocation2 + $0xa0] sm:$0xff] %v4384
        %4417 = vst [vmem:[#allocation2 + $0xa8] sm:$0xff] %v4385
        %4418 = vst [vmem:[#allocation2 + $0xb0] sm:$0xff] %v4386
        %4419 = vst [vmem:[#allocation2 + $0xb8] sm:$0xff] %v4387
        %4420 = vst [vmem:[#allocation2 + $0xc0] sm:$0xff] %v4388
        %4421 = vst [vmem:[#allocation2 + $0xc8] sm:$0xff] %v4389
        %4422 = vst [vmem:[#allocation2 + $0xd0] sm:$0xff] %v4390
        %4423 = vst [vmem:[#allocation2 + $0xd8] sm:$0xff] %v4391
        %4424 = vst [vmem:[#allocation2 + $0xe0] sm:$0xff] %v4392
        %4425 = vst [vmem:[#allocation2 + $0xe8] sm:$0xff] %v4393
        %4426 = vst [vmem:[#allocation2 + $0xf0] sm:$0xff] %v4394
        %4427 = vst [vmem:[#allocation2 + $0xf8] sm:$0xff] %v4395
        %v4428 = vld [vmem:[%s3359] sm:$0xe]
        %v4429 = vld [vmem:[%s3359 + $0x4] sm:$0xf]
        %v4430 = vld [vmem:[%s3359 + $0x8] sm:$0x1]
        %v4431 = vld [vmem:[%s3359 + $0xc] sm:$0xe]
        %v4432 = vld [vmem:[%s3359 + $0x10] sm:$0xf]
        %v4433 = vld [vmem:[%s3359 + $0x14] sm:$0x1]
        %v4434 = vld [vmem:[%s3359 + $0x18] sm:$0xe]
        %v4435 = vld [vmem:[%s3359 + $0x1c] sm:$0xf]
        %v4436 = vld [vmem:[%s3359 + $0x20] sm:$0x1]
        %v4437 = vld [vmem:[%s3359 + $0x24] sm:$0xe]
        %v4438 = vld [vmem:[%s3359 + $0x28] sm:$0xf]
        %v4439 = vld [vmem:[%s3359 + $0x2c] sm:$0x1]
        %v4440 = vld [vmem:[%s3359 + $0x30] sm:$0xe]
        %v4441 = vld [vmem:[%s3359 + $0x34] sm:$0xf]
        %v4442 = vld [vmem:[%s3359 + $0x38] sm:$0x1]
        %v4443 = vld [vmem:[%s3359 + $0x3c] sm:$0xe]
        %v4444 = vld [vmem:[%s3359 + $0x40] sm:$0xf]
        %v4445 = vld [vmem:[%s3359 + $0x44] sm:$0x1]
        %v4446 = vld [vmem:[%s3359 + $0x48] sm:$0xe]
        %v4447 = vld [vmem:[%s3359 + $0x4c] sm:$0xf]
        %v4448 = vld [vmem:[%s3359 + $0x50] sm:$0x1]
        %v4449 = vld [vmem:[%s3359 + $0x54] sm:$0xe]
        %v4450 = vld [vmem:[%s3359 + $0x58] sm:$0xf]
        %v4451 = vld [vmem:[%s3359 + $0x5c] sm:$0x1]
        %v4452 = vld [vmem:[%s3359 + $0x60] sm:$0xe]
        %v4453 = vld [vmem:[%s3359 + $0x64] sm:$0xf]
        %v4454 = vld [vmem:[%s3359 + $0x68] sm:$0x1]
        %v4455 = vld [vmem:[%s3359 + $0x6c] sm:$0xe]
        %v4456 = vld [vmem:[%s3359 + $0x70] sm:$0xf]
        %v4457 = vld [vmem:[%s3359 + $0x74] sm:$0x1]
        %v4458 = vld [vmem:[%s3359 + $0x78] sm:$0xe]
        %v4459 = vld [vmem:[%s3359 + $0x7c] sm:$0xf]
        %v4460 = vld [vmem:[%s3359 + $0x80] sm:$0x1]
        %v4461 = vld [vmem:[%s3359 + $0x84] sm:$0xe]
        %v4462 = vld [vmem:[%s3359 + $0x88] sm:$0xf]
        %v4463 = vld [vmem:[%s3359 + $0x8c] sm:$0x1]
        %v4464 = vld [vmem:[%s3359 + $0x90] sm:$0xe]
        %v4465 = vld [vmem:[%s3359 + $0x94] sm:$0xf]
        %v4466 = vld [vmem:[%s3359 + $0x98] sm:$0x1]
        %v4467 = vld [vmem:[%s3359 + $0x9c] sm:$0xe]
        %v4468 = vld [vmem:[%s3359 + $0xa0] sm:$0xf]
        %v4469 = vld [vmem:[%s3359 + $0xa4] sm:$0x1]
        %v4470 = vld [vmem:[%s3359 + $0xa8] sm:$0xe]
        %v4471 = vld [vmem:[%s3359 + $0xac] sm:$0xf]
        %v4472 = vld [vmem:[%s3359 + $0xb0] sm:$0x1]
        %v4473 = vld [vmem:[%s3359 + $0xb4] sm:$0xe]
        %v4474 = vld [vmem:[%s3359 + $0xb8] sm:$0xf]
        %v4475 = vld [vmem:[%s3359 + $0xbc] sm:$0x1]
        %v4476 = vld [vmem:[#allocation2] sm:$0xff]
        %v4477 = vld [vmem:[#allocation2 + $0x8] sm:$0xff]
        %v4478 = vld [vmem:[#allocation2 + $0x10] sm:$0xff]
        %v4479 = vld [vmem:[#allocation2 + $0x18] sm:$0xff]
        %v4480 = vld [vmem:[#allocation2 + $0x20] sm:$0xff]
        %v4481 = vld [vmem:[#allocation2 + $0x28] sm:$0xff]
        %v4482 = vld [vmem:[#allocation2 + $0x30] sm:$0xff]
        %v4483 = vld [vmem:[#allocation2 + $0x38] sm:$0xff]
        %v4484 = vld [vmem:[#allocation2 + $0x40] sm:$0xff]
        %v4485 = vld [vmem:[#allocation2 + $0x48] sm:$0xff]
        %v4486 = vld [vmem:[#allocation2 + $0x50] sm:$0xff]
        %v4487 = vld [vmem:[#allocation2 + $0x58] sm:$0xff]
        %v4488 = vld [vmem:[#allocation2 + $0x60] sm:$0xff]
        %v4489 = vld [vmem:[#allocation2 + $0x68] sm:$0xff]
        %v4490 = vld [vmem:[#allocation2 + $0x70] sm:$0xff]
        %v4491 = vld [vmem:[#allocation2 + $0x78] sm:$0xff]
        %v4492 = vld [vmem:[#allocation2 + $0x80] sm:$0xff]
        %v4493 = vld [vmem:[#allocation2 + $0x88] sm:$0xff]
        %v4494 = vld [vmem:[#allocation2 + $0x90] sm:$0xff]
        %v4495 = vld [vmem:[#allocation2 + $0x98] sm:$0xff]
        %v4496 = vld [vmem:[#allocation2 + $0xa0] sm:$0xff]
        %v4497 = vld [vmem:[#allocation2 + $0xa8] sm:$0xff]
        %v4498 = vld [vmem:[#allocation2 + $0xb0] sm:$0xff]
        %v4499 = vld [vmem:[#allocation2 + $0xb8] sm:$0xff]
        %v4500 = vld [vmem:[#allocation2 + $0xc0] sm:$0xff]
        %v4501 = vld [vmem:[#allocation2 + $0xc8] sm:$0xff]
        %v4502 = vld [vmem:[#allocation2 + $0xd0] sm:$0xff]
        %v4503 = vld [vmem:[#allocation2 + $0xd8] sm:$0xff]
        %v4504 = vld [vmem:[#allocation2 + $0xe0] sm:$0xff]
        %v4505 = vld [vmem:[#allocation2 + $0xe8] sm:$0xff]
        %v4506 = vld [vmem:[#allocation2 + $0xf0] sm:$0xff]
        %v4507 = vld [vmem:[#allocation2 + $0xf8] sm:$0xff]
        %v4556 = vrot.slane %v4428, 5
        %v4557 = vrot.slane %v4556, 4
        %v4558 = vrot.slane %v4429, 5
        %v4559 = vsel %vm1423, %v4557, %v4558
        %v4560 = vrot.slane %v4558, 4
        %v4561 = vrot.slane %v4430, 5
        %v4562 = vsel %vm1423, %v4560, %v4561
        %v4563 = vrot.slane %v4431, 5
        %v4564 = vrot.slane %v4563, 4
        %v4565 = vrot.slane %v4432, 5
        %v4566 = vsel %vm1423, %v4564, %v4565
        %v4567 = vrot.slane %v4565, 4
        %v4568 = vrot.slane %v4433, 5
        %v4569 = vsel %vm1423, %v4567, %v4568
        %v4570 = vrot.slane %v4434, 5
        %v4571 = vrot.slane %v4570, 4
        %v4572 = vrot.slane %v4435, 5
        %v4573 = vsel %vm1423, %v4571, %v4572
        %v4574 = vrot.slane %v4572, 4
        %v4575 = vrot.slane %v4436, 5
        %v4576 = vsel %vm1423, %v4574, %v4575
        %v4577 = vrot.slane %v4437, 5
        %v4578 = vrot.slane %v4577, 4
        %v4579 = vrot.slane %v4438, 5
        %v4580 = vsel %vm1423, %v4578, %v4579
        %v4581 = vrot.slane %v4579, 4
        %v4582 = vrot.slane %v4439, 5
        %v4583 = vsel %vm1423, %v4581, %v4582
        %v4584 = vrot.slane %v4440, 5
        %v4585 = vrot.slane %v4584, 4
        %v4586 = vrot.slane %v4441, 5
        %v4587 = vsel %vm1423, %v4585, %v4586
        %v4588 = vrot.slane %v4586, 4
        %v4589 = vrot.slane %v4442, 5
        %v4590 = vsel %vm1423, %v4588, %v4589
        %v4591 = vrot.slane %v4443, 5
        %v4592 = vrot.slane %v4591, 4
        %v4593 = vrot.slane %v4444, 5
        %v4594 = vsel %vm1423, %v4592, %v4593
        %v4595 = vrot.slane %v4593, 4
        %v4596 = vrot.slane %v4445, 5
        %v4597 = vsel %vm1423, %v4595, %v4596
        %v4598 = vrot.slane %v4446, 5
        %v4599 = vrot.slane %v4598, 4
        %v4600 = vrot.slane %v4447, 5
        %v4601 = vsel %vm1423, %v4599, %v4600
        %v4602 = vrot.slane %v4600, 4
        %v4603 = vrot.slane %v4448, 5
        %v4604 = vsel %vm1423, %v4602, %v4603
        %v4605 = vrot.slane %v4449, 5
        %v4606 = vrot.slane %v4605, 4
        %v4607 = vrot.slane %v4450, 5
        %v4608 = vsel %vm1423, %v4606, %v4607
        %v4609 = vrot.slane %v4607, 4
        %v4610 = vrot.slane %v4451, 5
        %v4611 = vsel %vm1423, %v4609, %v4610
        %v4612 = vrot.slane %v4452, 5
        %v4613 = vrot.slane %v4612, 4
        %v4614 = vrot.slane %v4453, 5
        %v4615 = vsel %vm1423, %v4613, %v4614
        %v4616 = vrot.slane %v4614, 4
        %v4617 = vrot.slane %v4454, 5
        %v4618 = vsel %vm1423, %v4616, %v4617
        %v4619 = vrot.slane %v4455, 5
        %v4620 = vrot.slane %v4619, 4
        %v4621 = vrot.slane %v4456, 5
        %v4622 = vsel %vm1423, %v4620, %v4621
        %v4623 = vrot.slane %v4621, 4
        %v4624 = vrot.slane %v4457, 5
        %v4625 = vsel %vm1423, %v4623, %v4624
        %v4626 = vrot.slane %v4458, 5
        %v4627 = vrot.slane %v4626, 4
        %v4628 = vrot.slane %v4459, 5
        %v4629 = vsel %vm1423, %v4627, %v4628
        %v4630 = vrot.slane %v4628, 4
        %v4631 = vrot.slane %v4460, 5
        %v4632 = vsel %vm1423, %v4630, %v4631
        %v4633 = vrot.slane %v4461, 5
        %v4634 = vrot.slane %v4633, 4
        %v4635 = vrot.slane %v4462, 5
        %v4636 = vsel %vm1423, %v4634, %v4635
        %v4637 = vrot.slane %v4635, 4
        %v4638 = vrot.slane %v4463, 5
        %v4639 = vsel %vm1423, %v4637, %v4638
        %v4640 = vrot.slane %v4464, 5
        %v4641 = vrot.slane %v4640, 4
        %v4642 = vrot.slane %v4465, 5
        %v4643 = vsel %vm1423, %v4641, %v4642
        %v4644 = vrot.slane %v4642, 4
        %v4645 = vrot.slane %v4466, 5
        %v4646 = vsel %vm1423, %v4644, %v4645
        %v4647 = vrot.slane %v4467, 5
        %v4648 = vrot.slane %v4647, 4
        %v4649 = vrot.slane %v4468, 5
        %v4650 = vsel %vm1423, %v4648, %v4649
        %v4651 = vrot.slane %v4649, 4
        %v4652 = vrot.slane %v4469, 5
        %v4653 = vsel %vm1423, %v4651, %v4652
        %v4654 = vrot.slane %v4470, 5
        %v4655 = vrot.slane %v4654, 4
        %v4656 = vrot.slane %v4471, 5
        %v4657 = vsel %vm1423, %v4655, %v4656
        %v4658 = vrot.slane %v4656, 4
        %v4659 = vrot.slane %v4472, 5
        %v4660 = vsel %vm1423, %v4658, %v4659
        %v4661 = vrot.slane %v4473, 5
        %v4662 = vrot.slane %v4661, 4
        %v4663 = vrot.slane %v4474, 5
        %v4664 = vsel %vm1423, %v4662, %v4663
        %v4665 = vrot.slane %v4663, 4
        %v4666 = vrot.slane %v4475, 5
        %v4667 = vsel %vm1423, %v4665, %v4666
        %s4668 = scalar_lea.vmem %s1, 16
        %v4669 = vld [vmem:[%s4668] sm:$0x3]
        %v4670 = vunpack.c.l.b16 %v4559
        %v4671 = vunpack.c.l.b16 %v4562
        %v4672 = vunpack.c.l.b16 %v4566
        %v4673 = vunpack.c.l.b16 %v4569
        %v4674 = vunpack.c.l.b16 %v4573
        %v4675 = vunpack.c.l.b16 %v4576
        %v4676 = vunpack.c.l.b16 %v4580
        %v4677 = vunpack.c.l.b16 %v4583
        %v4678 = vunpack.c.l.b16 %v4587
        %v4679 = vunpack.c.l.b16 %v4590
        %v4680 = vunpack.c.l.b16 %v4594
        %v4681 = vunpack.c.l.b16 %v4597
        %v4682 = vunpack.c.l.b16 %v4601
        %v4683 = vunpack.c.l.b16 %v4604
        %v4684 = vunpack.c.l.b16 %v4608
        %v4685 = vunpack.c.l.b16 %v4611
        %v4686 = vunpack.c.l.b16 %v4615
        %v4687 = vunpack.c.l.b16 %v4618
        %v4688 = vunpack.c.l.b16 %v4622
        %v4689 = vunpack.c.l.b16 %v4625
        %v4690 = vunpack.c.l.b16 %v4629
        %v4691 = vunpack.c.l.b16 %v4632
        %v4692 = vunpack.c.l.b16 %v4636
        %v4693 = vunpack.c.l.b16 %v4639
        %v4694 = vunpack.c.l.b16 %v4643
        %v4695 = vunpack.c.l.b16 %v4646
        %v4696 = vunpack.c.l.b16 %v4650
        %v4697 = vunpack.c.l.b16 %v4653
        %v4698 = vunpack.c.l.b16 %v4657
        %v4699 = vunpack.c.l.b16 %v4660
        %v4700 = vunpack.c.l.b16 %v4664
        %v4701 = vunpack.c.l.b16 %v4667
        %v4702 = vpack.c.b16 %v4671, %v4670
        %v4703 = vpack.c.b16 %v4673, %v4672
        %v4704 = vpack.c.b16 %v4675, %v4674
        %v4705 = vpack.c.b16 %v4677, %v4676
        %v4706 = vpack.c.b16 %v4679, %v4678
        %v4707 = vpack.c.b16 %v4681, %v4680
        %v4708 = vpack.c.b16 %v4683, %v4682
        %v4709 = vpack.c.b16 %v4685, %v4684
        %v4710 = vpack.c.b16 %v4687, %v4686
        %v4711 = vpack.c.b16 %v4689, %v4688
        %v4712 = vpack.c.b16 %v4691, %v4690
        %v4713 = vpack.c.b16 %v4693, %v4692
        %v4714 = vpack.c.b16 %v4695, %v4694
        %v4715 = vpack.c.b16 %v4697, %v4696
        %v4716 = vpack.c.b16 %v4699, %v4698
        %v4717 = vpack.c.b16 %v4701, %v4700
        %v4719 = vsel %vm366, %v4702, 0
        %v4722 = vsel %vm366, %v4703, 0
        %v4725 = vsel %vm366, %v4704, 0
        %v4728 = vsel %vm366, %v4705, 0
        %v4731 = vsel %vm366, %v4706, 0
        %v4734 = vsel %vm366, %v4707, 0
        %v4737 = vsel %vm366, %v4708, 0
        %v4740 = vsel %vm366, %v4709, 0
        %v4743 = vsel %vm366, %v4710, 0
        %v4746 = vsel %vm366, %v4711, 0
        %v4749 = vsel %vm366, %v4712, 0
        %v4752 = vsel %vm366, %v4713, 0
        %v4755 = vsel %vm366, %v4714, 0
        %v4758 = vsel %vm366, %v4715, 0
        %v4761 = vsel %vm366, %v4716, 0
        %v4764 = vsel %vm366, %v4717, 0
        %v4767 = vsel %vm415, %v4669, 0
        %4769 = vmatpush.bf16.msra.mxu0 0
        %4770 = vmatpush.bf16.msra.mxu0 0
        %4771 = vmatpush.bf16.msra.mxu0 0
        %4772 = vmatpush.bf16.msra.mxu0 0
        %4773 = vmatpush.bf16.msra.mxu0 0
        %4774 = vmatpush.bf16.msra.mxu0 0
        %4775 = vmatpush.bf16.msra.mxu0 0
        %4776 = vmatpush.bf16.msra.mxu0 %v4767
        %4777 = vmatmul.bf16.gmra.mxu0 %v4719
        %v4778 = vpop.f32.mrf.mxu0
        %v4779 = vadd.f32 0.0, %v4778
        %v4780 = vpop.f32.mrf.mxu0
        %v4781 = vadd.f32 0.0, %v4780
        %4782 = vmatmul.bf16.gmra.mxu0 %v4722
        %v4783 = vpop.f32.mrf.mxu0
        %v4784 = vadd.f32 0.0, %v4783
        %v4785 = vpop.f32.mrf.mxu0
        %v4786 = vadd.f32 0.0, %v4785
        %4787 = vmatmul.bf16.gmra.mxu0 %v4725
        %v4788 = vpop.f32.mrf.mxu0
        %v4789 = vadd.f32 0.0, %v4788
        %v4790 = vpop.f32.mrf.mxu0
        %v4791 = vadd.f32 0.0, %v4790
        %4792 = vmatmul.bf16.gmra.mxu0 %v4728
        %v4793 = vpop.f32.mrf.mxu0
        %v4794 = vadd.f32 0.0, %v4793
        %v4795 = vpop.f32.mrf.mxu0
        %v4796 = vadd.f32 0.0, %v4795
        %4797 = vmatmul.bf16.gmra.mxu0 %v4731
        %v4798 = vpop.f32.mrf.mxu0
        %v4799 = vadd.f32 0.0, %v4798
        %v4800 = vpop.f32.mrf.mxu0
        %v4801 = vadd.f32 0.0, %v4800
        %4802 = vmatmul.bf16.gmra.mxu0 %v4734
        %v4803 = vpop.f32.mrf.mxu0
        %v4804 = vadd.f32 0.0, %v4803
        %v4805 = vpop.f32.mrf.mxu0
        %v4806 = vadd.f32 0.0, %v4805
        %4807 = vmatmul.bf16.gmra.mxu0 %v4737
        %v4808 = vpop.f32.mrf.mxu0
        %v4809 = vadd.f32 0.0, %v4808
        %v4810 = vpop.f32.mrf.mxu0
        %v4811 = vadd.f32 0.0, %v4810
        %4812 = vmatmul.bf16.gmra.mxu0 %v4740
        %v4813 = vpop.f32.mrf.mxu0
        %v4814 = vadd.f32 0.0, %v4813
        %v4815 = vpop.f32.mrf.mxu0
        %v4816 = vadd.f32 0.0, %v4815
        %4817 = vmatmul.bf16.gmra.mxu0 %v4743
        %v4818 = vpop.f32.mrf.mxu0
        %v4819 = vadd.f32 0.0, %v4818
        %v4820 = vpop.f32.mrf.mxu0
        %v4821 = vadd.f32 0.0, %v4820
        %4822 = vmatmul.bf16.gmra.mxu0 %v4746
        %v4823 = vpop.f32.mrf.mxu0
        %v4824 = vadd.f32 0.0, %v4823
        %v4825 = vpop.f32.mrf.mxu0
        %v4826 = vadd.f32 0.0, %v4825
        %4827 = vmatmul.bf16.gmra.mxu0 %v4749
        %v4828 = vpop.f32.mrf.mxu0
        %v4829 = vadd.f32 0.0, %v4828
        %v4830 = vpop.f32.mrf.mxu0
        %v4831 = vadd.f32 0.0, %v4830
        %4832 = vmatmul.bf16.gmra.mxu0 %v4752
        %v4833 = vpop.f32.mrf.mxu0
        %v4834 = vadd.f32 0.0, %v4833
        %v4835 = vpop.f32.mrf.mxu0
        %v4836 = vadd.f32 0.0, %v4835
        %4837 = vmatmul.bf16.gmra.mxu0 %v4755
        %v4838 = vpop.f32.mrf.mxu0
        %v4839 = vadd.f32 0.0, %v4838
        %v4840 = vpop.f32.mrf.mxu0
        %v4841 = vadd.f32 0.0, %v4840
        %4842 = vmatmul.bf16.gmra.mxu0 %v4758
        %v4843 = vpop.f32.mrf.mxu0
        %v4844 = vadd.f32 0.0, %v4843
        %v4845 = vpop.f32.mrf.mxu0
        %v4846 = vadd.f32 0.0, %v4845
        %4847 = vmatmul.bf16.gmra.mxu0 %v4761
        %v4848 = vpop.f32.mrf.mxu0
        %v4849 = vadd.f32 0.0, %v4848
        %v4850 = vpop.f32.mrf.mxu0
        %v4851 = vadd.f32 0.0, %v4850
        %4852 = vmatmul.bf16.gmra.mxu0 %v4764
        %v4853 = vpop.f32.mrf.mxu0
        %v4854 = vadd.f32 0.0, %v4853
        %v4855 = vpop.f32.mrf.mxu0
        %v4856 = vadd.f32 0.0, %v4855
        %4857 = vdwg.mxu0
        %v4858 = vadd.f32 %v4476, %v4779
        %v4859 = vadd.f32 %v4477, %v4781
        %v4860 = vadd.f32 %v4478, %v4784
        %v4861 = vadd.f32 %v4479, %v4786
        %v4862 = vadd.f32 %v4480, %v4789
        %v4863 = vadd.f32 %v4481, %v4791
        %v4864 = vadd.f32 %v4482, %v4794
        %v4865 = vadd.f32 %v4483, %v4796
        %v4866 = vadd.f32 %v4484, %v4799
        %v4867 = vadd.f32 %v4485, %v4801
        %v4868 = vadd.f32 %v4486, %v4804
        %v4869 = vadd.f32 %v4487, %v4806
        %v4870 = vadd.f32 %v4488, %v4809
        %v4871 = vadd.f32 %v4489, %v4811
        %v4872 = vadd.f32 %v4490, %v4814
        %v4873 = vadd.f32 %v4491, %v4816
        %v4874 = vadd.f32 %v4492, %v4819
        %v4875 = vadd.f32 %v4493, %v4821
        %v4876 = vadd.f32 %v4494, %v4824
        %v4877 = vadd.f32 %v4495, %v4826
        %v4878 = vadd.f32 %v4496, %v4829
        %v4879 = vadd.f32 %v4497, %v4831
        %v4880 = vadd.f32 %v4498, %v4834
        %v4881 = vadd.f32 %v4499, %v4836
        %v4882 = vadd.f32 %v4500, %v4839
        %v4883 = vadd.f32 %v4501, %v4841
        %v4884 = vadd.f32 %v4502, %v4844
        %v4885 = vadd.f32 %v4503, %v4846
        %v4886 = vadd.f32 %v4504, %v4849
        %v4887 = vadd.f32 %v4505, %v4851
        %v4888 = vadd.f32 %v4506, %v4854
        %v4889 = vadd.f32 %v4507, %v4856
        %4890 = vst [vmem:[#allocation2] sm:$0xff] %v4858
        %4891 = vst [vmem:[#allocation2 + $0x8] sm:$0xff] %v4859
        %4892 = vst [vmem:[#allocation2 + $0x10] sm:$0xff] %v4860
        %4893 = vst [vmem:[#allocation2 + $0x18] sm:$0xff] %v4861
        %4894 = vst [vmem:[#allocation2 + $0x20] sm:$0xff] %v4862
        %4895 = vst [vmem:[#allocation2 + $0x28] sm:$0xff] %v4863
        %4896 = vst [vmem:[#allocation2 + $0x30] sm:$0xff] %v4864
        %4897 = vst [vmem:[#allocation2 + $0x38] sm:$0xff] %v4865
        %4898 = vst [vmem:[#allocation2 + $0x40] sm:$0xff] %v4866
        %4899 = vst [vmem:[#allocation2 + $0x48] sm:$0xff] %v4867
        %4900 = vst [vmem:[#allocation2 + $0x50] sm:$0xff] %v4868
        %4901 = vst [vmem:[#allocation2 + $0x58] sm:$0xff] %v4869
        %4902 = vst [vmem:[#allocation2 + $0x60] sm:$0xff] %v4870
        %4903 = vst [vmem:[#allocation2 + $0x68] sm:$0xff] %v4871
        %4904 = vst [vmem:[#allocation2 + $0x70] sm:$0xff] %v4872
        %4905 = vst [vmem:[#allocation2 + $0x78] sm:$0xff] %v4873
        %4906 = vst [vmem:[#allocation2 + $0x80] sm:$0xff] %v4874
        %4907 = vst [vmem:[#allocation2 + $0x88] sm:$0xff] %v4875
        %4908 = vst [vmem:[#allocation2 + $0x90] sm:$0xff] %v4876
        %4909 = vst [vmem:[#allocation2 + $0x98] sm:$0xff] %v4877
        %4910 = vst [vmem:[#allocation2 + $0xa0] sm:$0xff] %v4878
        %4911 = vst [vmem:[#allocation2 + $0xa8] sm:$0xff] %v4879
        %4912 = vst [vmem:[#allocation2 + $0xb0] sm:$0xff] %v4880
        %4913 = vst [vmem:[#allocation2 + $0xb8] sm:$0xff] %v4881
        %4914 = vst [vmem:[#allocation2 + $0xc0] sm:$0xff] %v4882
        %4915 = vst [vmem:[#allocation2 + $0xc8] sm:$0xff] %v4883
        %4916 = vst [vmem:[#allocation2 + $0xd0] sm:$0xff] %v4884
        %4917 = vst [vmem:[#allocation2 + $0xd8] sm:$0xff] %v4885
        %4918 = vst [vmem:[#allocation2 + $0xe0] sm:$0xff] %v4886
        %4919 = vst [vmem:[#allocation2 + $0xe8] sm:$0xff] %v4887
        %4920 = vst [vmem:[#allocation2 + $0xf0] sm:$0xff] %v4888
        %4921 = vst [vmem:[#allocation2 + $0xf8] sm:$0xff] %v4889
        %v4922 = vld [vmem:[#allocation2] sm:$0xff]
        %v4923 = vld [vmem:[#allocation2 + $0x8] sm:$0xff]
        %v4924 = vld [vmem:[#allocation2 + $0x10] sm:$0xff]
        %v4925 = vld [vmem:[#allocation2 + $0x18] sm:$0xff]
        %v4926 = vld [vmem:[#allocation2 + $0x20] sm:$0xff]
        %v4927 = vld [vmem:[#allocation2 + $0x28] sm:$0xff]
        %v4928 = vld [vmem:[#allocation2 + $0x30] sm:$0xff]
        %v4929 = vld [vmem:[#allocation2 + $0x38] sm:$0xff]
        %v4930 = vld [vmem:[#allocation2 + $0x40] sm:$0xff]
        %v4931 = vld [vmem:[#allocation2 + $0x48] sm:$0xff]
        %v4932 = vld [vmem:[#allocation2 + $0x50] sm:$0xff]
        %v4933 = vld [vmem:[#allocation2 + $0x58] sm:$0xff]
        %v4934 = vld [vmem:[#allocation2 + $0x60] sm:$0xff]
        %v4935 = vld [vmem:[#allocation2 + $0x68] sm:$0xff]
        %v4936 = vld [vmem:[#allocation2 + $0x70] sm:$0xff]
        %v4937 = vld [vmem:[#allocation2 + $0x78] sm:$0xff]
        %v4938 = vld [vmem:[#allocation2 + $0x80] sm:$0xff]
        %v4939 = vld [vmem:[#allocation2 + $0x88] sm:$0xff]
        %v4940 = vld [vmem:[#allocation2 + $0x90] sm:$0xff]
        %v4941 = vld [vmem:[#allocation2 + $0x98] sm:$0xff]
        %v4942 = vld [vmem:[#allocation2 + $0xa0] sm:$0xff]
        %v4943 = vld [vmem:[#allocation2 + $0xa8] sm:$0xff]
        %v4944 = vld [vmem:[#allocation2 + $0xb0] sm:$0xff]
        %v4945 = vld [vmem:[#allocation2 + $0xb8] sm:$0xff]
        %v4946 = vld [vmem:[#allocation2 + $0xc0] sm:$0xff]
        %v4947 = vld [vmem:[#allocation2 + $0xc8] sm:$0xff]
        %v4948 = vld [vmem:[#allocation2 + $0xd0] sm:$0xff]
        %v4949 = vld [vmem:[#allocation2 + $0xd8] sm:$0xff]
        %v4950 = vld [vmem:[#allocation2 + $0xe0] sm:$0xff]
        %v4951 = vld [vmem:[#allocation2 + $0xe8] sm:$0xff]
        %v4952 = vld [vmem:[#allocation2 + $0xf0] sm:$0xff]
        %v4953 = vld [vmem:[#allocation2 + $0xf8] sm:$0xff]
        %v4954 = vld [vmem:[%s2] sm:$0x1]
        %v4955 = vperm.slane %v4954, 0
        %v4956 = vmul.f32 %v4922, %v4955
        %v4957 = vmul.f32 %v4923, %v4955
        %v4958 = vmul.f32 %v4924, %v4955
        %v4959 = vmul.f32 %v4925, %v4955
        %v4960 = vmul.f32 %v4926, %v4955
        %v4961 = vmul.f32 %v4927, %v4955
        %v4962 = vmul.f32 %v4928, %v4955
        %v4963 = vmul.f32 %v4929, %v4955
        %v4964 = vmul.f32 %v4930, %v4955
        %v4965 = vmul.f32 %v4931, %v4955
        %v4966 = vmul.f32 %v4932, %v4955
        %v4967 = vmul.f32 %v4933, %v4955
        %v4968 = vmul.f32 %v4934, %v4955
        %v4969 = vmul.f32 %v4935, %v4955
        %v4970 = vmul.f32 %v4936, %v4955
        %v4971 = vmul.f32 %v4937, %v4955
        %v4972 = vmul.f32 %v4938, %v4955
        %v4973 = vmul.f32 %v4939, %v4955
        %v4974 = vmul.f32 %v4940, %v4955
        %v4975 = vmul.f32 %v4941, %v4955
        %v4976 = vmul.f32 %v4942, %v4955
        %v4977 = vmul.f32 %v4943, %v4955
        %v4978 = vmul.f32 %v4944, %v4955
        %v4979 = vmul.f32 %v4945, %v4955
        %v4980 = vmul.f32 %v4946, %v4955
        %v4981 = vmul.f32 %v4947, %v4955
        %v4982 = vmul.f32 %v4948, %v4955
        %v4983 = vmul.f32 %v4949, %v4955
        %v4984 = vmul.f32 %v4950, %v4955
        %v4985 = vmul.f32 %v4951, %v4955
        %v4986 = vmul.f32 %v4952, %v4955
        %v4987 = vmul.f32 %v4953, %v4955
        %v4988 = vld [vmem:[%s2 + $0x1] sm:$0x1]
        %v4989 = vperm.slane %v4988, 0
        %v4990 = vadd.f32 %v4956, %v4989
        %v4991 = vadd.f32 %v4957, %v4989
        %v4992 = vadd.f32 %v4958, %v4989
        %v4993 = vadd.f32 %v4959, %v4989
        %v4994 = vadd.f32 %v4960, %v4989
        %v4995 = vadd.f32 %v4961, %v4989
        %v4996 = vadd.f32 %v4962, %v4989
        %v4997 = vadd.f32 %v4963, %v4989
        %v4998 = vadd.f32 %v4964, %v4989
        %v4999 = vadd.f32 %v4965, %v4989
        %v5000 = vadd.f32 %v4966, %v4989
        %v5001 = vadd.f32 %v4967, %v4989
        %v5002 = vadd.f32 %v4968, %v4989
        %v5003 = vadd.f32 %v4969, %v4989
        %v5004 = vadd.f32 %v4970, %v4989
        %v5005 = vadd.f32 %v4971, %v4989
        %v5006 = vadd.f32 %v4972, %v4989
        %v5007 = vadd.f32 %v4973, %v4989
        %v5008 = vadd.f32 %v4974, %v4989
        %v5009 = vadd.f32 %v4975, %v4989
        %v5010 = vadd.f32 %v4976, %v4989
        %v5011 = vadd.f32 %v4977, %v4989
        %v5012 = vadd.f32 %v4978, %v4989
        %v5013 = vadd.f32 %v4979, %v4989
        %v5014 = vadd.f32 %v4980, %v4989
        %v5015 = vadd.f32 %v4981, %v4989
        %v5016 = vadd.f32 %v4982, %v4989
        %v5017 = vadd.f32 %v4983, %v4989
        %v5018 = vadd.f32 %v4984, %v4989
        %v5019 = vadd.f32 %v4985, %v4989
        %v5020 = vadd.f32 %v4986, %v4989
        %v5021 = vadd.f32 %v4987, %v4989
        %v5022 = vmax.f32 %v4990, 0.0
        %v5023 = vmax.f32 %v4991, 0.0
        %v5024 = vmax.f32 %v4992, 0.0
        %v5025 = vmax.f32 %v4993, 0.0
        %v5026 = vmax.f32 %v4994, 0.0
        %v5027 = vmax.f32 %v4995, 0.0
        %v5028 = vmax.f32 %v4996, 0.0
        %v5029 = vmax.f32 %v4997, 0.0
        %v5030 = vmax.f32 %v4998, 0.0
        %v5031 = vmax.f32 %v4999, 0.0
        %v5032 = vmax.f32 %v5000, 0.0
        %v5033 = vmax.f32 %v5001, 0.0
        %v5034 = vmax.f32 %v5002, 0.0
        %v5035 = vmax.f32 %v5003, 0.0
        %v5036 = vmax.f32 %v5004, 0.0
        %v5037 = vmax.f32 %v5005, 0.0
        %v5038 = vmax.f32 %v5006, 0.0
        %v5039 = vmax.f32 %v5007, 0.0
        %v5040 = vmax.f32 %v5008, 0.0
        %v5041 = vmax.f32 %v5009, 0.0
        %v5042 = vmax.f32 %v5010, 0.0
        %v5043 = vmax.f32 %v5011, 0.0
        %v5044 = vmax.f32 %v5012, 0.0
        %v5045 = vmax.f32 %v5013, 0.0
        %v5046 = vmax.f32 %v5014, 0.0
        %v5047 = vmax.f32 %v5015, 0.0
        %v5048 = vmax.f32 %v5016, 0.0
        %v5049 = vmax.f32 %v5017, 0.0
        %v5050 = vmax.f32 %v5018, 0.0
        %v5051 = vmax.f32 %v5019, 0.0
        %v5052 = vmax.f32 %v5020, 0.0
        %v5053 = vmax.f32 %v5021, 0.0
        %v5054 = vpack.c.bf16 %v5022, %v5022
        %v5055 = vpack.c.bf16 %v5023, %v5023
        %v5056 = vpack.c.bf16 %v5024, %v5024
        %v5057 = vpack.c.bf16 %v5025, %v5025
        %v5058 = vpack.c.bf16 %v5026, %v5026
        %v5059 = vpack.c.bf16 %v5027, %v5027
        %v5060 = vpack.c.bf16 %v5028, %v5028
        %v5061 = vpack.c.bf16 %v5029, %v5029
        %v5062 = vpack.c.bf16 %v5030, %v5030
        %v5063 = vpack.c.bf16 %v5031, %v5031
        %v5064 = vpack.c.bf16 %v5032, %v5032
        %v5065 = vpack.c.bf16 %v5033, %v5033
        %v5066 = vpack.c.bf16 %v5034, %v5034
        %v5067 = vpack.c.bf16 %v5035, %v5035
        %v5068 = vpack.c.bf16 %v5036, %v5036
        %v5069 = vpack.c.bf16 %v5037, %v5037
        %v5070 = vpack.c.bf16 %v5038, %v5038
        %v5071 = vpack.c.bf16 %v5039, %v5039
        %v5072 = vpack.c.bf16 %v5040, %v5040
        %v5073 = vpack.c.bf16 %v5041, %v5041
        %v5074 = vpack.c.bf16 %v5042, %v5042
        %v5075 = vpack.c.bf16 %v5043, %v5043
        %v5076 = vpack.c.bf16 %v5044, %v5044
        %v5077 = vpack.c.bf16 %v5045, %v5045
        %v5078 = vpack.c.bf16 %v5046, %v5046
        %v5079 = vpack.c.bf16 %v5047, %v5047
        %v5080 = vpack.c.bf16 %v5048, %v5048
        %v5081 = vpack.c.bf16 %v5049, %v5049
        %v5082 = vpack.c.bf16 %v5050, %v5050
        %v5083 = vpack.c.bf16 %v5051, %v5051
        %v5084 = vpack.c.bf16 %v5052, %v5052
        %v5085 = vpack.c.bf16 %v5053, %v5053
        %5086 = vst [vmem:[%s177] sm:$0xf] %v5054
        %5087 = vst [vmem:[%s177 + $0x4] sm:$0xf] %v5055
        %5088 = vst [vmem:[%s177 + $0x8] sm:$0xf] %v5056
        %5089 = vst [vmem:[%s177 + $0xc] sm:$0xf] %v5057
        %5090 = vst [vmem:[%s177 + $0x10] sm:$0xf] %v5058
        %5091 = vst [vmem:[%s177 + $0x14] sm:$0xf] %v5059
        %5092 = vst [vmem:[%s177 + $0x18] sm:$0xf] %v5060
        %5093 = vst [vmem:[%s177 + $0x1c] sm:$0xf] %v5061
        %5094 = vst [vmem:[%s177 + $0x20] sm:$0xf] %v5062
        %5095 = vst [vmem:[%s177 + $0x24] sm:$0xf] %v5063
        %5096 = vst [vmem:[%s177 + $0x28] sm:$0xf] %v5064
        %5097 = vst [vmem:[%s177 + $0x2c] sm:$0xf] %v5065
        %5098 = vst [vmem:[%s177 + $0x30] sm:$0xf] %v5066
        %5099 = vst [vmem:[%s177 + $0x34] sm:$0xf] %v5067
        %5100 = vst [vmem:[%s177 + $0x38] sm:$0xf] %v5068
        %5101 = vst [vmem:[%s177 + $0x3c] sm:$0xf] %v5069
        %5102 = vst [vmem:[%s177 + $0x40] sm:$0xf] %v5070
        %5103 = vst [vmem:[%s177 + $0x44] sm:$0xf] %v5071
        %5104 = vst [vmem:[%s177 + $0x48] sm:$0xf] %v5072
        %5105 = vst [vmem:[%s177 + $0x4c] sm:$0xf] %v5073
        %5106 = vst [vmem:[%s177 + $0x50] sm:$0xf] %v5074
        %5107 = vst [vmem:[%s177 + $0x54] sm:$0xf] %v5075
        %5108 = vst [vmem:[%s177 + $0x58] sm:$0xf] %v5076
        %5109 = vst [vmem:[%s177 + $0x5c] sm:$0xf] %v5077
        %5110 = vst [vmem:[%s177 + $0x60] sm:$0xf] %v5078
        %5111 = vst [vmem:[%s177 + $0x64] sm:$0xf] %v5079
        %5112 = vst [vmem:[%s177 + $0x68] sm:$0xf] %v5080
        %5113 = vst [vmem:[%s177 + $0x6c] sm:$0xf] %v5081
        %5114 = vst [vmem:[%s177 + $0x70] sm:$0xf] %v5082
        %5115 = vst [vmem:[%s177 + $0x74] sm:$0xf] %v5083
        %5116 = vst [vmem:[%s177 + $0x78] sm:$0xf] %v5084
        %5117 = vst [vmem:[%s177 + $0x7c] sm:$0xf] %v5085
        %s5118 = sand.u32 %s107, 1
        %s5119 = scalar_lea.sflag [#allocation4], %s5118
        %s5120 = sand.u32 %s107, 1
        %s5121 = smul.addr %s5120, 128
        %s5122 = scalar_lea.vmem [#allocation3], %s5121
        // Predicated region
        $region33: #{tpu_custom_call.1} parent=31 // pred_check
          %p5123 = pneg %p117
        $region34: #{tpu_custom_call.1} parent=31 // pred_check_branch
          %5125 = sbr.rel (%p5123) target = $region36
        $region35: #{tpu_custom_call.1} parent=31 // pred_region
          %s5126 = smul.u32 16, %s22
          %5128 = vsyncadd %s5119, 0
          %s5129 = smul.addr %s5126, 2
          %s5130 = smul.addr %s21, 32
          %s5131 = sadd.s32 %s5129, %s5130
          %s5132 = smul.addr %s5131, 4
          %s5133 = scalar_lea.hbm %s3, %s5132
          %s5134 = sshll.u32 %s5122, 4
          %s5135 = int_to_ptr.vmem [resolvable:$true] %s5134
          %s5136 = sshll.u32 %s5133, 4
          %s5137 = int_to_ptr.hbm [resolvable:$true] %s5136
          %5142 = dma.vmem_to_hbm [thread:$0]  %s5135, 2048, %s5137, %s5119, 64, 64, 4
        $region36: #{tpu_custom_call.1} parent=31 // pred_fallthru
          _
      $region32: #{tpu_custom_call.1} parent=5 // pred_fallthru
        _
      %p5143 = scmp.le.s32.totalorder 2, %s12
      // Predicated region
      $region37: #{tpu_custom_call.1} parent=5 // pred_check
        %p5144 = pneg %p5143
      $region38: #{tpu_custom_call.1} parent=5 // pred_check_branch
        %5146 = sbr.rel (%p5144) target = $region40
      $region39: #{tpu_custom_call.1} parent=5 // pred_region
        %s5147 = ssub.s32 %s12, 2
        // Predicated region
        $region41: #{tpu_custom_call.1} parent=39 // pred_check
          %p5148 = pneg %p123
        $region42: #{tpu_custom_call.1} parent=39 // pred_check_branch
          %5150 = sbr.rel (%p5148) target = $region44
        $region43: #{tpu_custom_call.1} parent=39 // pred_region
          %s5151 = sand.u32 %s108, 1
          %s5152 = scalar_lea.sflag [#allocation4], %s5151
          %s5153 = sand.u32 %s108, 1
          %s5154 = smul.addr %s5153, 128
          %s5155 = scalar_lea.vmem [#allocation3], %s5154
          %5157 = dma.done %s5152, 2048
        $region44: #{tpu_custom_call.1} parent=39 // pred_fallthru
          _
      $region40: #{tpu_custom_call.1} parent=5 // pred_fallthru
        _
    $region6: #{tpu_custom_call.1} parent=1 // loop_footer
      %s16 = sadd.s32 1, %s12
    $region7: #{tpu_custom_call.1} parent=1 // loop_footer_branch
      %11 = sbr.rel target = $region3
    $region8: #{tpu_custom_call.1} parent=1 // loop_exit
      _
    %5158 = vsyncpa [#allocation4], 1
    %s5159 = scalar_lea.sflag [#allocation4], 1
    %5160 = vsyncpa %s5159, 1

</llo_original>
